<compile_context>
chip_gen: v7x
topology: tpu7x:2x2x1
jax: 0.10.0
libtpu: 0.0.40
codegen_flags: <defaults>
</compile_context>

<pallas_src>
import math

import jax
import jax.numpy as jnp
from jax.experimental import pallas as pl
from jax.experimental.pallas import tpu as pltpu


def _head_kernel(x_ref, w1_ref, b1_ref, w2_ref, b2_ref, o_ref):
    """Fused classifier head; every operand is fully resident in VMEM."""
    # activation1: LeakyReLU(0.01) as a single max (0.01*x <= x iff x >= 0).
    x = x_ref[...]
    x = jnp.maximum(x, jnp.float32(0.01) * x)

    # fc1 on the MXU: bf16 x bf16 -> f32 accumulation.
    h = jnp.dot(x.astype(jnp.bfloat16), w1_ref[...],
                preferred_element_type=jnp.float32)
    h = h + b1_ref[...]

    # activation2: LeakyReLU.
    h = jnp.maximum(h, jnp.float32(0.01) * h)

    # fc2 (tiny) in bf16 on the MXU + f32 bias.
    logits = jnp.dot(h.astype(jnp.bfloat16), w2_ref[...],
                     preferred_element_type=jnp.float32)
    logits = logits + b2_ref[...]

    # activation3: Sigmoid (EUP path).
    o_ref[...] = jax.nn.sigmoid(logits)


def music_net_head(features, w1_bf16, b1, w2_bf16, b2):
    """features: (B, 1280, Hf, Wf) NCHW float32 feature map.

    w1_bf16: (D, HID_PAD) bfloat16 fc1 weight (padded hidden dim).
    b1:      (1, HID_PAD) float32 (zero-padded).
    w2_bf16: (HID_PAD, C) bfloat16 (padded rows are zero).
    b2:      (1, C) float32.
    """
    B = features.shape[0]
    x_flat = features.reshape(B, -1)          # matches torch x.reshape((B, -1))
    D = x_flat.shape[1]
    HID = w1_bf16.shape[1]
    C = w2_bf16.shape[1]
    assert w1_bf16.shape == (D, HID)
    assert w2_bf16.shape[0] == HID

    # Gridless: everything (w1 bf16 ~2.6 MB + ~50 KB of the rest) is far under
    # the scoped VMEM default on v5e/v6e/v7x, and there is no revolving buffer
    # to pay for since there is nothing to pipeline.
    vmem_specs = [
        pl.BlockSpec(memory_space=pltpu.MemorySpace.VMEM),  # flattened x (f32)
        pl.BlockSpec(memory_space=pltpu.MemorySpace.VMEM),  # fc1 weight (bf16)
        pl.BlockSpec(memory_space=pltpu.MemorySpace.VMEM),  # fc1 bias (f32)
        pl.BlockSpec(memory_space=pltpu.MemorySpace.VMEM),  # fc2 weight (bf16)
        pl.BlockSpec(memory_space=pltpu.MemorySpace.VMEM),  # fc2 bias (f32)
    ]

    bytes_accessed = (x_flat.size * 4 + w1_bf16.size * 2 + b1.size * 4
                      + w2_bf16.size * 2 + b2.size * 4 + B * C * 4)
    cost = pl.CostEstimate(
        flops=2 * B * D * HID + 2 * B * HID * C,
        transcendentals=B * C,                 # sigmoid
        bytes_accessed=bytes_accessed,         # ~2.7 MB, dominated by w1
    )

    return pl.pallas_call(
        _head_kernel,
        out_shape=jax.ShapeDtypeStruct((B, C), jnp.float32),
        in_specs=vmem_specs,
        out_specs=pl.BlockSpec(memory_space=pltpu.MemorySpace.VMEM),
        cost_estimate=cost,
    )(x_flat, w1_bf16, b1, w2_bf16, b2)


def init_params(key, in_features, hidden, n_classes):
    """Deterministic nn.Linear-style init: U(-1/sqrt(fan_in), 1/sqrt(fan_in))."""
    k1, k2, k3, k4 = jax.random.split(key, 4)
    b1_bound = 1.0 / math.sqrt(in_features)
    b2_bound = 1.0 / math.sqrt(hidden)
    w1 = jax.random.uniform(k1, (in_features, hidden), jnp.float32,
                            -b1_bound, b1_bound)
    b1 = jax.random.uniform(k2, (1, hidden), jnp.float32, -b1_bound, b1_bound)
    w2 = jax.random.uniform(k3, (hidden, n_classes), jnp.float32,
                            -b2_bound, b2_bound)
    b2 = jax.random.uniform(k4, (1, n_classes), jnp.float32, -b2_bound, b2_bound)
    return w1, b1, w2, b2


def prepare_params(w1, b1, w2, b2, hid_pad=256):
    """Pad hidden dim to `hid_pad` (zero pad => mathematical no-op) and cast
    both weights to bf16 (halves the dominant w1 HBM read; MXU-native)."""
    hid = w1.shape[1]
    pad = hid_pad - hid
    assert pad >= 0
    w1p = jnp.pad(w1, ((0, 0), (0, pad))).astype(jnp.bfloat16)
    b1p = jnp.pad(b1, ((0, 0), (0, pad)))                      # zero pad, f32
    w2p = jnp.pad(w2, ((0, pad), (0, 0))).astype(jnp.bfloat16)  # zero rows
    return w1p, b1p, w2p, b2


def reference_head(features, w1, b1, w2, b2):
    """Pure-JAX float32 reference matching the torch module semantics."""
    x = features.reshape(features.shape[0], -1)
    x = jnp.where(x >= 0, x, 0.01 * x)
    h = x @ w1 + b1
    h = jnp.where(h >= 0, h, 0.01 * h)
    logits = h @ w2 + b2
    return jax.nn.sigmoid(logits)


if __name__ == "__main__":
    # MusicNet(input_shape=(1, 3, 64, 64), n_classes=10):
    #   EfficientNet-b0 extract_features on a 64x64 input -> (B, 1280, 2, 2)
    #   flatten -> 1280 * 2 * 2 = 5120 = 1280 * input_shape[2] / 16
    B = 2
    FEAT_C, FEAT_H, FEAT_W = 1280, 2, 2
    HIDDEN = 180
    HIDDEN_PAD = 256          # MXU / lane aligned
    N_CLASSES = 10
    IN_FEATURES = FEAT_C * FEAT_H * FEAT_W  # 5120

    key = jax.random.PRNGKey(0)
    k_feat, k_params = jax.random.split(key)

    # Stand-in for the EfficientNet-b0 feature map (NCHW), see TODO(synk).
    features = jax.random.normal(k_feat, (B, FEAT_C, FEAT_H, FEAT_W),
                                 dtype=jnp.float32)
    w1, b1, w2, b2 = init_params(k_params, IN_FEATURES, HIDDEN, N_CLASSES)
    w1p, b1p, w2p, b2p = prepare_params(w1, b1, w2, b2, HIDDEN_PAD)

    out = music_net_head(features, w1p, b1p, w2p, b2p)
    out = jax.block_until_ready(out)

    ref = reference_head(features, w1, b1, w2, b2)
    assert out.shape == (B, N_CLASSES)
    # Both matmuls run in bf16 on the MXU (f32 accumulation) -> tolerance
    # loosened vs the pure f32 reference (outputs are post-sigmoid, in [0, 1]).
    assert jnp.allclose(out, ref, atol=2e-2, rtol=0.0), "mismatch vs JAX reference"

    print("KERNEL_OK")
</pallas_src>

<mosaic_0001>
module attributes {stable_mosaic.version = 11 : i64} {
  func.func @_head_kernel(%arg0: memref<2x5120xf32, #tpu.memory_space<vmem>>, %arg1: memref<5120x256xbf16, #tpu.memory_space<vmem>>, %arg2: memref<1x256xf32, #tpu.memory_space<vmem>>, %arg3: memref<256x10xbf16, #tpu.memory_space<vmem>>, %arg4: memref<1x10xf32, #tpu.memory_space<vmem>>, %arg5: memref<2x10xf32, #tpu.memory_space<vmem>>) attributes {dimension_semantics = [], scalar_prefetch = 0 : i64, scratch_operands = 0 : i64, tpu.core_type = #tpu.core_type<tc>} {
    %c0 = arith.constant 0 : index
    %c0_0 = arith.constant 0 : index
    %0 = vector.load %arg0[%c0, %c0_0] : memref<2x5120xf32, #tpu.memory_space<vmem>>, vector<2x5120xf32>
    %cst = arith.constant 0.00999999977 : f32
    %1 = vector.broadcast %cst : f32 to vector<2x5120xf32>
    %2 = arith.mulf %1, %0 : vector<2x5120xf32>
    %3 = arith.maximumf %0, %2 : vector<2x5120xf32>
    %4 = arith.truncf %3 : vector<2x5120xf32> to vector<2x5120xbf16>
    %c0_1 = arith.constant 0 : index
    %c0_2 = arith.constant 0 : index
    %5 = vector.load %arg1[%c0_1, %c0_2] : memref<5120x256xbf16, #tpu.memory_space<vmem>>, vector<5120x256xbf16>
    %cst_3 = arith.constant dense<0.000000e+00> : vector<2x256xf32>
    %6 = tpu.matmul %4, %5, %cst_3 {dimension_numbers = #tpu.dot_dimension_numbers<[1], [0], [0], [1], [0, 0, 1, 1], [], []>} : vector<2x5120xbf16>, vector<5120x256xbf16>, vector<2x256xf32> -> vector<2x256xf32>
    %c0_4 = arith.constant 0 : index
    %c0_5 = arith.constant 0 : index
    %7 = vector.load %arg2[%c0_4, %c0_5] : memref<1x256xf32, #tpu.memory_space<vmem>>, vector<1x256xf32>
    %8 = vector.broadcast %7 : vector<1x256xf32> to vector<2x256xf32>
    %9 = arith.addf %6, %8 : vector<2x256xf32>
    %cst_6 = arith.constant 0.00999999977 : f32
    %10 = vector.broadcast %cst_6 : f32 to vector<2x256xf32>
    %11 = arith.mulf %10, %9 : vector<2x256xf32>
    %12 = arith.maximumf %9, %11 : vector<2x256xf32>
    %13 = arith.truncf %12 : vector<2x256xf32> to vector<2x256xbf16>
    %c0_7 = arith.constant 0 : index
    %c0_8 = arith.constant 0 : index
    %14 = vector.load %arg3[%c0_7, %c0_8] : memref<256x10xbf16, #tpu.memory_space<vmem>>, vector<256x10xbf16>
    %cst_9 = arith.constant dense<0.000000e+00> : vector<2x10xf32>
    %15 = tpu.matmul %13, %14, %cst_9 {dimension_numbers = #tpu.dot_dimension_numbers<[1], [0], [0], [1], [0, 0, 1, 1], [], []>} : vector<2x256xbf16>, vector<256x10xbf16>, vector<2x10xf32> -> vector<2x10xf32>
    %c0_10 = arith.constant 0 : index
    %c0_11 = arith.constant 0 : index
    %16 = vector.load %arg4[%c0_10, %c0_11] : memref<1x10xf32, #tpu.memory_space<vmem>>, vector<1x10xf32>
    %17 = vector.broadcast %16 : vector<1x10xf32> to vector<2x10xf32>
    %18 = arith.addf %15, %17 : vector<2x10xf32>
    %19 = arith.negf %18 : vector<2x10xf32>
    %20 = math.exp %19 : vector<2x10xf32>
    %cst_12 = arith.constant 1.000000e+00 : f32
    %21 = vector.broadcast %cst_12 : f32 to vector<2x10xf32>
    %22 = arith.addf %21, %20 : vector<2x10xf32>
    %23 = arith.divf %21, %22 : vector<2x10xf32>
    %c0_13 = arith.constant 0 : index
    %c0_14 = arith.constant 0 : index
    %24 = vector.load %arg5[%c0_13, %c0_14] : memref<2x10xf32, #tpu.memory_space<vmem>>, vector<2x10xf32>
    tpu.vector_store %arg5[%c0_13, %c0_14], %23 {strides = array<i32>} : memref<2x10xf32, #tpu.memory_space<vmem>>, vector<2x10xf32>,
    return
  }
}

</mosaic_0001>

<llo_original>
// kernel: tpu_custom_call.1
$region0: #{tpu_custom_call.1}
  #allocation0 [shape = 'u32[]', space=smem, size = 0x4, offset = 0x4, fixed_abs, tag = 'smem constant byte address 0x4 - core index']
  #allocation1 [shape = 'u32[144,128]{1,0:T(1,128)}', space=vmem, size = 0x12000, scoped, tag = 'internal scratch']
  %s0 = inlined_call_operand.hbm [shape: f32[2,5120], index: 0, kind: input, shape index: {}]
  %s1 = inlined_call_operand.hbm [shape: bf16[5120,256], index: 1, kind: input, shape index: {}]
  %s2 = inlined_call_operand.hbm [shape: f32[1,256], index: 2, kind: input, shape index: {}]
  %s3 = inlined_call_operand.vmem [shape: bf16[256,10], index: 3, kind: input, shape index: {}]
  %s4 = inlined_call_operand.hbm [shape: f32[1,10], index: 4, kind: input, shape index: {}]
  %s5 = inlined_call_operand.hbm [shape: f32[2,10], index: 5, kind: output, shape index: {}]
  %s6 = sld [smem:[#allocation0]]
  $region46: #{tpu_custom_call.1} parent=0
    _
  %s8 = ssub.s32 1, %s6
  %s9 = scalar_select 0, %s8, %s6
  $region1: #{tpu_custom_call.1} parent=0
    #allocation2 [shape = 'u8[40960]{0}', space=vmem, size = 0xa000, scoped, tag = 'input window, operand 0, single buffered']
    #allocation3 [shape = 's32[1]{0}', space=sflag, size = 0x4, scoped, tag = 'scoped memory for tpu_custom_call.1']
    #allocation4 [shape = 's32[1]{0}', space=sflag, size = 0x4, scoped, tag = 'scoped memory for tpu_custom_call.1']
    #allocation5 [shape = 'u8[2621440]{0}', space=vmem, size = 0x280000, scoped, tag = 'input window, operand 1, single buffered']
    #allocation6 [shape = 's32[1]{0}', space=sflag, size = 0x4, scoped, tag = 'scoped memory for tpu_custom_call.1']
    #allocation7 [shape = 'u8[1024]{0}', space=vmem, size = 0x400, scoped, tag = 'input window, operand 2, single buffered']
    #allocation8 [shape = 'u8[512]{0}', space=vmem, size = 0x400, scoped, tag = 'input window, operand 4, single buffered']
    #allocation9 [shape = 's32[1]{0}', space=sflag, size = 0x4, scoped, tag = 'scoped memory for tpu_custom_call.1']
    #allocation10 [shape = 'u8[1024]{0}', space=vmem, size = 0x400, scoped, tag = 'output window, operand 0, single buffered']
    %10 = vsyncpa [#allocation3], 0
    %11 = vsyncpa [#allocation6], 0
    %12 = vsyncpa [#allocation9], 0
    %13 = vsyncpa [#allocation4], 0
    // Predicated region
    $region2: #{tpu_custom_call.1} parent=1 // pred_check
      _
    $region3: #{tpu_custom_call.1} parent=1 // pred_check_branch
      %15 = sbr.rel (0) target = $region5
    $region4: #{tpu_custom_call.1} parent=1 // pred_region
      %s17 = ssub.s32 1280, 1280
      %18 = vsyncadd [#allocation3], %s17
      %s20 = sshll.u32 [#allocation2], 4
      %s21 = int_to_ptr.vmem [resolvable:$true] %s20
      %23 = dma.hbm_to_vmem [thread:$0]  %s0, 1280, %s21, [#allocation3]
    $region5: #{tpu_custom_call.1} parent=1 // pred_fallthru
      _
    // Predicated region
    $region6: #{tpu_custom_call.1} parent=1 // pred_check
      _
    $region7: #{tpu_custom_call.1} parent=1 // pred_check_branch
      %25 = sbr.rel (0) target = $region9
    $region8: #{tpu_custom_call.1} parent=1 // pred_region
      %s27 = ssub.s32 81920, 81920
      %28 = vsyncadd [#allocation6], %s27
      %s29 = sshll.u32 [#allocation5], 4
      %s30 = int_to_ptr.vmem [resolvable:$true] %s29
      %35 = dma.hbm_to_vmem [thread:$0]  %s1, 81920, %s30, [#allocation6], 128, 128, 8
    $region9: #{tpu_custom_call.1} parent=1 // pred_fallthru
      _
    // Predicated region
    $region10: #{tpu_custom_call.1} parent=1 // pred_check
      _
    $region11: #{tpu_custom_call.1} parent=1 // pred_check_branch
      %37 = sbr.rel (0) target = $region13
    $region12: #{tpu_custom_call.1} parent=1 // pred_region
      %s39 = ssub.s32 32, 32
      %40 = vsyncadd [#allocation6], %s39
      %s42 = sshll.u32 [#allocation7], 4
      %s43 = int_to_ptr.vmem [resolvable:$true] %s42
      %45 = dma.hbm_to_vmem [thread:$0]  %s2, 32, %s43, [#allocation6]
    $region13: #{tpu_custom_call.1} parent=1 // pred_fallthru
      _
    // Predicated region
    $region14: #{tpu_custom_call.1} parent=1 // pred_check
      _
    $region15: #{tpu_custom_call.1} parent=1 // pred_check_branch
      %47 = sbr.rel (0) target = $region17
    $region16: #{tpu_custom_call.1} parent=1 // pred_region
      _
    $region17: #{tpu_custom_call.1} parent=1 // pred_fallthru
      _
    // Predicated region
    $region18: #{tpu_custom_call.1} parent=1 // pred_check
      _
    $region19: #{tpu_custom_call.1} parent=1 // pred_check_branch
      %49 = sbr.rel (0) target = $region21
    $region20: #{tpu_custom_call.1} parent=1 // pred_region
      %s51 = ssub.s32 16, 16
      %52 = vsyncadd [#allocation9], %s51
      %s54 = sshll.u32 [#allocation8], 4
      %s55 = int_to_ptr.vmem [resolvable:$true] %s54
      %57 = dma.hbm_to_vmem [thread:$0]  %s4, 16, %s55, [#allocation9]
    $region21: #{tpu_custom_call.1} parent=1 // pred_fallthru
      _
    // Predicated region
    $region22: #{tpu_custom_call.1} parent=1 // pred_check
      _
    $region23: #{tpu_custom_call.1} parent=1 // pred_check_branch
      %59 = sbr.rel (0) target = $region25
    $region24: #{tpu_custom_call.1} parent=1 // pred_region
      %60 = dma.done [#allocation3], 1280
    $region25: #{tpu_custom_call.1} parent=1 // pred_fallthru
      _
    // Predicated region
    $region26: #{tpu_custom_call.1} parent=1 // pred_check
      _
    $region27: #{tpu_custom_call.1} parent=1 // pred_check_branch
      %62 = sbr.rel (0) target = $region29
    $region28: #{tpu_custom_call.1} parent=1 // pred_region
      %63 = dma.done [#allocation6], 81920
    $region29: #{tpu_custom_call.1} parent=1 // pred_fallthru
      _
    // Predicated region
    $region30: #{tpu_custom_call.1} parent=1 // pred_check
      _
    $region31: #{tpu_custom_call.1} parent=1 // pred_check_branch
      %65 = sbr.rel (0) target = $region33
    $region32: #{tpu_custom_call.1} parent=1 // pred_region
      %66 = dma.done [#allocation6], 32
    $region33: #{tpu_custom_call.1} parent=1 // pred_fallthru
      _
    // Predicated region
    $region34: #{tpu_custom_call.1} parent=1 // pred_check
      _
    $region35: #{tpu_custom_call.1} parent=1 // pred_check_branch
      %68 = sbr.rel (0) target = $region37
    $region36: #{tpu_custom_call.1} parent=1 // pred_region
      %69 = dma.done [#allocation9], 16
    $region37: #{tpu_custom_call.1} parent=1 // pred_fallthru
      _
    %v71 = vld [vmem:[#allocation2] sm:$0xff]
    %v72 = vld [vmem:[#allocation2 + $0x8] sm:$0xff]
    %v73 = vld [vmem:[#allocation2 + $0x10] sm:$0xff]
    %v74 = vld [vmem:[#allocation2 + $0x18] sm:$0xff]
    %v75 = vld [vmem:[#allocation2 + $0x20] sm:$0xff]
    %v76 = vld [vmem:[#allocation2 + $0x28] sm:$0xff]
    %v77 = vld [vmem:[#allocation2 + $0x30] sm:$0xff]
    %v78 = vld [vmem:[#allocation2 + $0x38] sm:$0xff]
    %v79 = vld [vmem:[#allocation2 + $0x40] sm:$0xff]
    %v80 = vld [vmem:[#allocation2 + $0x48] sm:$0xff]
    %v81 = vmul.f32 %v71, 0.01
    %v82 = vmul.f32 %v72, 0.01
    %v83 = vmul.f32 %v73, 0.01
    %v84 = vmul.f32 %v74, 0.01
    %v85 = vmul.f32 %v75, 0.01
    %v86 = vmul.f32 %v76, 0.01
    %v87 = vmul.f32 %v77, 0.01
    %v88 = vmul.f32 %v78, 0.01
    %v89 = vmul.f32 %v79, 0.01
    %v90 = vmul.f32 %v80, 0.01
    %v91 = vmax.f32 %v71, %v81
    %v92 = vmax.f32 %v72, %v82
    %v93 = vmax.f32 %v73, %v83
    %v94 = vmax.f32 %v74, %v84
    %v95 = vmax.f32 %v75, %v85
    %v96 = vmax.f32 %v76, %v86
    %v97 = vmax.f32 %v77, %v87
    %v98 = vmax.f32 %v78, %v88
    %v99 = vmax.f32 %v79, %v89
    %v100 = vmax.f32 %v80, %v90
    %v111 = vcombine.high %v91, %v91
    %v113 = vunpack.c.l.s4 1983009808
    %v114 = vunpack.c.0.s8 %v113
    %v115 = vlaneseq
    %v116 = vshrl.u32 %v115, 7
    %v117 = vsub.s32 %v114, %v116
    %v118 = vrot.slane %v91, %v117
    %v120 = vunpack.c.l.s4 1983009808
    %v121 = vunpack.c.0.s8 %v120
    %v122 = vlaneseq
    %v123 = vshrl.u32 %v122, 7
    %v124 = vsub.s32 %v121, %v123
    %v125 = vrot.slane %v111, %v124
    %v126 = vcombine.high %v118, %v118
    %v127 = vcombine.high %v125, %v125
    %v128 = vcombine.high %v92, %v92
    %v130 = vunpack.c.l.s4 1983009808
    %v131 = vunpack.c.0.s8 %v130
    %v132 = vlaneseq
    %v133 = vshrl.u32 %v132, 7
    %v134 = vsub.s32 %v131, %v133
    %v135 = vrot.slane %v92, %v134
    %v137 = vunpack.c.l.s4 1983009808
    %v138 = vunpack.c.0.s8 %v137
    %v139 = vlaneseq
    %v140 = vshrl.u32 %v139, 7
    %v141 = vsub.s32 %v138, %v140
    %v142 = vrot.slane %v128, %v141
    %v143 = vcombine.high %v135, %v135
    %v144 = vcombine.high %v142, %v142
    %v145 = vcombine.high %v93, %v93
    %v147 = vunpack.c.l.s4 1983009808
    %v148 = vunpack.c.0.s8 %v147
    %v149 = vlaneseq
    %v150 = vshrl.u32 %v149, 7
    %v151 = vsub.s32 %v148, %v150
    %v152 = vrot.slane %v93, %v151
    %v154 = vunpack.c.l.s4 1983009808
    %v155 = vunpack.c.0.s8 %v154
    %v156 = vlaneseq
    %v157 = vshrl.u32 %v156, 7
    %v158 = vsub.s32 %v155, %v157
    %v159 = vrot.slane %v145, %v158
    %v160 = vcombine.high %v152, %v152
    %v161 = vcombine.high %v159, %v159
    %v162 = vcombine.high %v94, %v94
    %v164 = vunpack.c.l.s4 1983009808
    %v165 = vunpack.c.0.s8 %v164
    %v166 = vlaneseq
    %v167 = vshrl.u32 %v166, 7
    %v168 = vsub.s32 %v165, %v167
    %v169 = vrot.slane %v94, %v168
    %v171 = vunpack.c.l.s4 1983009808
    %v172 = vunpack.c.0.s8 %v171
    %v173 = vlaneseq
    %v174 = vshrl.u32 %v173, 7
    %v175 = vsub.s32 %v172, %v174
    %v176 = vrot.slane %v162, %v175
    %v177 = vcombine.high %v169, %v169
    %v178 = vcombine.high %v176, %v176
    %v179 = vcombine.high %v95, %v95
    %v181 = vunpack.c.l.s4 1983009808
    %v182 = vunpack.c.0.s8 %v181
    %v183 = vlaneseq
    %v184 = vshrl.u32 %v183, 7
    %v185 = vsub.s32 %v182, %v184
    %v186 = vrot.slane %v95, %v185
    %v188 = vunpack.c.l.s4 1983009808
    %v189 = vunpack.c.0.s8 %v188
    %v190 = vlaneseq
    %v191 = vshrl.u32 %v190, 7
    %v192 = vsub.s32 %v189, %v191
    %v193 = vrot.slane %v179, %v192
    %v194 = vcombine.high %v186, %v186
    %v195 = vcombine.high %v193, %v193
    %v196 = vcombine.high %v96, %v96
    %v198 = vunpack.c.l.s4 1983009808
    %v199 = vunpack.c.0.s8 %v198
    %v200 = vlaneseq
    %v201 = vshrl.u32 %v200, 7
    %v202 = vsub.s32 %v199, %v201
    %v203 = vrot.slane %v96, %v202
    %v205 = vunpack.c.l.s4 1983009808
    %v206 = vunpack.c.0.s8 %v205
    %v207 = vlaneseq
    %v208 = vshrl.u32 %v207, 7
    %v209 = vsub.s32 %v206, %v208
    %v210 = vrot.slane %v196, %v209
    %v211 = vcombine.high %v203, %v203
    %v212 = vcombine.high %v210, %v210
    %v213 = vcombine.high %v97, %v97
    %v215 = vunpack.c.l.s4 1983009808
    %v216 = vunpack.c.0.s8 %v215
    %v217 = vlaneseq
    %v218 = vshrl.u32 %v217, 7
    %v219 = vsub.s32 %v216, %v218
    %v220 = vrot.slane %v97, %v219
    %v222 = vunpack.c.l.s4 1983009808
    %v223 = vunpack.c.0.s8 %v222
    %v224 = vlaneseq
    %v225 = vshrl.u32 %v224, 7
    %v226 = vsub.s32 %v223, %v225
    %v227 = vrot.slane %v213, %v226
    %v228 = vcombine.high %v220, %v220
    %v229 = vcombine.high %v227, %v227
    %v230 = vcombine.high %v98, %v98
    %v232 = vunpack.c.l.s4 1983009808
    %v233 = vunpack.c.0.s8 %v232
    %v234 = vlaneseq
    %v235 = vshrl.u32 %v234, 7
    %v236 = vsub.s32 %v233, %v235
    %v237 = vrot.slane %v98, %v236
    %v239 = vunpack.c.l.s4 1983009808
    %v240 = vunpack.c.0.s8 %v239
    %v241 = vlaneseq
    %v242 = vshrl.u32 %v241, 7
    %v243 = vsub.s32 %v240, %v242
    %v244 = vrot.slane %v230, %v243
    %v245 = vcombine.high %v237, %v237
    %v246 = vcombine.high %v244, %v244
    %v247 = vcombine.high %v99, %v99
    %v249 = vunpack.c.l.s4 1983009808
    %v250 = vunpack.c.0.s8 %v249
    %v251 = vlaneseq
    %v252 = vshrl.u32 %v251, 7
    %v253 = vsub.s32 %v250, %v252
    %v254 = vrot.slane %v99, %v253
    %v256 = vunpack.c.l.s4 1983009808
    %v257 = vunpack.c.0.s8 %v256
    %v258 = vlaneseq
    %v259 = vshrl.u32 %v258, 7
    %v260 = vsub.s32 %v257, %v259
    %v261 = vrot.slane %v247, %v260
    %v262 = vcombine.high %v254, %v254
    %v263 = vcombine.high %v261, %v261
    %v264 = vcombine.high %v100, %v100
    %v266 = vunpack.c.l.s4 1983009808
    %v267 = vunpack.c.0.s8 %v266
    %v268 = vlaneseq
    %v269 = vshrl.u32 %v268, 7
    %v270 = vsub.s32 %v267, %v269
    %v271 = vrot.slane %v100, %v270
    %v273 = vunpack.c.l.s4 1983009808
    %v274 = vunpack.c.0.s8 %v273
    %v275 = vlaneseq
    %v276 = vshrl.u32 %v275, 7
    %v277 = vsub.s32 %v274, %v276
    %v278 = vrot.slane %v264, %v277
    %v279 = vcombine.high %v271, %v271
    %v280 = vcombine.high %v278, %v278
    %v321 = vpack.c.bf16 %v118, %v118
    %v322 = vpack.c.bf16 %v126, %v126
    %v323 = vpack.c.bf16 %v125, %v125
    %v324 = vpack.c.bf16 %v127, %v127
    %v325 = vpack.c.bf16 %v135, %v135
    %v326 = vpack.c.bf16 %v143, %v143
    %v327 = vpack.c.bf16 %v142, %v142
    %v328 = vpack.c.bf16 %v144, %v144
    %v329 = vpack.c.bf16 %v152, %v152
    %v330 = vpack.c.bf16 %v160, %v160
    %v331 = vpack.c.bf16 %v159, %v159
    %v332 = vpack.c.bf16 %v161, %v161
    %v333 = vpack.c.bf16 %v169, %v169
    %v334 = vpack.c.bf16 %v177, %v177
    %v335 = vpack.c.bf16 %v176, %v176
    %v336 = vpack.c.bf16 %v178, %v178
    %v337 = vpack.c.bf16 %v186, %v186
    %v338 = vpack.c.bf16 %v194, %v194
    %v339 = vpack.c.bf16 %v193, %v193
    %v340 = vpack.c.bf16 %v195, %v195
    %v341 = vpack.c.bf16 %v203, %v203
    %v342 = vpack.c.bf16 %v211, %v211
    %v343 = vpack.c.bf16 %v210, %v210
    %v344 = vpack.c.bf16 %v212, %v212
    %v345 = vpack.c.bf16 %v220, %v220
    %v346 = vpack.c.bf16 %v228, %v228
    %v347 = vpack.c.bf16 %v227, %v227
    %v348 = vpack.c.bf16 %v229, %v229
    %v349 = vpack.c.bf16 %v237, %v237
    %v350 = vpack.c.bf16 %v245, %v245
    %v351 = vpack.c.bf16 %v244, %v244
    %v352 = vpack.c.bf16 %v246, %v246
    %v353 = vpack.c.bf16 %v254, %v254
    %v354 = vpack.c.bf16 %v262, %v262
    %v355 = vpack.c.bf16 %v261, %v261
    %v356 = vpack.c.bf16 %v263, %v263
    %v357 = vpack.c.bf16 %v271, %v271
    %v358 = vpack.c.bf16 %v279, %v279
    %v359 = vpack.c.bf16 %v278, %v278
    %v360 = vpack.c.bf16 %v280, %v280
    %v361 = vld [vmem:[#allocation5] sm:$0xff]
    %v362 = vld [vmem:[#allocation5 + $0x8] sm:$0xff]
    %v363 = vld [vmem:[#allocation5 + $0x10] sm:$0xff]
    %v364 = vld [vmem:[#allocation5 + $0x18] sm:$0xff]
    %v365 = vld [vmem:[#allocation5 + $0x20] sm:$0xff]
    %v366 = vld [vmem:[#allocation5 + $0x28] sm:$0xff]
    %v367 = vld [vmem:[#allocation5 + $0x30] sm:$0xff]
    %v368 = vld [vmem:[#allocation5 + $0x38] sm:$0xff]
    %v369 = vld [vmem:[#allocation5 + $0x40] sm:$0xff]
    %v370 = vld [vmem:[#allocation5 + $0x48] sm:$0xff]
    %v371 = vld [vmem:[#allocation5 + $0x50] sm:$0xff]
    %v372 = vld [vmem:[#allocation5 + $0x58] sm:$0xff]
    %v373 = vld [vmem:[#allocation5 + $0x60] sm:$0xff]
    %v374 = vld [vmem:[#allocation5 + $0x68] sm:$0xff]
    %v375 = vld [vmem:[#allocation5 + $0x70] sm:$0xff]
    %v376 = vld [vmem:[#allocation5 + $0x78] sm:$0xff]
    %v377 = vld [vmem:[#allocation5 + $0x80] sm:$0xff]
    %v378 = vld [vmem:[#allocation5 + $0x88] sm:$0xff]
    %v379 = vld [vmem:[#allocation5 + $0x90] sm:$0xff]
    %v380 = vld [vmem:[#allocation5 + $0x98] sm:$0xff]
    %v381 = vld [vmem:[#allocation5 + $0xa0] sm:$0xff]
    %v382 = vld [vmem:[#allocation5 + $0xa8] sm:$0xff]
    %v383 = vld [vmem:[#allocation5 + $0xb0] sm:$0xff]
    %v384 = vld [vmem:[#allocation5 + $0xb8] sm:$0xff]
    %v385 = vld [vmem:[#allocation5 + $0xc0] sm:$0xff]
    %v386 = vld [vmem:[#allocation5 + $0xc8] sm:$0xff]
    %v387 = vld [vmem:[#allocation5 + $0xd0] sm:$0xff]
    %v388 = vld [vmem:[#allocation5 + $0xd8] sm:$0xff]
    %v389 = vld [vmem:[#allocation5 + $0xe0] sm:$0xff]
    %v390 = vld [vmem:[#allocation5 + $0xe8] sm:$0xff]
    %v391 = vld [vmem:[#allocation5 + $0xf0] sm:$0xff]
    %v392 = vld [vmem:[#allocation5 + $0xf8] sm:$0xff]
    %v393 = vld [vmem:[#allocation5 + $0x100] sm:$0xff]
    %v394 = vld [vmem:[#allocation5 + $0x108] sm:$0xff]
    %v395 = vld [vmem:[#allocation5 + $0x110] sm:$0xff]
    %v396 = vld [vmem:[#allocation5 + $0x118] sm:$0xff]
    %v397 = vld [vmem:[#allocation5 + $0x120] sm:$0xff]
    %v398 = vld [vmem:[#allocation5 + $0x128] sm:$0xff]
    %v399 = vld [vmem:[#allocation5 + $0x130] sm:$0xff]
    %v400 = vld [vmem:[#allocation5 + $0x138] sm:$0xff]
    %v401 = vld [vmem:[#allocation5 + $0x140] sm:$0xff]
    %v402 = vld [vmem:[#allocation5 + $0x148] sm:$0xff]
    %v403 = vld [vmem:[#allocation5 + $0x150] sm:$0xff]
    %v404 = vld [vmem:[#allocation5 + $0x158] sm:$0xff]
    %v405 = vld [vmem:[#allocation5 + $0x160] sm:$0xff]
    %v406 = vld [vmem:[#allocation5 + $0x168] sm:$0xff]
    %v407 = vld [vmem:[#allocation5 + $0x170] sm:$0xff]
    %v408 = vld [vmem:[#allocation5 + $0x178] sm:$0xff]
    %v409 = vld [vmem:[#allocation5 + $0x180] sm:$0xff]
    %v410 = vld [vmem:[#allocation5 + $0x188] sm:$0xff]
    %v411 = vld [vmem:[#allocation5 + $0x190] sm:$0xff]
    %v412 = vld [vmem:[#allocation5 + $0x198] sm:$0xff]
    %v413 = vld [vmem:[#allocation5 + $0x1a0] sm:$0xff]
    %v414 = vld [vmem:[#allocation5 + $0x1a8] sm:$0xff]
    %v415 = vld [vmem:[#allocation5 + $0x1b0] sm:$0xff]
    %v416 = vld [vmem:[#allocation5 + $0x1b8] sm:$0xff]
    %v417 = vld [vmem:[#allocation5 + $0x1c0] sm:$0xff]
    %v418 = vld [vmem:[#allocation5 + $0x1c8] sm:$0xff]
    %v419 = vld [vmem:[#allocation5 + $0x1d0] sm:$0xff]
    %v420 = vld [vmem:[#allocation5 + $0x1d8] sm:$0xff]
    %v421 = vld [vmem:[#allocation5 + $0x1e0] sm:$0xff]
    %v422 = vld [vmem:[#allocation5 + $0x1e8] sm:$0xff]
    %v423 = vld [vmem:[#allocation5 + $0x1f0] sm:$0xff]
    %v424 = vld [vmem:[#allocation5 + $0x1f8] sm:$0xff]
    %v425 = vld [vmem:[#allocation5 + $0x200] sm:$0xff]
    %v426 = vld [vmem:[#allocation5 + $0x208] sm:$0xff]
    %v427 = vld [vmem:[#allocation5 + $0x210] sm:$0xff]
    %v428 = vld [vmem:[#allocation5 + $0x218] sm:$0xff]
    %v429 = vld [vmem:[#allocation5 + $0x220] sm:$0xff]
    %v430 = vld [vmem:[#allocation5 + $0x228] sm:$0xff]
    %v431 = vld [vmem:[#allocation5 + $0x230] sm:$0xff]
    %v432 = vld [vmem:[#allocation5 + $0x238] sm:$0xff]
    %v433 = vld [vmem:[#allocation5 + $0x240] sm:$0xff]
    %v434 = vld [vmem:[#allocation5 + $0x248] sm:$0xff]
    %v435 = vld [vmem:[#allocation5 + $0x250] sm:$0xff]
    %v436 = vld [vmem:[#allocation5 + $0x258] sm:$0xff]
    %v437 = vld [vmem:[#allocation5 + $0x260] sm:$0xff]
    %v438 = vld [vmem:[#allocation5 + $0x268] sm:$0xff]
    %v439 = vld [vmem:[#allocation5 + $0x270] sm:$0xff]
    %v440 = vld [vmem:[#allocation5 + $0x278] sm:$0xff]
    %v441 = vld [vmem:[#allocation5 + $0x280] sm:$0xff]
    %v442 = vld [vmem:[#allocation5 + $0x288] sm:$0xff]
    %v443 = vld [vmem:[#allocation5 + $0x290] sm:$0xff]
    %v444 = vld [vmem:[#allocation5 + $0x298] sm:$0xff]
    %v445 = vld [vmem:[#allocation5 + $0x2a0] sm:$0xff]
    %v446 = vld [vmem:[#allocation5 + $0x2a8] sm:$0xff]
    %v447 = vld [vmem:[#allocation5 + $0x2b0] sm:$0xff]
    %v448 = vld [vmem:[#allocation5 + $0x2b8] sm:$0xff]
    %v449 = vld [vmem:[#allocation5 + $0x2c0] sm:$0xff]
    %v450 = vld [vmem:[#allocation5 + $0x2c8] sm:$0xff]
    %v451 = vld [vmem:[#allocation5 + $0x2d0] sm:$0xff]
    %v452 = vld [vmem:[#allocation5 + $0x2d8] sm:$0xff]
    %v453 = vld [vmem:[#allocation5 + $0x2e0] sm:$0xff]
    %v454 = vld [vmem:[#allocation5 + $0x2e8] sm:$0xff]
    %v455 = vld [vmem:[#allocation5 + $0x2f0] sm:$0xff]
    %v456 = vld [vmem:[#allocation5 + $0x2f8] sm:$0xff]
    %v457 = vld [vmem:[#allocation5 + $0x300] sm:$0xff]
    %v458 = vld [vmem:[#allocation5 + $0x308] sm:$0xff]
    %v459 = vld [vmem:[#allocation5 + $0x310] sm:$0xff]
    %v460 = vld [vmem:[#allocation5 + $0x318] sm:$0xff]
    %v461 = vld [vmem:[#allocation5 + $0x320] sm:$0xff]
    %v462 = vld [vmem:[#allocation5 + $0x328] sm:$0xff]
    %v463 = vld [vmem:[#allocation5 + $0x330] sm:$0xff]
    %v464 = vld [vmem:[#allocation5 + $0x338] sm:$0xff]
    %v465 = vld [vmem:[#allocation5 + $0x340] sm:$0xff]
    %v466 = vld [vmem:[#allocation5 + $0x348] sm:$0xff]
    %v467 = vld [vmem:[#allocation5 + $0x350] sm:$0xff]
    %v468 = vld [vmem:[#allocation5 + $0x358] sm:$0xff]
    %v469 = vld [vmem:[#allocation5 + $0x360] sm:$0xff]
    %v470 = vld [vmem:[#allocation5 + $0x368] sm:$0xff]
    %v471 = vld [vmem:[#allocation5 + $0x370] sm:$0xff]
    %v472 = vld [vmem:[#allocation5 + $0x378] sm:$0xff]
    %v473 = vld [vmem:[#allocation5 + $0x380] sm:$0xff]
    %v474 = vld [vmem:[#allocation5 + $0x388] sm:$0xff]
    %v475 = vld [vmem:[#allocation5 + $0x390] sm:$0xff]
    %v476 = vld [vmem:[#allocation5 + $0x398] sm:$0xff]
    %v477 = vld [vmem:[#allocation5 + $0x3a0] sm:$0xff]
    %v478 = vld [vmem:[#allocation5 + $0x3a8] sm:$0xff]
    %v479 = vld [vmem:[#allocation5 + $0x3b0] sm:$0xff]
    %v480 = vld [vmem:[#allocation5 + $0x3b8] sm:$0xff]
    %v481 = vld [vmem:[#allocation5 + $0x3c0] sm:$0xff]
    %v482 = vld [vmem:[#allocation5 + $0x3c8] sm:$0xff]
    %v483 = vld [vmem:[#allocation5 + $0x3d0] sm:$0xff]
    %v484 = vld [vmem:[#allocation5 + $0x3d8] sm:$0xff]
    %v485 = vld [vmem:[#allocation5 + $0x3e0] sm:$0xff]
    %v486 = vld [vmem:[#allocation5 + $0x3e8] sm:$0xff]
    %v487 = vld [vmem:[#allocation5 + $0x3f0] sm:$0xff]
    %v488 = vld [vmem:[#allocation5 + $0x3f8] sm:$0xff]
    %v489 = vld [vmem:[#allocation5 + $0x400] sm:$0xff]
    %v490 = vld [vmem:[#allocation5 + $0x408] sm:$0xff]
    %v491 = vld [vmem:[#allocation5 + $0x410] sm:$0xff]
    %v492 = vld [vmem:[#allocation5 + $0x418] sm:$0xff]
    %v493 = vld [vmem:[#allocation5 + $0x420] sm:$0xff]
    %v494 = vld [vmem:[#allocation5 + $0x428] sm:$0xff]
    %v495 = vld [vmem:[#allocation5 + $0x430] sm:$0xff]
    %v496 = vld [vmem:[#allocation5 + $0x438] sm:$0xff]
    %v497 = vld [vmem:[#allocation5 + $0x440] sm:$0xff]
    %v498 = vld [vmem:[#allocation5 + $0x448] sm:$0xff]
    %v499 = vld [vmem:[#allocation5 + $0x450] sm:$0xff]
    %v500 = vld [vmem:[#allocation5 + $0x458] sm:$0xff]
    %v501 = vld [vmem:[#allocation5 + $0x460] sm:$0xff]
    %v502 = vld [vmem:[#allocation5 + $0x468] sm:$0xff]
    %v503 = vld [vmem:[#allocation5 + $0x470] sm:$0xff]
    %v504 = vld [vmem:[#allocation5 + $0x478] sm:$0xff]
    %v505 = vld [vmem:[#allocation5 + $0x480] sm:$0xff]
    %v506 = vld [vmem:[#allocation5 + $0x488] sm:$0xff]
    %v507 = vld [vmem:[#allocation5 + $0x490] sm:$0xff]
    %v508 = vld [vmem:[#allocation5 + $0x498] sm:$0xff]
    %v509 = vld [vmem:[#allocation5 + $0x4a0] sm:$0xff]
    %v510 = vld [vmem:[#allocation5 + $0x4a8] sm:$0xff]
    %v511 = vld [vmem:[#allocation5 + $0x4b0] sm:$0xff]
    %v512 = vld [vmem:[#allocation5 + $0x4b8] sm:$0xff]
    %v513 = vld [vmem:[#allocation5 + $0x4c0] sm:$0xff]
    %v514 = vld [vmem:[#allocation5 + $0x4c8] sm:$0xff]
    %v515 = vld [vmem:[#allocation5 + $0x4d0] sm:$0xff]
    %v516 = vld [vmem:[#allocation5 + $0x4d8] sm:$0xff]
    %v517 = vld [vmem:[#allocation5 + $0x4e0] sm:$0xff]
    %v518 = vld [vmem:[#allocation5 + $0x4e8] sm:$0xff]
    %v519 = vld [vmem:[#allocation5 + $0x4f0] sm:$0xff]
    %v520 = vld [vmem:[#allocation5 + $0x4f8] sm:$0xff]
    %v521 = vld [vmem:[#allocation5 + $0x500] sm:$0xff]
    %v522 = vld [vmem:[#allocation5 + $0x508] sm:$0xff]
    %v523 = vld [vmem:[#allocation5 + $0x510] sm:$0xff]
    %v524 = vld [vmem:[#allocation5 + $0x518] sm:$0xff]
    %v525 = vld [vmem:[#allocation5 + $0x520] sm:$0xff]
    %v526 = vld [vmem:[#allocation5 + $0x528] sm:$0xff]
    %v527 = vld [vmem:[#allocation5 + $0x530] sm:$0xff]
    %v528 = vld [vmem:[#allocation5 + $0x538] sm:$0xff]
    %v529 = vld [vmem:[#allocation5 + $0x540] sm:$0xff]
    %v530 = vld [vmem:[#allocation5 + $0x548] sm:$0xff]
    %v531 = vld [vmem:[#allocation5 + $0x550] sm:$0xff]
    %v532 = vld [vmem:[#allocation5 + $0x558] sm:$0xff]
    %v533 = vld [vmem:[#allocation5 + $0x560] sm:$0xff]
    %v534 = vld [vmem:[#allocation5 + $0x568] sm:$0xff]
    %v535 = vld [vmem:[#allocation5 + $0x570] sm:$0xff]
    %v536 = vld [vmem:[#allocation5 + $0x578] sm:$0xff]
    %v537 = vld [vmem:[#allocation5 + $0x580] sm:$0xff]
    %v538 = vld [vmem:[#allocation5 + $0x588] sm:$0xff]
    %v539 = vld [vmem:[#allocation5 + $0x590] sm:$0xff]
    %v540 = vld [vmem:[#allocation5 + $0x598] sm:$0xff]
    %v541 = vld [vmem:[#allocation5 + $0x5a0] sm:$0xff]
    %v542 = vld [vmem:[#allocation5 + $0x5a8] sm:$0xff]
    %v543 = vld [vmem:[#allocation5 + $0x5b0] sm:$0xff]
    %v544 = vld [vmem:[#allocation5 + $0x5b8] sm:$0xff]
    %v545 = vld [vmem:[#allocation5 + $0x5c0] sm:$0xff]
    %v546 = vld [vmem:[#allocation5 + $0x5c8] sm:$0xff]
    %v547 = vld [vmem:[#allocation5 + $0x5d0] sm:$0xff]
    %v548 = vld [vmem:[#allocation5 + $0x5d8] sm:$0xff]
    %v549 = vld [vmem:[#allocation5 + $0x5e0] sm:$0xff]
    %v550 = vld [vmem:[#allocation5 + $0x5e8] sm:$0xff]
    %v551 = vld [vmem:[#allocation5 + $0x5f0] sm:$0xff]
    %v552 = vld [vmem:[#allocation5 + $0x5f8] sm:$0xff]
    %v553 = vld [vmem:[#allocation5 + $0x600] sm:$0xff]
    %v554 = vld [vmem:[#allocation5 + $0x608] sm:$0xff]
    %v555 = vld [vmem:[#allocation5 + $0x610] sm:$0xff]
    %v556 = vld [vmem:[#allocation5 + $0x618] sm:$0xff]
    %v557 = vld [vmem:[#allocation5 + $0x620] sm:$0xff]
    %v558 = vld [vmem:[#allocation5 + $0x628] sm:$0xff]
    %v559 = vld [vmem:[#allocation5 + $0x630] sm:$0xff]
    %v560 = vld [vmem:[#allocation5 + $0x638] sm:$0xff]
    %v561 = vld [vmem:[#allocation5 + $0x640] sm:$0xff]
    %v562 = vld [vmem:[#allocation5 + $0x648] sm:$0xff]
    %v563 = vld [vmem:[#allocation5 + $0x650] sm:$0xff]
    %v564 = vld [vmem:[#allocation5 + $0x658] sm:$0xff]
    %v565 = vld [vmem:[#allocation5 + $0x660] sm:$0xff]
    %v566 = vld [vmem:[#allocation5 + $0x668] sm:$0xff]
    %v567 = vld [vmem:[#allocation5 + $0x670] sm:$0xff]
    %v568 = vld [vmem:[#allocation5 + $0x678] sm:$0xff]
    %v569 = vld [vmem:[#allocation5 + $0x680] sm:$0xff]
    %v570 = vld [vmem:[#allocation5 + $0x688] sm:$0xff]
    %v571 = vld [vmem:[#allocation5 + $0x690] sm:$0xff]
    %v572 = vld [vmem:[#allocation5 + $0x698] sm:$0xff]
    %v573 = vld [vmem:[#allocation5 + $0x6a0] sm:$0xff]
    %v574 = vld [vmem:[#allocation5 + $0x6a8] sm:$0xff]
    %v575 = vld [vmem:[#allocation5 + $0x6b0] sm:$0xff]
    %v576 = vld [vmem:[#allocation5 + $0x6b8] sm:$0xff]
    %v577 = vld [vmem:[#allocation5 + $0x6c0] sm:$0xff]
    %v578 = vld [vmem:[#allocation5 + $0x6c8] sm:$0xff]
    %v579 = vld [vmem:[#allocation5 + $0x6d0] sm:$0xff]
    %v580 = vld [vmem:[#allocation5 + $0x6d8] sm:$0xff]
    %v581 = vld [vmem:[#allocation5 + $0x6e0] sm:$0xff]
    %v582 = vld [vmem:[#allocation5 + $0x6e8] sm:$0xff]
    %v583 = vld [vmem:[#allocation5 + $0x6f0] sm:$0xff]
    %v584 = vld [vmem:[#allocation5 + $0x6f8] sm:$0xff]
    %v585 = vld [vmem:[#allocation5 + $0x700] sm:$0xff]
    %v586 = vld [vmem:[#allocation5 + $0x708] sm:$0xff]
    %v587 = vld [vmem:[#allocation5 + $0x710] sm:$0xff]
    %v588 = vld [vmem:[#allocation5 + $0x718] sm:$0xff]
    %v589 = vld [vmem:[#allocation5 + $0x720] sm:$0xff]
    %v590 = vld [vmem:[#allocation5 + $0x728] sm:$0xff]
    %v591 = vld [vmem:[#allocation5 + $0x730] sm:$0xff]
    %v592 = vld [vmem:[#allocation5 + $0x738] sm:$0xff]
    %v593 = vld [vmem:[#allocation5 + $0x740] sm:$0xff]
    %v594 = vld [vmem:[#allocation5 + $0x748] sm:$0xff]
    %v595 = vld [vmem:[#allocation5 + $0x750] sm:$0xff]
    %v596 = vld [vmem:[#allocation5 + $0x758] sm:$0xff]
    %v597 = vld [vmem:[#allocation5 + $0x760] sm:$0xff]
    %v598 = vld [vmem:[#allocation5 + $0x768] sm:$0xff]
    %v599 = vld [vmem:[#allocation5 + $0x770] sm:$0xff]
    %v600 = vld [vmem:[#allocation5 + $0x778] sm:$0xff]
    %v601 = vld [vmem:[#allocation5 + $0x780] sm:$0xff]
    %v602 = vld [vmem:[#allocation5 + $0x788] sm:$0xff]
    %v603 = vld [vmem:[#allocation5 + $0x790] sm:$0xff]
    %v604 = vld [vmem:[#allocation5 + $0x798] sm:$0xff]
    %v605 = vld [vmem:[#allocation5 + $0x7a0] sm:$0xff]
    %v606 = vld [vmem:[#allocation5 + $0x7a8] sm:$0xff]
    %v607 = vld [vmem:[#allocation5 + $0x7b0] sm:$0xff]
    %v608 = vld [vmem:[#allocation5 + $0x7b8] sm:$0xff]
    %v609 = vld [vmem:[#allocation5 + $0x7c0] sm:$0xff]
    %v610 = vld [vmem:[#allocation5 + $0x7c8] sm:$0xff]
    %v611 = vld [vmem:[#allocation5 + $0x7d0] sm:$0xff]
    %v612 = vld [vmem:[#allocation5 + $0x7d8] sm:$0xff]
    %v613 = vld [vmem:[#allocation5 + $0x7e0] sm:$0xff]
    %v614 = vld [vmem:[#allocation5 + $0x7e8] sm:$0xff]
    %v615 = vld [vmem:[#allocation5 + $0x7f0] sm:$0xff]
    %v616 = vld [vmem:[#allocation5 + $0x7f8] sm:$0xff]
    %v617 = vld [vmem:[#allocation5 + $0x800] sm:$0xff]
    %v618 = vld [vmem:[#allocation5 + $0x808] sm:$0xff]
    %v619 = vld [vmem:[#allocation5 + $0x810] sm:$0xff]
    %v620 = vld [vmem:[#allocation5 + $0x818] sm:$0xff]
    %v621 = vld [vmem:[#allocation5 + $0x820] sm:$0xff]
    %v622 = vld [vmem:[#allocation5 + $0x828] sm:$0xff]
    %v623 = vld [vmem:[#allocation5 + $0x830] sm:$0xff]
    %v624 = vld [vmem:[#allocation5 + $0x838] sm:$0xff]
    %v625 = vld [vmem:[#allocation5 + $0x840] sm:$0xff]
    %v626 = vld [vmem:[#allocation5 + $0x848] sm:$0xff]
    %v627 = vld [vmem:[#allocation5 + $0x850] sm:$0xff]
    %v628 = vld [vmem:[#allocation5 + $0x858] sm:$0xff]
    %v629 = vld [vmem:[#allocation5 + $0x860] sm:$0xff]
    %v630 = vld [vmem:[#allocation5 + $0x868] sm:$0xff]
    %v631 = vld [vmem:[#allocation5 + $0x870] sm:$0xff]
    %v632 = vld [vmem:[#allocation5 + $0x878] sm:$0xff]
    %v633 = vld [vmem:[#allocation5 + $0x880] sm:$0xff]
    %v634 = vld [vmem:[#allocation5 + $0x888] sm:$0xff]
    %v635 = vld [vmem:[#allocation5 + $0x890] sm:$0xff]
    %v636 = vld [vmem:[#allocation5 + $0x898] sm:$0xff]
    %v637 = vld [vmem:[#allocation5 + $0x8a0] sm:$0xff]
    %v638 = vld [vmem:[#allocation5 + $0x8a8] sm:$0xff]
    %v639 = vld [vmem:[#allocation5 + $0x8b0] sm:$0xff]
    %v640 = vld [vmem:[#allocation5 + $0x8b8] sm:$0xff]
    %v641 = vld [vmem:[#allocation5 + $0x8c0] sm:$0xff]
    %v642 = vld [vmem:[#allocation5 + $0x8c8] sm:$0xff]
    %v643 = vld [vmem:[#allocation5 + $0x8d0] sm:$0xff]
    %v644 = vld [vmem:[#allocation5 + $0x8d8] sm:$0xff]
    %v645 = vld [vmem:[#allocation5 + $0x8e0] sm:$0xff]
    %v646 = vld [vmem:[#allocation5 + $0x8e8] sm:$0xff]
    %v647 = vld [vmem:[#allocation5 + $0x8f0] sm:$0xff]
    %v648 = vld [vmem:[#allocation5 + $0x8f8] sm:$0xff]
    %v649 = vld [vmem:[#allocation5 + $0x900] sm:$0xff]
    %v650 = vld [vmem:[#allocation5 + $0x908] sm:$0xff]
    %v651 = vld [vmem:[#allocation5 + $0x910] sm:$0xff]
    %v652 = vld [vmem:[#allocation5 + $0x918] sm:$0xff]
    %v653 = vld [vmem:[#allocation5 + $0x920] sm:$0xff]
    %v654 = vld [vmem:[#allocation5 + $0x928] sm:$0xff]
    %v655 = vld [vmem:[#allocation5 + $0x930] sm:$0xff]
    %v656 = vld [vmem:[#allocation5 + $0x938] sm:$0xff]
    %v657 = vld [vmem:[#allocation5 + $0x940] sm:$0xff]
    %v658 = vld [vmem:[#allocation5 + $0x948] sm:$0xff]
    %v659 = vld [vmem:[#allocation5 + $0x950] sm:$0xff]
    %v660 = vld [vmem:[#allocation5 + $0x958] sm:$0xff]
    %v661 = vld [vmem:[#allocation5 + $0x960] sm:$0xff]
    %v662 = vld [vmem:[#allocation5 + $0x968] sm:$0xff]
    %v663 = vld [vmem:[#allocation5 + $0x970] sm:$0xff]
    %v664 = vld [vmem:[#allocation5 + $0x978] sm:$0xff]
    %v665 = vld [vmem:[#allocation5 + $0x980] sm:$0xff]
    %v666 = vld [vmem:[#allocation5 + $0x988] sm:$0xff]
    %v667 = vld [vmem:[#allocation5 + $0x990] sm:$0xff]
    %v668 = vld [vmem:[#allocation5 + $0x998] sm:$0xff]
    %v669 = vld [vmem:[#allocation5 + $0x9a0] sm:$0xff]
    %v670 = vld [vmem:[#allocation5 + $0x9a8] sm:$0xff]
    %v671 = vld [vmem:[#allocation5 + $0x9b0] sm:$0xff]
    %v672 = vld [vmem:[#allocation5 + $0x9b8] sm:$0xff]
    %v673 = vld [vmem:[#allocation5 + $0x9c0] sm:$0xff]
    %v674 = vld [vmem:[#allocation5 + $0x9c8] sm:$0xff]
    %v675 = vld [vmem:[#allocation5 + $0x9d0] sm:$0xff]
    %v676 = vld [vmem:[#allocation5 + $0x9d8] sm:$0xff]
    %v677 = vld [vmem:[#allocation5 + $0x9e0] sm:$0xff]
    %v678 = vld [vmem:[#allocation5 + $0x9e8] sm:$0xff]
    %v679 = vld [vmem:[#allocation5 + $0x9f0] sm:$0xff]
    %v680 = vld [vmem:[#allocation5 + $0x9f8] sm:$0xff]
    %v681 = vld [vmem:[#allocation5 + $0xa00] sm:$0xff]
    %v682 = vld [vmem:[#allocation5 + $0xa08] sm:$0xff]
    %v683 = vld [vmem:[#allocation5 + $0xa10] sm:$0xff]
    %v684 = vld [vmem:[#allocation5 + $0xa18] sm:$0xff]
    %v685 = vld [vmem:[#allocation5 + $0xa20] sm:$0xff]
    %v686 = vld [vmem:[#allocation5 + $0xa28] sm:$0xff]
    %v687 = vld [vmem:[#allocation5 + $0xa30] sm:$0xff]
    %v688 = vld [vmem:[#allocation5 + $0xa38] sm:$0xff]
    %v689 = vld [vmem:[#allocation5 + $0xa40] sm:$0xff]
    %v690 = vld [vmem:[#allocation5 + $0xa48] sm:$0xff]
    %v691 = vld [vmem:[#allocation5 + $0xa50] sm:$0xff]
    %v692 = vld [vmem:[#allocation5 + $0xa58] sm:$0xff]
    %v693 = vld [vmem:[#allocation5 + $0xa60] sm:$0xff]
    %v694 = vld [vmem:[#allocation5 + $0xa68] sm:$0xff]
    %v695 = vld [vmem:[#allocation5 + $0xa70] sm:$0xff]
    %v696 = vld [vmem:[#allocation5 + $0xa78] sm:$0xff]
    %v697 = vld [vmem:[#allocation5 + $0xa80] sm:$0xff]
    %v698 = vld [vmem:[#allocation5 + $0xa88] sm:$0xff]
    %v699 = vld [vmem:[#allocation5 + $0xa90] sm:$0xff]
    %v700 = vld [vmem:[#allocation5 + $0xa98] sm:$0xff]
    %v701 = vld [vmem:[#allocation5 + $0xaa0] sm:$0xff]
    %v702 = vld [vmem:[#allocation5 + $0xaa8] sm:$0xff]
    %v703 = vld [vmem:[#allocation5 + $0xab0] sm:$0xff]
    %v704 = vld [vmem:[#allocation5 + $0xab8] sm:$0xff]
    %v705 = vld [vmem:[#allocation5 + $0xac0] sm:$0xff]
    %v706 = vld [vmem:[#allocation5 + $0xac8] sm:$0xff]
    %v707 = vld [vmem:[#allocation5 + $0xad0] sm:$0xff]
    %v708 = vld [vmem:[#allocation5 + $0xad8] sm:$0xff]
    %v709 = vld [vmem:[#allocation5 + $0xae0] sm:$0xff]
    %v710 = vld [vmem:[#allocation5 + $0xae8] sm:$0xff]
    %v711 = vld [vmem:[#allocation5 + $0xaf0] sm:$0xff]
    %v712 = vld [vmem:[#allocation5 + $0xaf8] sm:$0xff]
    %v713 = vld [vmem:[#allocation5 + $0xb00] sm:$0xff]
    %v714 = vld [vmem:[#allocation5 + $0xb08] sm:$0xff]
    %v715 = vld [vmem:[#allocation5 + $0xb10] sm:$0xff]
    %v716 = vld [vmem:[#allocation5 + $0xb18] sm:$0xff]
    %v717 = vld [vmem:[#allocation5 + $0xb20] sm:$0xff]
    %v718 = vld [vmem:[#allocation5 + $0xb28] sm:$0xff]
    %v719 = vld [vmem:[#allocation5 + $0xb30] sm:$0xff]
    %v720 = vld [vmem:[#allocation5 + $0xb38] sm:$0xff]
    %v721 = vld [vmem:[#allocation5 + $0xb40] sm:$0xff]
    %v722 = vld [vmem:[#allocation5 + $0xb48] sm:$0xff]
    %v723 = vld [vmem:[#allocation5 + $0xb50] sm:$0xff]
    %v724 = vld [vmem:[#allocation5 + $0xb58] sm:$0xff]
    %v725 = vld [vmem:[#allocation5 + $0xb60] sm:$0xff]
    %v726 = vld [vmem:[#allocation5 + $0xb68] sm:$0xff]
    %v727 = vld [vmem:[#allocation5 + $0xb70] sm:$0xff]
    %v728 = vld [vmem:[#allocation5 + $0xb78] sm:$0xff]
    %v729 = vld [vmem:[#allocation5 + $0xb80] sm:$0xff]
    %v730 = vld [vmem:[#allocation5 + $0xb88] sm:$0xff]
    %v731 = vld [vmem:[#allocation5 + $0xb90] sm:$0xff]
    %v732 = vld [vmem:[#allocation5 + $0xb98] sm:$0xff]
    %v733 = vld [vmem:[#allocation5 + $0xba0] sm:$0xff]
    %v734 = vld [vmem:[#allocation5 + $0xba8] sm:$0xff]
    %v735 = vld [vmem:[#allocation5 + $0xbb0] sm:$0xff]
    %v736 = vld [vmem:[#allocation5 + $0xbb8] sm:$0xff]
    %v737 = vld [vmem:[#allocation5 + $0xbc0] sm:$0xff]
    %v738 = vld [vmem:[#allocation5 + $0xbc8] sm:$0xff]
    %v739 = vld [vmem:[#allocation5 + $0xbd0] sm:$0xff]
    %v740 = vld [vmem:[#allocation5 + $0xbd8] sm:$0xff]
    %v741 = vld [vmem:[#allocation5 + $0xbe0] sm:$0xff]
    %v742 = vld [vmem:[#allocation5 + $0xbe8] sm:$0xff]
    %v743 = vld [vmem:[#allocation5 + $0xbf0] sm:$0xff]
    %v744 = vld [vmem:[#allocation5 + $0xbf8] sm:$0xff]
    %v745 = vld [vmem:[#allocation5 + $0xc00] sm:$0xff]
    %v746 = vld [vmem:[#allocation5 + $0xc08] sm:$0xff]
    %v747 = vld [vmem:[#allocation5 + $0xc10] sm:$0xff]
    %v748 = vld [vmem:[#allocation5 + $0xc18] sm:$0xff]
    %v749 = vld [vmem:[#allocation5 + $0xc20] sm:$0xff]
    %v750 = vld [vmem:[#allocation5 + $0xc28] sm:$0xff]
    %v751 = vld [vmem:[#allocation5 + $0xc30] sm:$0xff]
    %v752 = vld [vmem:[#allocation5 + $0xc38] sm:$0xff]
    %v753 = vld [vmem:[#allocation5 + $0xc40] sm:$0xff]
    %v754 = vld [vmem:[#allocation5 + $0xc48] sm:$0xff]
    %v755 = vld [vmem:[#allocation5 + $0xc50] sm:$0xff]
    %v756 = vld [vmem:[#allocation5 + $0xc58] sm:$0xff]
    %v757 = vld [vmem:[#allocation5 + $0xc60] sm:$0xff]
    %v758 = vld [vmem:[#allocation5 + $0xc68] sm:$0xff]
    %v759 = vld [vmem:[#allocation5 + $0xc70] sm:$0xff]
    %v760 = vld [vmem:[#allocation5 + $0xc78] sm:$0xff]
    %v761 = vld [vmem:[#allocation5 + $0xc80] sm:$0xff]
    %v762 = vld [vmem:[#allocation5 + $0xc88] sm:$0xff]
    %v763 = vld [vmem:[#allocation5 + $0xc90] sm:$0xff]
    %v764 = vld [vmem:[#allocation5 + $0xc98] sm:$0xff]
    %v765 = vld [vmem:[#allocation5 + $0xca0] sm:$0xff]
    %v766 = vld [vmem:[#allocation5 + $0xca8] sm:$0xff]
    %v767 = vld [vmem:[#allocation5 + $0xcb0] sm:$0xff]
    %v768 = vld [vmem:[#allocation5 + $0xcb8] sm:$0xff]
    %v769 = vld [vmem:[#allocation5 + $0xcc0] sm:$0xff]
    %v770 = vld [vmem:[#allocation5 + $0xcc8] sm:$0xff]
    %v771 = vld [vmem:[#allocation5 + $0xcd0] sm:$0xff]
    %v772 = vld [vmem:[#allocation5 + $0xcd8] sm:$0xff]
    %v773 = vld [vmem:[#allocation5 + $0xce0] sm:$0xff]
    %v774 = vld [vmem:[#allocation5 + $0xce8] sm:$0xff]
    %v775 = vld [vmem:[#allocation5 + $0xcf0] sm:$0xff]
    %v776 = vld [vmem:[#allocation5 + $0xcf8] sm:$0xff]
    %v777 = vld [vmem:[#allocation5 + $0xd00] sm:$0xff]
    %v778 = vld [vmem:[#allocation5 + $0xd08] sm:$0xff]
    %v779 = vld [vmem:[#allocation5 + $0xd10] sm:$0xff]
    %v780 = vld [vmem:[#allocation5 + $0xd18] sm:$0xff]
    %v781 = vld [vmem:[#allocation5 + $0xd20] sm:$0xff]
    %v782 = vld [vmem:[#allocation5 + $0xd28] sm:$0xff]
    %v783 = vld [vmem:[#allocation5 + $0xd30] sm:$0xff]
    %v784 = vld [vmem:[#allocation5 + $0xd38] sm:$0xff]
    %v785 = vld [vmem:[#allocation5 + $0xd40] sm:$0xff]
    %v786 = vld [vmem:[#allocation5 + $0xd48] sm:$0xff]
    %v787 = vld [vmem:[#allocation5 + $0xd50] sm:$0xff]
    %v788 = vld [vmem:[#allocation5 + $0xd58] sm:$0xff]
    %v789 = vld [vmem:[#allocation5 + $0xd60] sm:$0xff]
    %v790 = vld [vmem:[#allocation5 + $0xd68] sm:$0xff]
    %v791 = vld [vmem:[#allocation5 + $0xd70] sm:$0xff]
    %v792 = vld [vmem:[#allocation5 + $0xd78] sm:$0xff]
    %v793 = vld [vmem:[#allocation5 + $0xd80] sm:$0xff]
    %v794 = vld [vmem:[#allocation5 + $0xd88] sm:$0xff]
    %v795 = vld [vmem:[#allocation5 + $0xd90] sm:$0xff]
    %v796 = vld [vmem:[#allocation5 + $0xd98] sm:$0xff]
    %v797 = vld [vmem:[#allocation5 + $0xda0] sm:$0xff]
    %v798 = vld [vmem:[#allocation5 + $0xda8] sm:$0xff]
    %v799 = vld [vmem:[#allocation5 + $0xdb0] sm:$0xff]
    %v800 = vld [vmem:[#allocation5 + $0xdb8] sm:$0xff]
    %v801 = vld [vmem:[#allocation5 + $0xdc0] sm:$0xff]
    %v802 = vld [vmem:[#allocation5 + $0xdc8] sm:$0xff]
    %v803 = vld [vmem:[#allocation5 + $0xdd0] sm:$0xff]
    %v804 = vld [vmem:[#allocation5 + $0xdd8] sm:$0xff]
    %v805 = vld [vmem:[#allocation5 + $0xde0] sm:$0xff]
    %v806 = vld [vmem:[#allocation5 + $0xde8] sm:$0xff]
    %v807 = vld [vmem:[#allocation5 + $0xdf0] sm:$0xff]
    %v808 = vld [vmem:[#allocation5 + $0xdf8] sm:$0xff]
    %v809 = vld [vmem:[#allocation5 + $0xe00] sm:$0xff]
    %v810 = vld [vmem:[#allocation5 + $0xe08] sm:$0xff]
    %v811 = vld [vmem:[#allocation5 + $0xe10] sm:$0xff]
    %v812 = vld [vmem:[#allocation5 + $0xe18] sm:$0xff]
    %v813 = vld [vmem:[#allocation5 + $0xe20] sm:$0xff]
    %v814 = vld [vmem:[#allocation5 + $0xe28] sm:$0xff]
    %v815 = vld [vmem:[#allocation5 + $0xe30] sm:$0xff]
    %v816 = vld [vmem:[#allocation5 + $0xe38] sm:$0xff]
    %v817 = vld [vmem:[#allocation5 + $0xe40] sm:$0xff]
    %v818 = vld [vmem:[#allocation5 + $0xe48] sm:$0xff]
    %v819 = vld [vmem:[#allocation5 + $0xe50] sm:$0xff]
    %v820 = vld [vmem:[#allocation5 + $0xe58] sm:$0xff]
    %v821 = vld [vmem:[#allocation5 + $0xe60] sm:$0xff]
    %v822 = vld [vmem:[#allocation5 + $0xe68] sm:$0xff]
    %v823 = vld [vmem:[#allocation5 + $0xe70] sm:$0xff]
    %v824 = vld [vmem:[#allocation5 + $0xe78] sm:$0xff]
    %v825 = vld [vmem:[#allocation5 + $0xe80] sm:$0xff]
    %v826 = vld [vmem:[#allocation5 + $0xe88] sm:$0xff]
    %v827 = vld [vmem:[#allocation5 + $0xe90] sm:$0xff]
    %v828 = vld [vmem:[#allocation5 + $0xe98] sm:$0xff]
    %v829 = vld [vmem:[#allocation5 + $0xea0] sm:$0xff]
    %v830 = vld [vmem:[#allocation5 + $0xea8] sm:$0xff]
    %v831 = vld [vmem:[#allocation5 + $0xeb0] sm:$0xff]
    %v832 = vld [vmem:[#allocation5 + $0xeb8] sm:$0xff]
    %v833 = vld [vmem:[#allocation5 + $0xec0] sm:$0xff]
    %v834 = vld [vmem:[#allocation5 + $0xec8] sm:$0xff]
    %v835 = vld [vmem:[#allocation5 + $0xed0] sm:$0xff]
    %v836 = vld [vmem:[#allocation5 + $0xed8] sm:$0xff]
    %v837 = vld [vmem:[#allocation5 + $0xee0] sm:$0xff]
    %v838 = vld [vmem:[#allocation5 + $0xee8] sm:$0xff]
    %v839 = vld [vmem:[#allocation5 + $0xef0] sm:$0xff]
    %v840 = vld [vmem:[#allocation5 + $0xef8] sm:$0xff]
    %v841 = vld [vmem:[#allocation5 + $0xf00] sm:$0xff]
    %v842 = vld [vmem:[#allocation5 + $0xf08] sm:$0xff]
    %v843 = vld [vmem:[#allocation5 + $0xf10] sm:$0xff]
    %v844 = vld [vmem:[#allocation5 + $0xf18] sm:$0xff]
    %v845 = vld [vmem:[#allocation5 + $0xf20] sm:$0xff]
    %v846 = vld [vmem:[#allocation5 + $0xf28] sm:$0xff]
    %v847 = vld [vmem:[#allocation5 + $0xf30] sm:$0xff]
    %v848 = vld [vmem:[#allocation5 + $0xf38] sm:$0xff]
    %v849 = vld [vmem:[#allocation5 + $0xf40] sm:$0xff]
    %v850 = vld [vmem:[#allocation5 + $0xf48] sm:$0xff]
    %v851 = vld [vmem:[#allocation5 + $0xf50] sm:$0xff]
    %v852 = vld [vmem:[#allocation5 + $0xf58] sm:$0xff]
    %v853 = vld [vmem:[#allocation5 + $0xf60] sm:$0xff]
    %v854 = vld [vmem:[#allocation5 + $0xf68] sm:$0xff]
    %v855 = vld [vmem:[#allocation5 + $0xf70] sm:$0xff]
    %v856 = vld [vmem:[#allocation5 + $0xf78] sm:$0xff]
    %v857 = vld [vmem:[#allocation5 + $0xf80] sm:$0xff]
    %v858 = vld [vmem:[#allocation5 + $0xf88] sm:$0xff]
    %v859 = vld [vmem:[#allocation5 + $0xf90] sm:$0xff]
    %v860 = vld [vmem:[#allocation5 + $0xf98] sm:$0xff]
    %v861 = vld [vmem:[#allocation5 + $0xfa0] sm:$0xff]
    %v862 = vld [vmem:[#allocation5 + $0xfa8] sm:$0xff]
    %v863 = vld [vmem:[#allocation5 + $0xfb0] sm:$0xff]
    %v864 = vld [vmem:[#allocation5 + $0xfb8] sm:$0xff]
    %v865 = vld [vmem:[#allocation5 + $0xfc0] sm:$0xff]
    %v866 = vld [vmem:[#allocation5 + $0xfc8] sm:$0xff]
    %v867 = vld [vmem:[#allocation5 + $0xfd0] sm:$0xff]
    %v868 = vld [vmem:[#allocation5 + $0xfd8] sm:$0xff]
    %v869 = vld [vmem:[#allocation5 + $0xfe0] sm:$0xff]
    %v870 = vld [vmem:[#allocation5 + $0xfe8] sm:$0xff]
    %v871 = vld [vmem:[#allocation5 + $0xff0] sm:$0xff]
    %v872 = vld [vmem:[#allocation5 + $0xff8] sm:$0xff]
    %v873 = vld [vmem:[#allocation5 + $0x1000] sm:$0xff]
    %v874 = vld [vmem:[#allocation5 + $0x1008] sm:$0xff]
    %v875 = vld [vmem:[#allocation5 + $0x1010] sm:$0xff]
    %v876 = vld [vmem:[#allocation5 + $0x1018] sm:$0xff]
    %v877 = vld [vmem:[#allocation5 + $0x1020] sm:$0xff]
    %v878 = vld [vmem:[#allocation5 + $0x1028] sm:$0xff]
    %v879 = vld [vmem:[#allocation5 + $0x1030] sm:$0xff]
    %v880 = vld [vmem:[#allocation5 + $0x1038] sm:$0xff]
    %v881 = vld [vmem:[#allocation5 + $0x1040] sm:$0xff]
    %v882 = vld [vmem:[#allocation5 + $0x1048] sm:$0xff]
    %v883 = vld [vmem:[#allocation5 + $0x1050] sm:$0xff]
    %v884 = vld [vmem:[#allocation5 + $0x1058] sm:$0xff]
    %v885 = vld [vmem:[#allocation5 + $0x1060] sm:$0xff]
    %v886 = vld [vmem:[#allocation5 + $0x1068] sm:$0xff]
    %v887 = vld [vmem:[#allocation5 + $0x1070] sm:$0xff]
    %v888 = vld [vmem:[#allocation5 + $0x1078] sm:$0xff]
    %v889 = vld [vmem:[#allocation5 + $0x1080] sm:$0xff]
    %v890 = vld [vmem:[#allocation5 + $0x1088] sm:$0xff]
    %v891 = vld [vmem:[#allocation5 + $0x1090] sm:$0xff]
    %v892 = vld [vmem:[#allocation5 + $0x1098] sm:$0xff]
    %v893 = vld [vmem:[#allocation5 + $0x10a0] sm:$0xff]
    %v894 = vld [vmem:[#allocation5 + $0x10a8] sm:$0xff]
    %v895 = vld [vmem:[#allocation5 + $0x10b0] sm:$0xff]
    %v896 = vld [vmem:[#allocation5 + $0x10b8] sm:$0xff]
    %v897 = vld [vmem:[#allocation5 + $0x10c0] sm:$0xff]
    %v898 = vld [vmem:[#allocation5 + $0x10c8] sm:$0xff]
    %v899 = vld [vmem:[#allocation5 + $0x10d0] sm:$0xff]
    %v900 = vld [vmem:[#allocation5 + $0x10d8] sm:$0xff]
    %v901 = vld [vmem:[#allocation5 + $0x10e0] sm:$0xff]
    %v902 = vld [vmem:[#allocation5 + $0x10e8] sm:$0xff]
    %v903 = vld [vmem:[#allocation5 + $0x10f0] sm:$0xff]
    %v904 = vld [vmem:[#allocation5 + $0x10f8] sm:$0xff]
    %v905 = vld [vmem:[#allocation5 + $0x1100] sm:$0xff]
    %v906 = vld [vmem:[#allocation5 + $0x1108] sm:$0xff]
    %v907 = vld [vmem:[#allocation5 + $0x1110] sm:$0xff]
    %v908 = vld [vmem:[#allocation5 + $0x1118] sm:$0xff]
    %v909 = vld [vmem:[#allocation5 + $0x1120] sm:$0xff]
    %v910 = vld [vmem:[#allocation5 + $0x1128] sm:$0xff]
    %v911 = vld [vmem:[#allocation5 + $0x1130] sm:$0xff]
    %v912 = vld [vmem:[#allocation5 + $0x1138] sm:$0xff]
    %v913 = vld [vmem:[#allocation5 + $0x1140] sm:$0xff]
    %v914 = vld [vmem:[#allocation5 + $0x1148] sm:$0xff]
    %v915 = vld [vmem:[#allocation5 + $0x1150] sm:$0xff]
    %v916 = vld [vmem:[#allocation5 + $0x1158] sm:$0xff]
    %v917 = vld [vmem:[#allocation5 + $0x1160] sm:$0xff]
    %v918 = vld [vmem:[#allocation5 + $0x1168] sm:$0xff]
    %v919 = vld [vmem:[#allocation5 + $0x1170] sm:$0xff]
    %v920 = vld [vmem:[#allocation5 + $0x1178] sm:$0xff]
    %v921 = vld [vmem:[#allocation5 + $0x1180] sm:$0xff]
    %v922 = vld [vmem:[#allocation5 + $0x1188] sm:$0xff]
    %v923 = vld [vmem:[#allocation5 + $0x1190] sm:$0xff]
    %v924 = vld [vmem:[#allocation5 + $0x1198] sm:$0xff]
    %v925 = vld [vmem:[#allocation5 + $0x11a0] sm:$0xff]
    %v926 = vld [vmem:[#allocation5 + $0x11a8] sm:$0xff]
    %v927 = vld [vmem:[#allocation5 + $0x11b0] sm:$0xff]
    %v928 = vld [vmem:[#allocation5 + $0x11b8] sm:$0xff]
    %v929 = vld [vmem:[#allocation5 + $0x11c0] sm:$0xff]
    %v930 = vld [vmem:[#allocation5 + $0x11c8] sm:$0xff]
    %v931 = vld [vmem:[#allocation5 + $0x11d0] sm:$0xff]
    %v932 = vld [vmem:[#allocation5 + $0x11d8] sm:$0xff]
    %v933 = vld [vmem:[#allocation5 + $0x11e0] sm:$0xff]
    %v934 = vld [vmem:[#allocation5 + $0x11e8] sm:$0xff]
    %v935 = vld [vmem:[#allocation5 + $0x11f0] sm:$0xff]
    %v936 = vld [vmem:[#allocation5 + $0x11f8] sm:$0xff]
    %v937 = vld [vmem:[#allocation5 + $0x1200] sm:$0xff]
    %v938 = vld [vmem:[#allocation5 + $0x1208] sm:$0xff]
    %v939 = vld [vmem:[#allocation5 + $0x1210] sm:$0xff]
    %v940 = vld [vmem:[#allocation5 + $0x1218] sm:$0xff]
    %v941 = vld [vmem:[#allocation5 + $0x1220] sm:$0xff]
    %v942 = vld [vmem:[#allocation5 + $0x1228] sm:$0xff]
    %v943 = vld [vmem:[#allocation5 + $0x1230] sm:$0xff]
    %v944 = vld [vmem:[#allocation5 + $0x1238] sm:$0xff]
    %v945 = vld [vmem:[#allocation5 + $0x1240] sm:$0xff]
    %v946 = vld [vmem:[#allocation5 + $0x1248] sm:$0xff]
    %v947 = vld [vmem:[#allocation5 + $0x1250] sm:$0xff]
    %v948 = vld [vmem:[#allocation5 + $0x1258] sm:$0xff]
    %v949 = vld [vmem:[#allocation5 + $0x1260] sm:$0xff]
    %v950 = vld [vmem:[#allocation5 + $0x1268] sm:$0xff]
    %v951 = vld [vmem:[#allocation5 + $0x1270] sm:$0xff]
    %v952 = vld [vmem:[#allocation5 + $0x1278] sm:$0xff]
    %v953 = vld [vmem:[#allocation5 + $0x1280] sm:$0xff]
    %v954 = vld [vmem:[#allocation5 + $0x1288] sm:$0xff]
    %v955 = vld [vmem:[#allocation5 + $0x1290] sm:$0xff]
    %v956 = vld [vmem:[#allocation5 + $0x1298] sm:$0xff]
    %v957 = vld [vmem:[#allocation5 + $0x12a0] sm:$0xff]
    %v958 = vld [vmem:[#allocation5 + $0x12a8] sm:$0xff]
    %v959 = vld [vmem:[#allocation5 + $0x12b0] sm:$0xff]
    %v960 = vld [vmem:[#allocation5 + $0x12b8] sm:$0xff]
    %v961 = vld [vmem:[#allocation5 + $0x12c0] sm:$0xff]
    %v962 = vld [vmem:[#allocation5 + $0x12c8] sm:$0xff]
    %v963 = vld [vmem:[#allocation5 + $0x12d0] sm:$0xff]
    %v964 = vld [vmem:[#allocation5 + $0x12d8] sm:$0xff]
    %v965 = vld [vmem:[#allocation5 + $0x12e0] sm:$0xff]
    %v966 = vld [vmem:[#allocation5 + $0x12e8] sm:$0xff]
    %v967 = vld [vmem:[#allocation5 + $0x12f0] sm:$0xff]
    %v968 = vld [vmem:[#allocation5 + $0x12f8] sm:$0xff]
    %v969 = vld [vmem:[#allocation5 + $0x1300] sm:$0xff]
    %v970 = vld [vmem:[#allocation5 + $0x1308] sm:$0xff]
    %v971 = vld [vmem:[#allocation5 + $0x1310] sm:$0xff]
    %v972 = vld [vmem:[#allocation5 + $0x1318] sm:$0xff]
    %v973 = vld [vmem:[#allocation5 + $0x1320] sm:$0xff]
    %v974 = vld [vmem:[#allocation5 + $0x1328] sm:$0xff]
    %v975 = vld [vmem:[#allocation5 + $0x1330] sm:$0xff]
    %v976 = vld [vmem:[#allocation5 + $0x1338] sm:$0xff]
    %v977 = vld [vmem:[#allocation5 + $0x1340] sm:$0xff]
    %v978 = vld [vmem:[#allocation5 + $0x1348] sm:$0xff]
    %v979 = vld [vmem:[#allocation5 + $0x1350] sm:$0xff]
    %v980 = vld [vmem:[#allocation5 + $0x1358] sm:$0xff]
    %v981 = vld [vmem:[#allocation5 + $0x1360] sm:$0xff]
    %v982 = vld [vmem:[#allocation5 + $0x1368] sm:$0xff]
    %v983 = vld [vmem:[#allocation5 + $0x1370] sm:$0xff]
    %v984 = vld [vmem:[#allocation5 + $0x1378] sm:$0xff]
    %v985 = vld [vmem:[#allocation5 + $0x1380] sm:$0xff]
    %v986 = vld [vmem:[#allocation5 + $0x1388] sm:$0xff]
    %v987 = vld [vmem:[#allocation5 + $0x1390] sm:$0xff]
    %v988 = vld [vmem:[#allocation5 + $0x1398] sm:$0xff]
    %v989 = vld [vmem:[#allocation5 + $0x13a0] sm:$0xff]
    %v990 = vld [vmem:[#allocation5 + $0x13a8] sm:$0xff]
    %v991 = vld [vmem:[#allocation5 + $0x13b0] sm:$0xff]
    %v992 = vld [vmem:[#allocation5 + $0x13b8] sm:$0xff]
    %v993 = vld [vmem:[#allocation5 + $0x13c0] sm:$0xff]
    %v994 = vld [vmem:[#allocation5 + $0x13c8] sm:$0xff]
    %v995 = vld [vmem:[#allocation5 + $0x13d0] sm:$0xff]
    %v996 = vld [vmem:[#allocation5 + $0x13d8] sm:$0xff]
    %v997 = vld [vmem:[#allocation5 + $0x13e0] sm:$0xff]
    %v998 = vld [vmem:[#allocation5 + $0x13e8] sm:$0xff]
    %v999 = vld [vmem:[#allocation5 + $0x13f0] sm:$0xff]
    %v1000 = vld [vmem:[#allocation5 + $0x13f8] sm:$0xff]
    %v1001 = vld [vmem:[#allocation7] sm:$0x3]
    %v1003 = vlaneseq
    %v1004 = vshrl.u32 %v1003, 7
    %v1005 = vsub.s32 0, %v1004
    %v1006 = vrot.slane %v1001, %v1005
    %v1007 = vlaneseq
    %v1008 = vshrl.u32 %v1007, 7
    %v1009 = vsub.s32 1, %v1008
    %v1010 = vrot.slane %v1001, %v1009
    %v1653 = vunpack.c.l.b16 %v361
    %v1654 = vunpack.c.h.b16 %v361
    %v1655 = vunpack.c.l.b16 %v362
    %v1656 = vunpack.c.h.b16 %v362
    %v1657 = vunpack.c.l.b16 %v363
    %v1658 = vunpack.c.h.b16 %v363
    %v1659 = vunpack.c.l.b16 %v364
    %v1660 = vunpack.c.h.b16 %v364
    %v1661 = vunpack.c.l.b16 %v365
    %v1662 = vunpack.c.h.b16 %v365
    %v1663 = vunpack.c.l.b16 %v366
    %v1664 = vunpack.c.h.b16 %v366
    %v1665 = vunpack.c.l.b16 %v367
    %v1666 = vunpack.c.h.b16 %v367
    %v1667 = vunpack.c.l.b16 %v368
    %v1668 = vunpack.c.h.b16 %v368
    %v1669 = vunpack.c.l.b16 %v369
    %v1670 = vunpack.c.h.b16 %v369
    %v1671 = vunpack.c.l.b16 %v370
    %v1672 = vunpack.c.h.b16 %v370
    %v1673 = vunpack.c.l.b16 %v371
    %v1674 = vunpack.c.h.b16 %v371
    %v1675 = vunpack.c.l.b16 %v372
    %v1676 = vunpack.c.h.b16 %v372
    %v1677 = vunpack.c.l.b16 %v373
    %v1678 = vunpack.c.h.b16 %v373
    %v1679 = vunpack.c.l.b16 %v374
    %v1680 = vunpack.c.h.b16 %v374
    %v1681 = vunpack.c.l.b16 %v375
    %v1682 = vunpack.c.h.b16 %v375
    %v1683 = vunpack.c.l.b16 %v376
    %v1684 = vunpack.c.h.b16 %v376
    %v1685 = vunpack.c.l.b16 %v377
    %v1686 = vunpack.c.h.b16 %v377
    %v1687 = vunpack.c.l.b16 %v378
    %v1688 = vunpack.c.h.b16 %v378
    %v1689 = vunpack.c.l.b16 %v379
    %v1690 = vunpack.c.h.b16 %v379
    %v1691 = vunpack.c.l.b16 %v380
    %v1692 = vunpack.c.h.b16 %v380
    %v1693 = vunpack.c.l.b16 %v381
    %v1694 = vunpack.c.h.b16 %v381
    %v1695 = vunpack.c.l.b16 %v382
    %v1696 = vunpack.c.h.b16 %v382
    %v1697 = vunpack.c.l.b16 %v383
    %v1698 = vunpack.c.h.b16 %v383
    %v1699 = vunpack.c.l.b16 %v384
    %v1700 = vunpack.c.h.b16 %v384
    %v1701 = vunpack.c.l.b16 %v385
    %v1702 = vunpack.c.h.b16 %v385
    %v1703 = vunpack.c.l.b16 %v386
    %v1704 = vunpack.c.h.b16 %v386
    %v1705 = vunpack.c.l.b16 %v387
    %v1706 = vunpack.c.h.b16 %v387
    %v1707 = vunpack.c.l.b16 %v388
    %v1708 = vunpack.c.h.b16 %v388
    %v1709 = vunpack.c.l.b16 %v389
    %v1710 = vunpack.c.h.b16 %v389
    %v1711 = vunpack.c.l.b16 %v390
    %v1712 = vunpack.c.h.b16 %v390
    %v1713 = vunpack.c.l.b16 %v391
    %v1714 = vunpack.c.h.b16 %v391
    %v1715 = vunpack.c.l.b16 %v392
    %v1716 = vunpack.c.h.b16 %v392
    %v1717 = vunpack.c.l.b16 %v393
    %v1718 = vunpack.c.h.b16 %v393
    %v1719 = vunpack.c.l.b16 %v394
    %v1720 = vunpack.c.h.b16 %v394
    %v1721 = vunpack.c.l.b16 %v395
    %v1722 = vunpack.c.h.b16 %v395
    %v1723 = vunpack.c.l.b16 %v396
    %v1724 = vunpack.c.h.b16 %v396
    %v1725 = vunpack.c.l.b16 %v397
    %v1726 = vunpack.c.h.b16 %v397
    %v1727 = vunpack.c.l.b16 %v398
    %v1728 = vunpack.c.h.b16 %v398
    %v1729 = vunpack.c.l.b16 %v399
    %v1730 = vunpack.c.h.b16 %v399
    %v1731 = vunpack.c.l.b16 %v400
    %v1732 = vunpack.c.h.b16 %v400
    %v1733 = vunpack.c.l.b16 %v401
    %v1734 = vunpack.c.h.b16 %v401
    %v1735 = vunpack.c.l.b16 %v402
    %v1736 = vunpack.c.h.b16 %v402
    %v1737 = vunpack.c.l.b16 %v403
    %v1738 = vunpack.c.h.b16 %v403
    %v1739 = vunpack.c.l.b16 %v404
    %v1740 = vunpack.c.h.b16 %v404
    %v1741 = vunpack.c.l.b16 %v405
    %v1742 = vunpack.c.h.b16 %v405
    %v1743 = vunpack.c.l.b16 %v406
    %v1744 = vunpack.c.h.b16 %v406
    %v1745 = vunpack.c.l.b16 %v407
    %v1746 = vunpack.c.h.b16 %v407
    %v1747 = vunpack.c.l.b16 %v408
    %v1748 = vunpack.c.h.b16 %v408
    %v1749 = vunpack.c.l.b16 %v409
    %v1750 = vunpack.c.h.b16 %v409
    %v1751 = vunpack.c.l.b16 %v410
    %v1752 = vunpack.c.h.b16 %v410
    %v1753 = vunpack.c.l.b16 %v411
    %v1754 = vunpack.c.h.b16 %v411
    %v1755 = vunpack.c.l.b16 %v412
    %v1756 = vunpack.c.h.b16 %v412
    %v1757 = vunpack.c.l.b16 %v413
    %v1758 = vunpack.c.h.b16 %v413
    %v1759 = vunpack.c.l.b16 %v414
    %v1760 = vunpack.c.h.b16 %v414
    %v1761 = vunpack.c.l.b16 %v415
    %v1762 = vunpack.c.h.b16 %v415
    %v1763 = vunpack.c.l.b16 %v416
    %v1764 = vunpack.c.h.b16 %v416
    %v1765 = vunpack.c.l.b16 %v417
    %v1766 = vunpack.c.h.b16 %v417
    %v1767 = vunpack.c.l.b16 %v418
    %v1768 = vunpack.c.h.b16 %v418
    %v1769 = vunpack.c.l.b16 %v419
    %v1770 = vunpack.c.h.b16 %v419
    %v1771 = vunpack.c.l.b16 %v420
    %v1772 = vunpack.c.h.b16 %v420
    %v1773 = vunpack.c.l.b16 %v421
    %v1774 = vunpack.c.h.b16 %v421
    %v1775 = vunpack.c.l.b16 %v422
    %v1776 = vunpack.c.h.b16 %v422
    %v1777 = vunpack.c.l.b16 %v423
    %v1778 = vunpack.c.h.b16 %v423
    %v1779 = vunpack.c.l.b16 %v424
    %v1780 = vunpack.c.h.b16 %v424
    %v1781 = vunpack.c.l.b16 %v425
    %v1782 = vunpack.c.h.b16 %v425
    %v1783 = vunpack.c.l.b16 %v426
    %v1784 = vunpack.c.h.b16 %v426
    %v1785 = vunpack.c.l.b16 %v427
    %v1786 = vunpack.c.h.b16 %v427
    %v1787 = vunpack.c.l.b16 %v428
    %v1788 = vunpack.c.h.b16 %v428
    %v1789 = vunpack.c.l.b16 %v429
    %v1790 = vunpack.c.h.b16 %v429
    %v1791 = vunpack.c.l.b16 %v430
    %v1792 = vunpack.c.h.b16 %v430
    %v1793 = vunpack.c.l.b16 %v431
    %v1794 = vunpack.c.h.b16 %v431
    %v1795 = vunpack.c.l.b16 %v432
    %v1796 = vunpack.c.h.b16 %v432
    %v1797 = vunpack.c.l.b16 %v433
    %v1798 = vunpack.c.h.b16 %v433
    %v1799 = vunpack.c.l.b16 %v434
    %v1800 = vunpack.c.h.b16 %v434
    %v1801 = vunpack.c.l.b16 %v435
    %v1802 = vunpack.c.h.b16 %v435
    %v1803 = vunpack.c.l.b16 %v436
    %v1804 = vunpack.c.h.b16 %v436
    %v1805 = vunpack.c.l.b16 %v437
    %v1806 = vunpack.c.h.b16 %v437
    %v1807 = vunpack.c.l.b16 %v438
    %v1808 = vunpack.c.h.b16 %v438
    %v1809 = vunpack.c.l.b16 %v439
    %v1810 = vunpack.c.h.b16 %v439
    %v1811 = vunpack.c.l.b16 %v440
    %v1812 = vunpack.c.h.b16 %v440
    %v1813 = vunpack.c.l.b16 %v441
    %v1814 = vunpack.c.h.b16 %v441
    %v1815 = vunpack.c.l.b16 %v442
    %v1816 = vunpack.c.h.b16 %v442
    %v1817 = vunpack.c.l.b16 %v443
    %v1818 = vunpack.c.h.b16 %v443
    %v1819 = vunpack.c.l.b16 %v444
    %v1820 = vunpack.c.h.b16 %v444
    %v1821 = vunpack.c.l.b16 %v445
    %v1822 = vunpack.c.h.b16 %v445
    %v1823 = vunpack.c.l.b16 %v446
    %v1824 = vunpack.c.h.b16 %v446
    %v1825 = vunpack.c.l.b16 %v447
    %v1826 = vunpack.c.h.b16 %v447
    %v1827 = vunpack.c.l.b16 %v448
    %v1828 = vunpack.c.h.b16 %v448
    %v1829 = vunpack.c.l.b16 %v449
    %v1830 = vunpack.c.h.b16 %v449
    %v1831 = vunpack.c.l.b16 %v450
    %v1832 = vunpack.c.h.b16 %v450
    %v1833 = vunpack.c.l.b16 %v451
    %v1834 = vunpack.c.h.b16 %v451
    %v1835 = vunpack.c.l.b16 %v452
    %v1836 = vunpack.c.h.b16 %v452
    %v1837 = vunpack.c.l.b16 %v453
    %v1838 = vunpack.c.h.b16 %v453
    %v1839 = vunpack.c.l.b16 %v454
    %v1840 = vunpack.c.h.b16 %v454
    %v1841 = vunpack.c.l.b16 %v455
    %v1842 = vunpack.c.h.b16 %v455
    %v1843 = vunpack.c.l.b16 %v456
    %v1844 = vunpack.c.h.b16 %v456
    %v1845 = vunpack.c.l.b16 %v457
    %v1846 = vunpack.c.h.b16 %v457
    %v1847 = vunpack.c.l.b16 %v458
    %v1848 = vunpack.c.h.b16 %v458
    %v1849 = vunpack.c.l.b16 %v459
    %v1850 = vunpack.c.h.b16 %v459
    %v1851 = vunpack.c.l.b16 %v460
    %v1852 = vunpack.c.h.b16 %v460
    %v1853 = vunpack.c.l.b16 %v461
    %v1854 = vunpack.c.h.b16 %v461
    %v1855 = vunpack.c.l.b16 %v462
    %v1856 = vunpack.c.h.b16 %v462
    %v1857 = vunpack.c.l.b16 %v463
    %v1858 = vunpack.c.h.b16 %v463
    %v1859 = vunpack.c.l.b16 %v464
    %v1860 = vunpack.c.h.b16 %v464
    %v1861 = vunpack.c.l.b16 %v465
    %v1862 = vunpack.c.h.b16 %v465
    %v1863 = vunpack.c.l.b16 %v466
    %v1864 = vunpack.c.h.b16 %v466
    %v1865 = vunpack.c.l.b16 %v467
    %v1866 = vunpack.c.h.b16 %v467
    %v1867 = vunpack.c.l.b16 %v468
    %v1868 = vunpack.c.h.b16 %v468
    %v1869 = vunpack.c.l.b16 %v469
    %v1870 = vunpack.c.h.b16 %v469
    %v1871 = vunpack.c.l.b16 %v470
    %v1872 = vunpack.c.h.b16 %v470
    %v1873 = vunpack.c.l.b16 %v471
    %v1874 = vunpack.c.h.b16 %v471
    %v1875 = vunpack.c.l.b16 %v472
    %v1876 = vunpack.c.h.b16 %v472
    %v1877 = vunpack.c.l.b16 %v473
    %v1878 = vunpack.c.h.b16 %v473
    %v1879 = vunpack.c.l.b16 %v474
    %v1880 = vunpack.c.h.b16 %v474
    %v1881 = vunpack.c.l.b16 %v475
    %v1882 = vunpack.c.h.b16 %v475
    %v1883 = vunpack.c.l.b16 %v476
    %v1884 = vunpack.c.h.b16 %v476
    %v1885 = vunpack.c.l.b16 %v477
    %v1886 = vunpack.c.h.b16 %v477
    %v1887 = vunpack.c.l.b16 %v478
    %v1888 = vunpack.c.h.b16 %v478
    %v1889 = vunpack.c.l.b16 %v479
    %v1890 = vunpack.c.h.b16 %v479
    %v1891 = vunpack.c.l.b16 %v480
    %v1892 = vunpack.c.h.b16 %v480
    %v1893 = vunpack.c.l.b16 %v481
    %v1894 = vunpack.c.h.b16 %v481
    %v1895 = vunpack.c.l.b16 %v482
    %v1896 = vunpack.c.h.b16 %v482
    %v1897 = vunpack.c.l.b16 %v483
    %v1898 = vunpack.c.h.b16 %v483
    %v1899 = vunpack.c.l.b16 %v484
    %v1900 = vunpack.c.h.b16 %v484
    %v1901 = vunpack.c.l.b16 %v485
    %v1902 = vunpack.c.h.b16 %v485
    %v1903 = vunpack.c.l.b16 %v486
    %v1904 = vunpack.c.h.b16 %v486
    %v1905 = vunpack.c.l.b16 %v487
    %v1906 = vunpack.c.h.b16 %v487
    %v1907 = vunpack.c.l.b16 %v488
    %v1908 = vunpack.c.h.b16 %v488
    %v1909 = vunpack.c.l.b16 %v489
    %v1910 = vunpack.c.h.b16 %v489
    %v1911 = vunpack.c.l.b16 %v490
    %v1912 = vunpack.c.h.b16 %v490
    %v1913 = vunpack.c.l.b16 %v491
    %v1914 = vunpack.c.h.b16 %v491
    %v1915 = vunpack.c.l.b16 %v492
    %v1916 = vunpack.c.h.b16 %v492
    %v1917 = vunpack.c.l.b16 %v493
    %v1918 = vunpack.c.h.b16 %v493
    %v1919 = vunpack.c.l.b16 %v494
    %v1920 = vunpack.c.h.b16 %v494
    %v1921 = vunpack.c.l.b16 %v495
    %v1922 = vunpack.c.h.b16 %v495
    %v1923 = vunpack.c.l.b16 %v496
    %v1924 = vunpack.c.h.b16 %v496
    %v1925 = vunpack.c.l.b16 %v497
    %v1926 = vunpack.c.h.b16 %v497
    %v1927 = vunpack.c.l.b16 %v498
    %v1928 = vunpack.c.h.b16 %v498
    %v1929 = vunpack.c.l.b16 %v499
    %v1930 = vunpack.c.h.b16 %v499
    %v1931 = vunpack.c.l.b16 %v500
    %v1932 = vunpack.c.h.b16 %v500
    %v1933 = vunpack.c.l.b16 %v501
    %v1934 = vunpack.c.h.b16 %v501
    %v1935 = vunpack.c.l.b16 %v502
    %v1936 = vunpack.c.h.b16 %v502
    %v1937 = vunpack.c.l.b16 %v503
    %v1938 = vunpack.c.h.b16 %v503
    %v1939 = vunpack.c.l.b16 %v504
    %v1940 = vunpack.c.h.b16 %v504
    %v1941 = vunpack.c.l.b16 %v505
    %v1942 = vunpack.c.h.b16 %v505
    %v1943 = vunpack.c.l.b16 %v506
    %v1944 = vunpack.c.h.b16 %v506
    %v1945 = vunpack.c.l.b16 %v507
    %v1946 = vunpack.c.h.b16 %v507
    %v1947 = vunpack.c.l.b16 %v508
    %v1948 = vunpack.c.h.b16 %v508
    %v1949 = vunpack.c.l.b16 %v509
    %v1950 = vunpack.c.h.b16 %v509
    %v1951 = vunpack.c.l.b16 %v510
    %v1952 = vunpack.c.h.b16 %v510
    %v1953 = vunpack.c.l.b16 %v511
    %v1954 = vunpack.c.h.b16 %v511
    %v1955 = vunpack.c.l.b16 %v512
    %v1956 = vunpack.c.h.b16 %v512
    %v1957 = vunpack.c.l.b16 %v513
    %v1958 = vunpack.c.h.b16 %v513
    %v1959 = vunpack.c.l.b16 %v514
    %v1960 = vunpack.c.h.b16 %v514
    %v1961 = vunpack.c.l.b16 %v515
    %v1962 = vunpack.c.h.b16 %v515
    %v1963 = vunpack.c.l.b16 %v516
    %v1964 = vunpack.c.h.b16 %v516
    %v1965 = vunpack.c.l.b16 %v517
    %v1966 = vunpack.c.h.b16 %v517
    %v1967 = vunpack.c.l.b16 %v518
    %v1968 = vunpack.c.h.b16 %v518
    %v1969 = vunpack.c.l.b16 %v519
    %v1970 = vunpack.c.h.b16 %v519
    %v1971 = vunpack.c.l.b16 %v520
    %v1972 = vunpack.c.h.b16 %v520
    %v1973 = vunpack.c.l.b16 %v521
    %v1974 = vunpack.c.h.b16 %v521
    %v1975 = vunpack.c.l.b16 %v522
    %v1976 = vunpack.c.h.b16 %v522
    %v1977 = vunpack.c.l.b16 %v523
    %v1978 = vunpack.c.h.b16 %v523
    %v1979 = vunpack.c.l.b16 %v524
    %v1980 = vunpack.c.h.b16 %v524
    %v1981 = vunpack.c.l.b16 %v525
    %v1982 = vunpack.c.h.b16 %v525
    %v1983 = vunpack.c.l.b16 %v526
    %v1984 = vunpack.c.h.b16 %v526
    %v1985 = vunpack.c.l.b16 %v527
    %v1986 = vunpack.c.h.b16 %v527
    %v1987 = vunpack.c.l.b16 %v528
    %v1988 = vunpack.c.h.b16 %v528
    %v1989 = vunpack.c.l.b16 %v529
    %v1990 = vunpack.c.h.b16 %v529
    %v1991 = vunpack.c.l.b16 %v530
    %v1992 = vunpack.c.h.b16 %v530
    %v1993 = vunpack.c.l.b16 %v531
    %v1994 = vunpack.c.h.b16 %v531
    %v1995 = vunpack.c.l.b16 %v532
    %v1996 = vunpack.c.h.b16 %v532
    %v1997 = vunpack.c.l.b16 %v533
    %v1998 = vunpack.c.h.b16 %v533
    %v1999 = vunpack.c.l.b16 %v534
    %v2000 = vunpack.c.h.b16 %v534
    %v2001 = vunpack.c.l.b16 %v535
    %v2002 = vunpack.c.h.b16 %v535
    %v2003 = vunpack.c.l.b16 %v536
    %v2004 = vunpack.c.h.b16 %v536
    %v2005 = vunpack.c.l.b16 %v537
    %v2006 = vunpack.c.h.b16 %v537
    %v2007 = vunpack.c.l.b16 %v538
    %v2008 = vunpack.c.h.b16 %v538
    %v2009 = vunpack.c.l.b16 %v539
    %v2010 = vunpack.c.h.b16 %v539
    %v2011 = vunpack.c.l.b16 %v540
    %v2012 = vunpack.c.h.b16 %v540
    %v2013 = vunpack.c.l.b16 %v541
    %v2014 = vunpack.c.h.b16 %v541
    %v2015 = vunpack.c.l.b16 %v542
    %v2016 = vunpack.c.h.b16 %v542
    %v2017 = vunpack.c.l.b16 %v543
    %v2018 = vunpack.c.h.b16 %v543
    %v2019 = vunpack.c.l.b16 %v544
    %v2020 = vunpack.c.h.b16 %v544
    %v2021 = vunpack.c.l.b16 %v545
    %v2022 = vunpack.c.h.b16 %v545
    %v2023 = vunpack.c.l.b16 %v546
    %v2024 = vunpack.c.h.b16 %v546
    %v2025 = vunpack.c.l.b16 %v547
    %v2026 = vunpack.c.h.b16 %v547
    %v2027 = vunpack.c.l.b16 %v548
    %v2028 = vunpack.c.h.b16 %v548
    %v2029 = vunpack.c.l.b16 %v549
    %v2030 = vunpack.c.h.b16 %v549
    %v2031 = vunpack.c.l.b16 %v550
    %v2032 = vunpack.c.h.b16 %v550
    %v2033 = vunpack.c.l.b16 %v551
    %v2034 = vunpack.c.h.b16 %v551
    %v2035 = vunpack.c.l.b16 %v552
    %v2036 = vunpack.c.h.b16 %v552
    %v2037 = vunpack.c.l.b16 %v553
    %v2038 = vunpack.c.h.b16 %v553
    %v2039 = vunpack.c.l.b16 %v554
    %v2040 = vunpack.c.h.b16 %v554
    %v2041 = vunpack.c.l.b16 %v555
    %v2042 = vunpack.c.h.b16 %v555
    %v2043 = vunpack.c.l.b16 %v556
    %v2044 = vunpack.c.h.b16 %v556
    %v2045 = vunpack.c.l.b16 %v557
    %v2046 = vunpack.c.h.b16 %v557
    %v2047 = vunpack.c.l.b16 %v558
    %v2048 = vunpack.c.h.b16 %v558
    %v2049 = vunpack.c.l.b16 %v559
    %v2050 = vunpack.c.h.b16 %v559
    %v2051 = vunpack.c.l.b16 %v560
    %v2052 = vunpack.c.h.b16 %v560
    %v2053 = vunpack.c.l.b16 %v561
    %v2054 = vunpack.c.h.b16 %v561
    %v2055 = vunpack.c.l.b16 %v562
    %v2056 = vunpack.c.h.b16 %v562
    %v2057 = vunpack.c.l.b16 %v563
    %v2058 = vunpack.c.h.b16 %v563
    %v2059 = vunpack.c.l.b16 %v564
    %v2060 = vunpack.c.h.b16 %v564
    %v2061 = vunpack.c.l.b16 %v565
    %v2062 = vunpack.c.h.b16 %v565
    %v2063 = vunpack.c.l.b16 %v566
    %v2064 = vunpack.c.h.b16 %v566
    %v2065 = vunpack.c.l.b16 %v567
    %v2066 = vunpack.c.h.b16 %v567
    %v2067 = vunpack.c.l.b16 %v568
    %v2068 = vunpack.c.h.b16 %v568
    %v2069 = vunpack.c.l.b16 %v569
    %v2070 = vunpack.c.h.b16 %v569
    %v2071 = vunpack.c.l.b16 %v570
    %v2072 = vunpack.c.h.b16 %v570
    %v2073 = vunpack.c.l.b16 %v571
    %v2074 = vunpack.c.h.b16 %v571
    %v2075 = vunpack.c.l.b16 %v572
    %v2076 = vunpack.c.h.b16 %v572
    %v2077 = vunpack.c.l.b16 %v573
    %v2078 = vunpack.c.h.b16 %v573
    %v2079 = vunpack.c.l.b16 %v574
    %v2080 = vunpack.c.h.b16 %v574
    %v2081 = vunpack.c.l.b16 %v575
    %v2082 = vunpack.c.h.b16 %v575
    %v2083 = vunpack.c.l.b16 %v576
    %v2084 = vunpack.c.h.b16 %v576
    %v2085 = vunpack.c.l.b16 %v577
    %v2086 = vunpack.c.h.b16 %v577
    %v2087 = vunpack.c.l.b16 %v578
    %v2088 = vunpack.c.h.b16 %v578
    %v2089 = vunpack.c.l.b16 %v579
    %v2090 = vunpack.c.h.b16 %v579
    %v2091 = vunpack.c.l.b16 %v580
    %v2092 = vunpack.c.h.b16 %v580
    %v2093 = vunpack.c.l.b16 %v581
    %v2094 = vunpack.c.h.b16 %v581
    %v2095 = vunpack.c.l.b16 %v582
    %v2096 = vunpack.c.h.b16 %v582
    %v2097 = vunpack.c.l.b16 %v583
    %v2098 = vunpack.c.h.b16 %v583
    %v2099 = vunpack.c.l.b16 %v584
    %v2100 = vunpack.c.h.b16 %v584
    %v2101 = vunpack.c.l.b16 %v585
    %v2102 = vunpack.c.h.b16 %v585
    %v2103 = vunpack.c.l.b16 %v586
    %v2104 = vunpack.c.h.b16 %v586
    %v2105 = vunpack.c.l.b16 %v587
    %v2106 = vunpack.c.h.b16 %v587
    %v2107 = vunpack.c.l.b16 %v588
    %v2108 = vunpack.c.h.b16 %v588
    %v2109 = vunpack.c.l.b16 %v589
    %v2110 = vunpack.c.h.b16 %v589
    %v2111 = vunpack.c.l.b16 %v590
    %v2112 = vunpack.c.h.b16 %v590
    %v2113 = vunpack.c.l.b16 %v591
    %v2114 = vunpack.c.h.b16 %v591
    %v2115 = vunpack.c.l.b16 %v592
    %v2116 = vunpack.c.h.b16 %v592
    %v2117 = vunpack.c.l.b16 %v593
    %v2118 = vunpack.c.h.b16 %v593
    %v2119 = vunpack.c.l.b16 %v594
    %v2120 = vunpack.c.h.b16 %v594
    %v2121 = vunpack.c.l.b16 %v595
    %v2122 = vunpack.c.h.b16 %v595
    %v2123 = vunpack.c.l.b16 %v596
    %v2124 = vunpack.c.h.b16 %v596
    %v2125 = vunpack.c.l.b16 %v597
    %v2126 = vunpack.c.h.b16 %v597
    %v2127 = vunpack.c.l.b16 %v598
    %v2128 = vunpack.c.h.b16 %v598
    %v2129 = vunpack.c.l.b16 %v599
    %v2130 = vunpack.c.h.b16 %v599
    %v2131 = vunpack.c.l.b16 %v600
    %v2132 = vunpack.c.h.b16 %v600
    %v2133 = vunpack.c.l.b16 %v601
    %v2134 = vunpack.c.h.b16 %v601
    %v2135 = vunpack.c.l.b16 %v602
    %v2136 = vunpack.c.h.b16 %v602
    %v2137 = vunpack.c.l.b16 %v603
    %v2138 = vunpack.c.h.b16 %v603
    %v2139 = vunpack.c.l.b16 %v604
    %v2140 = vunpack.c.h.b16 %v604
    %v2141 = vunpack.c.l.b16 %v605
    %v2142 = vunpack.c.h.b16 %v605
    %v2143 = vunpack.c.l.b16 %v606
    %v2144 = vunpack.c.h.b16 %v606
    %v2145 = vunpack.c.l.b16 %v607
    %v2146 = vunpack.c.h.b16 %v607
    %v2147 = vunpack.c.l.b16 %v608
    %v2148 = vunpack.c.h.b16 %v608
    %v2149 = vunpack.c.l.b16 %v609
    %v2150 = vunpack.c.h.b16 %v609
    %v2151 = vunpack.c.l.b16 %v610
    %v2152 = vunpack.c.h.b16 %v610
    %v2153 = vunpack.c.l.b16 %v611
    %v2154 = vunpack.c.h.b16 %v611
    %v2155 = vunpack.c.l.b16 %v612
    %v2156 = vunpack.c.h.b16 %v612
    %v2157 = vunpack.c.l.b16 %v613
    %v2158 = vunpack.c.h.b16 %v613
    %v2159 = vunpack.c.l.b16 %v614
    %v2160 = vunpack.c.h.b16 %v614
    %v2161 = vunpack.c.l.b16 %v615
    %v2162 = vunpack.c.h.b16 %v615
    %v2163 = vunpack.c.l.b16 %v616
    %v2164 = vunpack.c.h.b16 %v616
    %v2165 = vunpack.c.l.b16 %v617
    %v2166 = vunpack.c.h.b16 %v617
    %v2167 = vunpack.c.l.b16 %v618
    %v2168 = vunpack.c.h.b16 %v618
    %v2169 = vunpack.c.l.b16 %v619
    %v2170 = vunpack.c.h.b16 %v619
    %v2171 = vunpack.c.l.b16 %v620
    %v2172 = vunpack.c.h.b16 %v620
    %v2173 = vunpack.c.l.b16 %v621
    %v2174 = vunpack.c.h.b16 %v621
    %v2175 = vunpack.c.l.b16 %v622
    %v2176 = vunpack.c.h.b16 %v622
    %v2177 = vunpack.c.l.b16 %v623
    %v2178 = vunpack.c.h.b16 %v623
    %v2179 = vunpack.c.l.b16 %v624
    %v2180 = vunpack.c.h.b16 %v624
    %v2181 = vunpack.c.l.b16 %v625
    %v2182 = vunpack.c.h.b16 %v625
    %v2183 = vunpack.c.l.b16 %v626
    %v2184 = vunpack.c.h.b16 %v626
    %v2185 = vunpack.c.l.b16 %v627
    %v2186 = vunpack.c.h.b16 %v627
    %v2187 = vunpack.c.l.b16 %v628
    %v2188 = vunpack.c.h.b16 %v628
    %v2189 = vunpack.c.l.b16 %v629
    %v2190 = vunpack.c.h.b16 %v629
    %v2191 = vunpack.c.l.b16 %v630
    %v2192 = vunpack.c.h.b16 %v630
    %v2193 = vunpack.c.l.b16 %v631
    %v2194 = vunpack.c.h.b16 %v631
    %v2195 = vunpack.c.l.b16 %v632
    %v2196 = vunpack.c.h.b16 %v632
    %v2197 = vunpack.c.l.b16 %v633
    %v2198 = vunpack.c.h.b16 %v633
    %v2199 = vunpack.c.l.b16 %v634
    %v2200 = vunpack.c.h.b16 %v634
    %v2201 = vunpack.c.l.b16 %v635
    %v2202 = vunpack.c.h.b16 %v635
    %v2203 = vunpack.c.l.b16 %v636
    %v2204 = vunpack.c.h.b16 %v636
    %v2205 = vunpack.c.l.b16 %v637
    %v2206 = vunpack.c.h.b16 %v637
    %v2207 = vunpack.c.l.b16 %v638
    %v2208 = vunpack.c.h.b16 %v638
    %v2209 = vunpack.c.l.b16 %v639
    %v2210 = vunpack.c.h.b16 %v639
    %v2211 = vunpack.c.l.b16 %v640
    %v2212 = vunpack.c.h.b16 %v640
    %v2213 = vunpack.c.l.b16 %v641
    %v2214 = vunpack.c.h.b16 %v641
    %v2215 = vunpack.c.l.b16 %v642
    %v2216 = vunpack.c.h.b16 %v642
    %v2217 = vunpack.c.l.b16 %v643
    %v2218 = vunpack.c.h.b16 %v643
    %v2219 = vunpack.c.l.b16 %v644
    %v2220 = vunpack.c.h.b16 %v644
    %v2221 = vunpack.c.l.b16 %v645
    %v2222 = vunpack.c.h.b16 %v645
    %v2223 = vunpack.c.l.b16 %v646
    %v2224 = vunpack.c.h.b16 %v646
    %v2225 = vunpack.c.l.b16 %v647
    %v2226 = vunpack.c.h.b16 %v647
    %v2227 = vunpack.c.l.b16 %v648
    %v2228 = vunpack.c.h.b16 %v648
    %v2229 = vunpack.c.l.b16 %v649
    %v2230 = vunpack.c.h.b16 %v649
    %v2231 = vunpack.c.l.b16 %v650
    %v2232 = vunpack.c.h.b16 %v650
    %v2233 = vunpack.c.l.b16 %v651
    %v2234 = vunpack.c.h.b16 %v651
    %v2235 = vunpack.c.l.b16 %v652
    %v2236 = vunpack.c.h.b16 %v652
    %v2237 = vunpack.c.l.b16 %v653
    %v2238 = vunpack.c.h.b16 %v653
    %v2239 = vunpack.c.l.b16 %v654
    %v2240 = vunpack.c.h.b16 %v654
    %v2241 = vunpack.c.l.b16 %v655
    %v2242 = vunpack.c.h.b16 %v655
    %v2243 = vunpack.c.l.b16 %v656
    %v2244 = vunpack.c.h.b16 %v656
    %v2245 = vunpack.c.l.b16 %v657
    %v2246 = vunpack.c.h.b16 %v657
    %v2247 = vunpack.c.l.b16 %v658
    %v2248 = vunpack.c.h.b16 %v658
    %v2249 = vunpack.c.l.b16 %v659
    %v2250 = vunpack.c.h.b16 %v659
    %v2251 = vunpack.c.l.b16 %v660
    %v2252 = vunpack.c.h.b16 %v660
    %v2253 = vunpack.c.l.b16 %v661
    %v2254 = vunpack.c.h.b16 %v661
    %v2255 = vunpack.c.l.b16 %v662
    %v2256 = vunpack.c.h.b16 %v662
    %v2257 = vunpack.c.l.b16 %v663
    %v2258 = vunpack.c.h.b16 %v663
    %v2259 = vunpack.c.l.b16 %v664
    %v2260 = vunpack.c.h.b16 %v664
    %v2261 = vunpack.c.l.b16 %v665
    %v2262 = vunpack.c.h.b16 %v665
    %v2263 = vunpack.c.l.b16 %v666
    %v2264 = vunpack.c.h.b16 %v666
    %v2265 = vunpack.c.l.b16 %v667
    %v2266 = vunpack.c.h.b16 %v667
    %v2267 = vunpack.c.l.b16 %v668
    %v2268 = vunpack.c.h.b16 %v668
    %v2269 = vunpack.c.l.b16 %v669
    %v2270 = vunpack.c.h.b16 %v669
    %v2271 = vunpack.c.l.b16 %v670
    %v2272 = vunpack.c.h.b16 %v670
    %v2273 = vunpack.c.l.b16 %v671
    %v2274 = vunpack.c.h.b16 %v671
    %v2275 = vunpack.c.l.b16 %v672
    %v2276 = vunpack.c.h.b16 %v672
    %v2277 = vunpack.c.l.b16 %v673
    %v2278 = vunpack.c.h.b16 %v673
    %v2279 = vunpack.c.l.b16 %v674
    %v2280 = vunpack.c.h.b16 %v674
    %v2281 = vunpack.c.l.b16 %v675
    %v2282 = vunpack.c.h.b16 %v675
    %v2283 = vunpack.c.l.b16 %v676
    %v2284 = vunpack.c.h.b16 %v676
    %v2285 = vunpack.c.l.b16 %v677
    %v2286 = vunpack.c.h.b16 %v677
    %v2287 = vunpack.c.l.b16 %v678
    %v2288 = vunpack.c.h.b16 %v678
    %v2289 = vunpack.c.l.b16 %v679
    %v2290 = vunpack.c.h.b16 %v679
    %v2291 = vunpack.c.l.b16 %v680
    %v2292 = vunpack.c.h.b16 %v680
    %v2293 = vunpack.c.l.b16 %v681
    %v2294 = vunpack.c.h.b16 %v681
    %v2295 = vunpack.c.l.b16 %v682
    %v2296 = vunpack.c.h.b16 %v682
    %v2297 = vunpack.c.l.b16 %v683
    %v2298 = vunpack.c.h.b16 %v683
    %v2299 = vunpack.c.l.b16 %v684
    %v2300 = vunpack.c.h.b16 %v684
    %v2301 = vunpack.c.l.b16 %v685
    %v2302 = vunpack.c.h.b16 %v685
    %v2303 = vunpack.c.l.b16 %v686
    %v2304 = vunpack.c.h.b16 %v686
    %v2305 = vunpack.c.l.b16 %v687
    %v2306 = vunpack.c.h.b16 %v687
    %v2307 = vunpack.c.l.b16 %v688
    %v2308 = vunpack.c.h.b16 %v688
    %v2309 = vunpack.c.l.b16 %v689
    %v2310 = vunpack.c.h.b16 %v689
    %v2311 = vunpack.c.l.b16 %v690
    %v2312 = vunpack.c.h.b16 %v690
    %v2313 = vunpack.c.l.b16 %v691
    %v2314 = vunpack.c.h.b16 %v691
    %v2315 = vunpack.c.l.b16 %v692
    %v2316 = vunpack.c.h.b16 %v692
    %v2317 = vunpack.c.l.b16 %v693
    %v2318 = vunpack.c.h.b16 %v693
    %v2319 = vunpack.c.l.b16 %v694
    %v2320 = vunpack.c.h.b16 %v694
    %v2321 = vunpack.c.l.b16 %v695
    %v2322 = vunpack.c.h.b16 %v695
    %v2323 = vunpack.c.l.b16 %v696
    %v2324 = vunpack.c.h.b16 %v696
    %v2325 = vunpack.c.l.b16 %v697
    %v2326 = vunpack.c.h.b16 %v697
    %v2327 = vunpack.c.l.b16 %v698
    %v2328 = vunpack.c.h.b16 %v698
    %v2329 = vunpack.c.l.b16 %v699
    %v2330 = vunpack.c.h.b16 %v699
    %v2331 = vunpack.c.l.b16 %v700
    %v2332 = vunpack.c.h.b16 %v700
    %v2333 = vunpack.c.l.b16 %v701
    %v2334 = vunpack.c.h.b16 %v701
    %v2335 = vunpack.c.l.b16 %v702
    %v2336 = vunpack.c.h.b16 %v702
    %v2337 = vunpack.c.l.b16 %v703
    %v2338 = vunpack.c.h.b16 %v703
    %v2339 = vunpack.c.l.b16 %v704
    %v2340 = vunpack.c.h.b16 %v704
    %v2341 = vunpack.c.l.b16 %v705
    %v2342 = vunpack.c.h.b16 %v705
    %v2343 = vunpack.c.l.b16 %v706
    %v2344 = vunpack.c.h.b16 %v706
    %v2345 = vunpack.c.l.b16 %v707
    %v2346 = vunpack.c.h.b16 %v707
    %v2347 = vunpack.c.l.b16 %v708
    %v2348 = vunpack.c.h.b16 %v708
    %v2349 = vunpack.c.l.b16 %v709
    %v2350 = vunpack.c.h.b16 %v709
    %v2351 = vunpack.c.l.b16 %v710
    %v2352 = vunpack.c.h.b16 %v710
    %v2353 = vunpack.c.l.b16 %v711
    %v2354 = vunpack.c.h.b16 %v711
    %v2355 = vunpack.c.l.b16 %v712
    %v2356 = vunpack.c.h.b16 %v712
    %v2357 = vunpack.c.l.b16 %v713
    %v2358 = vunpack.c.h.b16 %v713
    %v2359 = vunpack.c.l.b16 %v714
    %v2360 = vunpack.c.h.b16 %v714
    %v2361 = vunpack.c.l.b16 %v715
    %v2362 = vunpack.c.h.b16 %v715
    %v2363 = vunpack.c.l.b16 %v716
    %v2364 = vunpack.c.h.b16 %v716
    %v2365 = vunpack.c.l.b16 %v717
    %v2366 = vunpack.c.h.b16 %v717
    %v2367 = vunpack.c.l.b16 %v718
    %v2368 = vunpack.c.h.b16 %v718
    %v2369 = vunpack.c.l.b16 %v719
    %v2370 = vunpack.c.h.b16 %v719
    %v2371 = vunpack.c.l.b16 %v720
    %v2372 = vunpack.c.h.b16 %v720
    %v2373 = vunpack.c.l.b16 %v721
    %v2374 = vunpack.c.h.b16 %v721
    %v2375 = vunpack.c.l.b16 %v722
    %v2376 = vunpack.c.h.b16 %v722
    %v2377 = vunpack.c.l.b16 %v723
    %v2378 = vunpack.c.h.b16 %v723
    %v2379 = vunpack.c.l.b16 %v724
    %v2380 = vunpack.c.h.b16 %v724
    %v2381 = vunpack.c.l.b16 %v725
    %v2382 = vunpack.c.h.b16 %v725
    %v2383 = vunpack.c.l.b16 %v726
    %v2384 = vunpack.c.h.b16 %v726
    %v2385 = vunpack.c.l.b16 %v727
    %v2386 = vunpack.c.h.b16 %v727
    %v2387 = vunpack.c.l.b16 %v728
    %v2388 = vunpack.c.h.b16 %v728
    %v2389 = vunpack.c.l.b16 %v729
    %v2390 = vunpack.c.h.b16 %v729
    %v2391 = vunpack.c.l.b16 %v730
    %v2392 = vunpack.c.h.b16 %v730
    %v2393 = vunpack.c.l.b16 %v731
    %v2394 = vunpack.c.h.b16 %v731
    %v2395 = vunpack.c.l.b16 %v732
    %v2396 = vunpack.c.h.b16 %v732
    %v2397 = vunpack.c.l.b16 %v733
    %v2398 = vunpack.c.h.b16 %v733
    %v2399 = vunpack.c.l.b16 %v734
    %v2400 = vunpack.c.h.b16 %v734
    %v2401 = vunpack.c.l.b16 %v735
    %v2402 = vunpack.c.h.b16 %v735
    %v2403 = vunpack.c.l.b16 %v736
    %v2404 = vunpack.c.h.b16 %v736
    %v2405 = vunpack.c.l.b16 %v737
    %v2406 = vunpack.c.h.b16 %v737
    %v2407 = vunpack.c.l.b16 %v738
    %v2408 = vunpack.c.h.b16 %v738
    %v2409 = vunpack.c.l.b16 %v739
    %v2410 = vunpack.c.h.b16 %v739
    %v2411 = vunpack.c.l.b16 %v740
    %v2412 = vunpack.c.h.b16 %v740
    %v2413 = vunpack.c.l.b16 %v741
    %v2414 = vunpack.c.h.b16 %v741
    %v2415 = vunpack.c.l.b16 %v742
    %v2416 = vunpack.c.h.b16 %v742
    %v2417 = vunpack.c.l.b16 %v743
    %v2418 = vunpack.c.h.b16 %v743
    %v2419 = vunpack.c.l.b16 %v744
    %v2420 = vunpack.c.h.b16 %v744
    %v2421 = vunpack.c.l.b16 %v745
    %v2422 = vunpack.c.h.b16 %v745
    %v2423 = vunpack.c.l.b16 %v746
    %v2424 = vunpack.c.h.b16 %v746
    %v2425 = vunpack.c.l.b16 %v747
    %v2426 = vunpack.c.h.b16 %v747
    %v2427 = vunpack.c.l.b16 %v748
    %v2428 = vunpack.c.h.b16 %v748
    %v2429 = vunpack.c.l.b16 %v749
    %v2430 = vunpack.c.h.b16 %v749
    %v2431 = vunpack.c.l.b16 %v750
    %v2432 = vunpack.c.h.b16 %v750
    %v2433 = vunpack.c.l.b16 %v751
    %v2434 = vunpack.c.h.b16 %v751
    %v2435 = vunpack.c.l.b16 %v752
    %v2436 = vunpack.c.h.b16 %v752
    %v2437 = vunpack.c.l.b16 %v753
    %v2438 = vunpack.c.h.b16 %v753
    %v2439 = vunpack.c.l.b16 %v754
    %v2440 = vunpack.c.h.b16 %v754
    %v2441 = vunpack.c.l.b16 %v755
    %v2442 = vunpack.c.h.b16 %v755
    %v2443 = vunpack.c.l.b16 %v756
    %v2444 = vunpack.c.h.b16 %v756
    %v2445 = vunpack.c.l.b16 %v757
    %v2446 = vunpack.c.h.b16 %v757
    %v2447 = vunpack.c.l.b16 %v758
    %v2448 = vunpack.c.h.b16 %v758
    %v2449 = vunpack.c.l.b16 %v759
    %v2450 = vunpack.c.h.b16 %v759
    %v2451 = vunpack.c.l.b16 %v760
    %v2452 = vunpack.c.h.b16 %v760
    %v2453 = vunpack.c.l.b16 %v761
    %v2454 = vunpack.c.h.b16 %v761
    %v2455 = vunpack.c.l.b16 %v762
    %v2456 = vunpack.c.h.b16 %v762
    %v2457 = vunpack.c.l.b16 %v763
    %v2458 = vunpack.c.h.b16 %v763
    %v2459 = vunpack.c.l.b16 %v764
    %v2460 = vunpack.c.h.b16 %v764
    %v2461 = vunpack.c.l.b16 %v765
    %v2462 = vunpack.c.h.b16 %v765
    %v2463 = vunpack.c.l.b16 %v766
    %v2464 = vunpack.c.h.b16 %v766
    %v2465 = vunpack.c.l.b16 %v767
    %v2466 = vunpack.c.h.b16 %v767
    %v2467 = vunpack.c.l.b16 %v768
    %v2468 = vunpack.c.h.b16 %v768
    %v2469 = vunpack.c.l.b16 %v769
    %v2470 = vunpack.c.h.b16 %v769
    %v2471 = vunpack.c.l.b16 %v770
    %v2472 = vunpack.c.h.b16 %v770
    %v2473 = vunpack.c.l.b16 %v771
    %v2474 = vunpack.c.h.b16 %v771
    %v2475 = vunpack.c.l.b16 %v772
    %v2476 = vunpack.c.h.b16 %v772
    %v2477 = vunpack.c.l.b16 %v773
    %v2478 = vunpack.c.h.b16 %v773
    %v2479 = vunpack.c.l.b16 %v774
    %v2480 = vunpack.c.h.b16 %v774
    %v2481 = vunpack.c.l.b16 %v775
    %v2482 = vunpack.c.h.b16 %v775
    %v2483 = vunpack.c.l.b16 %v776
    %v2484 = vunpack.c.h.b16 %v776
    %v2485 = vunpack.c.l.b16 %v777
    %v2486 = vunpack.c.h.b16 %v777
    %v2487 = vunpack.c.l.b16 %v778
    %v2488 = vunpack.c.h.b16 %v778
    %v2489 = vunpack.c.l.b16 %v779
    %v2490 = vunpack.c.h.b16 %v779
    %v2491 = vunpack.c.l.b16 %v780
    %v2492 = vunpack.c.h.b16 %v780
    %v2493 = vunpack.c.l.b16 %v781
    %v2494 = vunpack.c.h.b16 %v781
    %v2495 = vunpack.c.l.b16 %v782
    %v2496 = vunpack.c.h.b16 %v782
    %v2497 = vunpack.c.l.b16 %v783
    %v2498 = vunpack.c.h.b16 %v783
    %v2499 = vunpack.c.l.b16 %v784
    %v2500 = vunpack.c.h.b16 %v784
    %v2501 = vunpack.c.l.b16 %v785
    %v2502 = vunpack.c.h.b16 %v785
    %v2503 = vunpack.c.l.b16 %v786
    %v2504 = vunpack.c.h.b16 %v786
    %v2505 = vunpack.c.l.b16 %v787
    %v2506 = vunpack.c.h.b16 %v787
    %v2507 = vunpack.c.l.b16 %v788
    %v2508 = vunpack.c.h.b16 %v788
    %v2509 = vunpack.c.l.b16 %v789
    %v2510 = vunpack.c.h.b16 %v789
    %v2511 = vunpack.c.l.b16 %v790
    %v2512 = vunpack.c.h.b16 %v790
    %v2513 = vunpack.c.l.b16 %v791
    %v2514 = vunpack.c.h.b16 %v791
    %v2515 = vunpack.c.l.b16 %v792
    %v2516 = vunpack.c.h.b16 %v792
    %v2517 = vunpack.c.l.b16 %v793
    %v2518 = vunpack.c.h.b16 %v793
    %v2519 = vunpack.c.l.b16 %v794
    %v2520 = vunpack.c.h.b16 %v794
    %v2521 = vunpack.c.l.b16 %v795
    %v2522 = vunpack.c.h.b16 %v795
    %v2523 = vunpack.c.l.b16 %v796
    %v2524 = vunpack.c.h.b16 %v796
    %v2525 = vunpack.c.l.b16 %v797
    %v2526 = vunpack.c.h.b16 %v797
    %v2527 = vunpack.c.l.b16 %v798
    %v2528 = vunpack.c.h.b16 %v798
    %v2529 = vunpack.c.l.b16 %v799
    %v2530 = vunpack.c.h.b16 %v799
    %v2531 = vunpack.c.l.b16 %v800
    %v2532 = vunpack.c.h.b16 %v800
    %v2533 = vunpack.c.l.b16 %v801
    %v2534 = vunpack.c.h.b16 %v801
    %v2535 = vunpack.c.l.b16 %v802
    %v2536 = vunpack.c.h.b16 %v802
    %v2537 = vunpack.c.l.b16 %v803
    %v2538 = vunpack.c.h.b16 %v803
    %v2539 = vunpack.c.l.b16 %v804
    %v2540 = vunpack.c.h.b16 %v804
    %v2541 = vunpack.c.l.b16 %v805
    %v2542 = vunpack.c.h.b16 %v805
    %v2543 = vunpack.c.l.b16 %v806
    %v2544 = vunpack.c.h.b16 %v806
    %v2545 = vunpack.c.l.b16 %v807
    %v2546 = vunpack.c.h.b16 %v807
    %v2547 = vunpack.c.l.b16 %v808
    %v2548 = vunpack.c.h.b16 %v808
    %v2549 = vunpack.c.l.b16 %v809
    %v2550 = vunpack.c.h.b16 %v809
    %v2551 = vunpack.c.l.b16 %v810
    %v2552 = vunpack.c.h.b16 %v810
    %v2553 = vunpack.c.l.b16 %v811
    %v2554 = vunpack.c.h.b16 %v811
    %v2555 = vunpack.c.l.b16 %v812
    %v2556 = vunpack.c.h.b16 %v812
    %v2557 = vunpack.c.l.b16 %v813
    %v2558 = vunpack.c.h.b16 %v813
    %v2559 = vunpack.c.l.b16 %v814
    %v2560 = vunpack.c.h.b16 %v814
    %v2561 = vunpack.c.l.b16 %v815
    %v2562 = vunpack.c.h.b16 %v815
    %v2563 = vunpack.c.l.b16 %v816
    %v2564 = vunpack.c.h.b16 %v816
    %v2565 = vunpack.c.l.b16 %v817
    %v2566 = vunpack.c.h.b16 %v817
    %v2567 = vunpack.c.l.b16 %v818
    %v2568 = vunpack.c.h.b16 %v818
    %v2569 = vunpack.c.l.b16 %v819
    %v2570 = vunpack.c.h.b16 %v819
    %v2571 = vunpack.c.l.b16 %v820
    %v2572 = vunpack.c.h.b16 %v820
    %v2573 = vunpack.c.l.b16 %v821
    %v2574 = vunpack.c.h.b16 %v821
    %v2575 = vunpack.c.l.b16 %v822
    %v2576 = vunpack.c.h.b16 %v822
    %v2577 = vunpack.c.l.b16 %v823
    %v2578 = vunpack.c.h.b16 %v823
    %v2579 = vunpack.c.l.b16 %v824
    %v2580 = vunpack.c.h.b16 %v824
    %v2581 = vunpack.c.l.b16 %v825
    %v2582 = vunpack.c.h.b16 %v825
    %v2583 = vunpack.c.l.b16 %v826
    %v2584 = vunpack.c.h.b16 %v826
    %v2585 = vunpack.c.l.b16 %v827
    %v2586 = vunpack.c.h.b16 %v827
    %v2587 = vunpack.c.l.b16 %v828
    %v2588 = vunpack.c.h.b16 %v828
    %v2589 = vunpack.c.l.b16 %v829
    %v2590 = vunpack.c.h.b16 %v829
    %v2591 = vunpack.c.l.b16 %v830
    %v2592 = vunpack.c.h.b16 %v830
    %v2593 = vunpack.c.l.b16 %v831
    %v2594 = vunpack.c.h.b16 %v831
    %v2595 = vunpack.c.l.b16 %v832
    %v2596 = vunpack.c.h.b16 %v832
    %v2597 = vunpack.c.l.b16 %v833
    %v2598 = vunpack.c.h.b16 %v833
    %v2599 = vunpack.c.l.b16 %v834
    %v2600 = vunpack.c.h.b16 %v834
    %v2601 = vunpack.c.l.b16 %v835
    %v2602 = vunpack.c.h.b16 %v835
    %v2603 = vunpack.c.l.b16 %v836
    %v2604 = vunpack.c.h.b16 %v836
    %v2605 = vunpack.c.l.b16 %v837
    %v2606 = vunpack.c.h.b16 %v837
    %v2607 = vunpack.c.l.b16 %v838
    %v2608 = vunpack.c.h.b16 %v838
    %v2609 = vunpack.c.l.b16 %v839
    %v2610 = vunpack.c.h.b16 %v839
    %v2611 = vunpack.c.l.b16 %v840
    %v2612 = vunpack.c.h.b16 %v840
    %v2613 = vunpack.c.l.b16 %v841
    %v2614 = vunpack.c.h.b16 %v841
    %v2615 = vunpack.c.l.b16 %v842
    %v2616 = vunpack.c.h.b16 %v842
    %v2617 = vunpack.c.l.b16 %v843
    %v2618 = vunpack.c.h.b16 %v843
    %v2619 = vunpack.c.l.b16 %v844
    %v2620 = vunpack.c.h.b16 %v844
    %v2621 = vunpack.c.l.b16 %v845
    %v2622 = vunpack.c.h.b16 %v845
    %v2623 = vunpack.c.l.b16 %v846
    %v2624 = vunpack.c.h.b16 %v846
    %v2625 = vunpack.c.l.b16 %v847
    %v2626 = vunpack.c.h.b16 %v847
    %v2627 = vunpack.c.l.b16 %v848
    %v2628 = vunpack.c.h.b16 %v848
    %v2629 = vunpack.c.l.b16 %v849
    %v2630 = vunpack.c.h.b16 %v849
    %v2631 = vunpack.c.l.b16 %v850
    %v2632 = vunpack.c.h.b16 %v850
    %v2633 = vunpack.c.l.b16 %v851
    %v2634 = vunpack.c.h.b16 %v851
    %v2635 = vunpack.c.l.b16 %v852
    %v2636 = vunpack.c.h.b16 %v852
    %v2637 = vunpack.c.l.b16 %v853
    %v2638 = vunpack.c.h.b16 %v853
    %v2639 = vunpack.c.l.b16 %v854
    %v2640 = vunpack.c.h.b16 %v854
    %v2641 = vunpack.c.l.b16 %v855
    %v2642 = vunpack.c.h.b16 %v855
    %v2643 = vunpack.c.l.b16 %v856
    %v2644 = vunpack.c.h.b16 %v856
    %v2645 = vunpack.c.l.b16 %v857
    %v2646 = vunpack.c.h.b16 %v857
    %v2647 = vunpack.c.l.b16 %v858
    %v2648 = vunpack.c.h.b16 %v858
    %v2649 = vunpack.c.l.b16 %v859
    %v2650 = vunpack.c.h.b16 %v859
    %v2651 = vunpack.c.l.b16 %v860
    %v2652 = vunpack.c.h.b16 %v860
    %v2653 = vunpack.c.l.b16 %v861
    %v2654 = vunpack.c.h.b16 %v861
    %v2655 = vunpack.c.l.b16 %v862
    %v2656 = vunpack.c.h.b16 %v862
    %v2657 = vunpack.c.l.b16 %v863
    %v2658 = vunpack.c.h.b16 %v863
    %v2659 = vunpack.c.l.b16 %v864
    %v2660 = vunpack.c.h.b16 %v864
    %v2661 = vunpack.c.l.b16 %v865
    %v2662 = vunpack.c.h.b16 %v865
    %v2663 = vunpack.c.l.b16 %v866
    %v2664 = vunpack.c.h.b16 %v866
    %v2665 = vunpack.c.l.b16 %v867
    %v2666 = vunpack.c.h.b16 %v867
    %v2667 = vunpack.c.l.b16 %v868
    %v2668 = vunpack.c.h.b16 %v868
    %v2669 = vunpack.c.l.b16 %v869
    %v2670 = vunpack.c.h.b16 %v869
    %v2671 = vunpack.c.l.b16 %v870
    %v2672 = vunpack.c.h.b16 %v870
    %v2673 = vunpack.c.l.b16 %v871
    %v2674 = vunpack.c.h.b16 %v871
    %v2675 = vunpack.c.l.b16 %v872
    %v2676 = vunpack.c.h.b16 %v872
    %v2677 = vunpack.c.l.b16 %v873
    %v2678 = vunpack.c.h.b16 %v873
    %v2679 = vunpack.c.l.b16 %v874
    %v2680 = vunpack.c.h.b16 %v874
    %v2681 = vunpack.c.l.b16 %v875
    %v2682 = vunpack.c.h.b16 %v875
    %v2683 = vunpack.c.l.b16 %v876
    %v2684 = vunpack.c.h.b16 %v876
    %v2685 = vunpack.c.l.b16 %v877
    %v2686 = vunpack.c.h.b16 %v877
    %v2687 = vunpack.c.l.b16 %v878
    %v2688 = vunpack.c.h.b16 %v878
    %v2689 = vunpack.c.l.b16 %v879
    %v2690 = vunpack.c.h.b16 %v879
    %v2691 = vunpack.c.l.b16 %v880
    %v2692 = vunpack.c.h.b16 %v880
    %v2693 = vunpack.c.l.b16 %v881
    %v2694 = vunpack.c.h.b16 %v881
    %v2695 = vunpack.c.l.b16 %v882
    %v2696 = vunpack.c.h.b16 %v882
    %v2697 = vunpack.c.l.b16 %v883
    %v2698 = vunpack.c.h.b16 %v883
    %v2699 = vunpack.c.l.b16 %v884
    %v2700 = vunpack.c.h.b16 %v884
    %v2701 = vunpack.c.l.b16 %v885
    %v2702 = vunpack.c.h.b16 %v885
    %v2703 = vunpack.c.l.b16 %v886
    %v2704 = vunpack.c.h.b16 %v886
    %v2705 = vunpack.c.l.b16 %v887
    %v2706 = vunpack.c.h.b16 %v887
    %v2707 = vunpack.c.l.b16 %v888
    %v2708 = vunpack.c.h.b16 %v888
    %v2709 = vunpack.c.l.b16 %v889
    %v2710 = vunpack.c.h.b16 %v889
    %v2711 = vunpack.c.l.b16 %v890
    %v2712 = vunpack.c.h.b16 %v890
    %v2713 = vunpack.c.l.b16 %v891
    %v2714 = vunpack.c.h.b16 %v891
    %v2715 = vunpack.c.l.b16 %v892
    %v2716 = vunpack.c.h.b16 %v892
    %v2717 = vunpack.c.l.b16 %v893
    %v2718 = vunpack.c.h.b16 %v893
    %v2719 = vunpack.c.l.b16 %v894
    %v2720 = vunpack.c.h.b16 %v894
    %v2721 = vunpack.c.l.b16 %v895
    %v2722 = vunpack.c.h.b16 %v895
    %v2723 = vunpack.c.l.b16 %v896
    %v2724 = vunpack.c.h.b16 %v896
    %v2725 = vunpack.c.l.b16 %v897
    %v2726 = vunpack.c.h.b16 %v897
    %v2727 = vunpack.c.l.b16 %v898
    %v2728 = vunpack.c.h.b16 %v898
    %v2729 = vunpack.c.l.b16 %v899
    %v2730 = vunpack.c.h.b16 %v899
    %v2731 = vunpack.c.l.b16 %v900
    %v2732 = vunpack.c.h.b16 %v900
    %v2733 = vunpack.c.l.b16 %v901
    %v2734 = vunpack.c.h.b16 %v901
    %v2735 = vunpack.c.l.b16 %v902
    %v2736 = vunpack.c.h.b16 %v902
    %v2737 = vunpack.c.l.b16 %v903
    %v2738 = vunpack.c.h.b16 %v903
    %v2739 = vunpack.c.l.b16 %v904
    %v2740 = vunpack.c.h.b16 %v904
    %v2741 = vunpack.c.l.b16 %v905
    %v2742 = vunpack.c.h.b16 %v905
    %v2743 = vunpack.c.l.b16 %v906
    %v2744 = vunpack.c.h.b16 %v906
    %v2745 = vunpack.c.l.b16 %v907
    %v2746 = vunpack.c.h.b16 %v907
    %v2747 = vunpack.c.l.b16 %v908
    %v2748 = vunpack.c.h.b16 %v908
    %v2749 = vunpack.c.l.b16 %v909
    %v2750 = vunpack.c.h.b16 %v909
    %v2751 = vunpack.c.l.b16 %v910
    %v2752 = vunpack.c.h.b16 %v910
    %v2753 = vunpack.c.l.b16 %v911
    %v2754 = vunpack.c.h.b16 %v911
    %v2755 = vunpack.c.l.b16 %v912
    %v2756 = vunpack.c.h.b16 %v912
    %v2757 = vunpack.c.l.b16 %v913
    %v2758 = vunpack.c.h.b16 %v913
    %v2759 = vunpack.c.l.b16 %v914
    %v2760 = vunpack.c.h.b16 %v914
    %v2761 = vunpack.c.l.b16 %v915
    %v2762 = vunpack.c.h.b16 %v915
    %v2763 = vunpack.c.l.b16 %v916
    %v2764 = vunpack.c.h.b16 %v916
    %v2765 = vunpack.c.l.b16 %v917
    %v2766 = vunpack.c.h.b16 %v917
    %v2767 = vunpack.c.l.b16 %v918
    %v2768 = vunpack.c.h.b16 %v918
    %v2769 = vunpack.c.l.b16 %v919
    %v2770 = vunpack.c.h.b16 %v919
    %v2771 = vunpack.c.l.b16 %v920
    %v2772 = vunpack.c.h.b16 %v920
    %v2773 = vunpack.c.l.b16 %v921
    %v2774 = vunpack.c.h.b16 %v921
    %v2775 = vunpack.c.l.b16 %v922
    %v2776 = vunpack.c.h.b16 %v922
    %v2777 = vunpack.c.l.b16 %v923
    %v2778 = vunpack.c.h.b16 %v923
    %v2779 = vunpack.c.l.b16 %v924
    %v2780 = vunpack.c.h.b16 %v924
    %v2781 = vunpack.c.l.b16 %v925
    %v2782 = vunpack.c.h.b16 %v925
    %v2783 = vunpack.c.l.b16 %v926
    %v2784 = vunpack.c.h.b16 %v926
    %v2785 = vunpack.c.l.b16 %v927
    %v2786 = vunpack.c.h.b16 %v927
    %v2787 = vunpack.c.l.b16 %v928
    %v2788 = vunpack.c.h.b16 %v928
    %v2789 = vunpack.c.l.b16 %v929
    %v2790 = vunpack.c.h.b16 %v929
    %v2791 = vunpack.c.l.b16 %v930
    %v2792 = vunpack.c.h.b16 %v930
    %v2793 = vunpack.c.l.b16 %v931
    %v2794 = vunpack.c.h.b16 %v931
    %v2795 = vunpack.c.l.b16 %v932
    %v2796 = vunpack.c.h.b16 %v932
    %v2797 = vunpack.c.l.b16 %v933
    %v2798 = vunpack.c.h.b16 %v933
    %v2799 = vunpack.c.l.b16 %v934
    %v2800 = vunpack.c.h.b16 %v934
    %v2801 = vunpack.c.l.b16 %v935
    %v2802 = vunpack.c.h.b16 %v935
    %v2803 = vunpack.c.l.b16 %v936
    %v2804 = vunpack.c.h.b16 %v936
    %v2805 = vunpack.c.l.b16 %v937
    %v2806 = vunpack.c.h.b16 %v937
    %v2807 = vunpack.c.l.b16 %v938
    %v2808 = vunpack.c.h.b16 %v938
    %v2809 = vunpack.c.l.b16 %v939
    %v2810 = vunpack.c.h.b16 %v939
    %v2811 = vunpack.c.l.b16 %v940
    %v2812 = vunpack.c.h.b16 %v940
    %v2813 = vunpack.c.l.b16 %v941
    %v2814 = vunpack.c.h.b16 %v941
    %v2815 = vunpack.c.l.b16 %v942
    %v2816 = vunpack.c.h.b16 %v942
    %v2817 = vunpack.c.l.b16 %v943
    %v2818 = vunpack.c.h.b16 %v943
    %v2819 = vunpack.c.l.b16 %v944
    %v2820 = vunpack.c.h.b16 %v944
    %v2821 = vunpack.c.l.b16 %v945
    %v2822 = vunpack.c.h.b16 %v945
    %v2823 = vunpack.c.l.b16 %v946
    %v2824 = vunpack.c.h.b16 %v946
    %v2825 = vunpack.c.l.b16 %v947
    %v2826 = vunpack.c.h.b16 %v947
    %v2827 = vunpack.c.l.b16 %v948
    %v2828 = vunpack.c.h.b16 %v948
    %v2829 = vunpack.c.l.b16 %v949
    %v2830 = vunpack.c.h.b16 %v949
    %v2831 = vunpack.c.l.b16 %v950
    %v2832 = vunpack.c.h.b16 %v950
    %v2833 = vunpack.c.l.b16 %v951
    %v2834 = vunpack.c.h.b16 %v951
    %v2835 = vunpack.c.l.b16 %v952
    %v2836 = vunpack.c.h.b16 %v952
    %v2837 = vunpack.c.l.b16 %v953
    %v2838 = vunpack.c.h.b16 %v953
    %v2839 = vunpack.c.l.b16 %v954
    %v2840 = vunpack.c.h.b16 %v954
    %v2841 = vunpack.c.l.b16 %v955
    %v2842 = vunpack.c.h.b16 %v955
    %v2843 = vunpack.c.l.b16 %v956
    %v2844 = vunpack.c.h.b16 %v956
    %v2845 = vunpack.c.l.b16 %v957
    %v2846 = vunpack.c.h.b16 %v957
    %v2847 = vunpack.c.l.b16 %v958
    %v2848 = vunpack.c.h.b16 %v958
    %v2849 = vunpack.c.l.b16 %v959
    %v2850 = vunpack.c.h.b16 %v959
    %v2851 = vunpack.c.l.b16 %v960
    %v2852 = vunpack.c.h.b16 %v960
    %v2853 = vunpack.c.l.b16 %v961
    %v2854 = vunpack.c.h.b16 %v961
    %v2855 = vunpack.c.l.b16 %v962
    %v2856 = vunpack.c.h.b16 %v962
    %v2857 = vunpack.c.l.b16 %v963
    %v2858 = vunpack.c.h.b16 %v963
    %v2859 = vunpack.c.l.b16 %v964
    %v2860 = vunpack.c.h.b16 %v964
    %v2861 = vunpack.c.l.b16 %v965
    %v2862 = vunpack.c.h.b16 %v965
    %v2863 = vunpack.c.l.b16 %v966
    %v2864 = vunpack.c.h.b16 %v966
    %v2865 = vunpack.c.l.b16 %v967
    %v2866 = vunpack.c.h.b16 %v967
    %v2867 = vunpack.c.l.b16 %v968
    %v2868 = vunpack.c.h.b16 %v968
    %v2869 = vunpack.c.l.b16 %v969
    %v2870 = vunpack.c.h.b16 %v969
    %v2871 = vunpack.c.l.b16 %v970
    %v2872 = vunpack.c.h.b16 %v970
    %v2873 = vunpack.c.l.b16 %v971
    %v2874 = vunpack.c.h.b16 %v971
    %v2875 = vunpack.c.l.b16 %v972
    %v2876 = vunpack.c.h.b16 %v972
    %v2877 = vunpack.c.l.b16 %v973
    %v2878 = vunpack.c.h.b16 %v973
    %v2879 = vunpack.c.l.b16 %v974
    %v2880 = vunpack.c.h.b16 %v974
    %v2881 = vunpack.c.l.b16 %v975
    %v2882 = vunpack.c.h.b16 %v975
    %v2883 = vunpack.c.l.b16 %v976
    %v2884 = vunpack.c.h.b16 %v976
    %v2885 = vunpack.c.l.b16 %v977
    %v2886 = vunpack.c.h.b16 %v977
    %v2887 = vunpack.c.l.b16 %v978
    %v2888 = vunpack.c.h.b16 %v978
    %v2889 = vunpack.c.l.b16 %v979
    %v2890 = vunpack.c.h.b16 %v979
    %v2891 = vunpack.c.l.b16 %v980
    %v2892 = vunpack.c.h.b16 %v980
    %v2893 = vunpack.c.l.b16 %v981
    %v2894 = vunpack.c.h.b16 %v981
    %v2895 = vunpack.c.l.b16 %v982
    %v2896 = vunpack.c.h.b16 %v982
    %v2897 = vunpack.c.l.b16 %v983
    %v2898 = vunpack.c.h.b16 %v983
    %v2899 = vunpack.c.l.b16 %v984
    %v2900 = vunpack.c.h.b16 %v984
    %v2901 = vunpack.c.l.b16 %v985
    %v2902 = vunpack.c.h.b16 %v985
    %v2903 = vunpack.c.l.b16 %v986
    %v2904 = vunpack.c.h.b16 %v986
    %v2905 = vunpack.c.l.b16 %v987
    %v2906 = vunpack.c.h.b16 %v987
    %v2907 = vunpack.c.l.b16 %v988
    %v2908 = vunpack.c.h.b16 %v988
    %v2909 = vunpack.c.l.b16 %v989
    %v2910 = vunpack.c.h.b16 %v989
    %v2911 = vunpack.c.l.b16 %v990
    %v2912 = vunpack.c.h.b16 %v990
    %v2913 = vunpack.c.l.b16 %v991
    %v2914 = vunpack.c.h.b16 %v991
    %v2915 = vunpack.c.l.b16 %v992
    %v2916 = vunpack.c.h.b16 %v992
    %v2917 = vunpack.c.l.b16 %v993
    %v2918 = vunpack.c.h.b16 %v993
    %v2919 = vunpack.c.l.b16 %v994
    %v2920 = vunpack.c.h.b16 %v994
    %v2921 = vunpack.c.l.b16 %v995
    %v2922 = vunpack.c.h.b16 %v995
    %v2923 = vunpack.c.l.b16 %v996
    %v2924 = vunpack.c.h.b16 %v996
    %v2925 = vunpack.c.l.b16 %v997
    %v2926 = vunpack.c.h.b16 %v997
    %v2927 = vunpack.c.l.b16 %v998
    %v2928 = vunpack.c.h.b16 %v998
    %v2929 = vunpack.c.l.b16 %v999
    %v2930 = vunpack.c.h.b16 %v999
    %v2931 = vunpack.c.l.b16 %v1000
    %v2932 = vunpack.c.h.b16 %v1000
    %v2933 = vpack.c.b16 %v1655, %v1653
    %v2934 = vpack.c.b16 %v1656, %v1654
    %v2935 = vpack.c.b16 %v1659, %v1657
    %v2936 = vpack.c.b16 %v1660, %v1658
    %v2937 = vpack.c.b16 %v1663, %v1661
    %v2938 = vpack.c.b16 %v1664, %v1662
    %v2939 = vpack.c.b16 %v1667, %v1665
    %v2940 = vpack.c.b16 %v1668, %v1666
    %v2941 = vpack.c.b16 %v1671, %v1669
    %v2942 = vpack.c.b16 %v1672, %v1670
    %v2943 = vpack.c.b16 %v1675, %v1673
    %v2944 = vpack.c.b16 %v1676, %v1674
    %v2945 = vpack.c.b16 %v1679, %v1677
    %v2946 = vpack.c.b16 %v1680, %v1678
    %v2947 = vpack.c.b16 %v1683, %v1681
    %v2948 = vpack.c.b16 %v1684, %v1682
    %v2949 = vpack.c.b16 %v1687, %v1685
    %v2950 = vpack.c.b16 %v1688, %v1686
    %v2951 = vpack.c.b16 %v1691, %v1689
    %v2952 = vpack.c.b16 %v1692, %v1690
    %v2953 = vpack.c.b16 %v1695, %v1693
    %v2954 = vpack.c.b16 %v1696, %v1694
    %v2955 = vpack.c.b16 %v1699, %v1697
    %v2956 = vpack.c.b16 %v1700, %v1698
    %v2957 = vpack.c.b16 %v1703, %v1701
    %v2958 = vpack.c.b16 %v1704, %v1702
    %v2959 = vpack.c.b16 %v1707, %v1705
    %v2960 = vpack.c.b16 %v1708, %v1706
    %v2961 = vpack.c.b16 %v1711, %v1709
    %v2962 = vpack.c.b16 %v1712, %v1710
    %v2963 = vpack.c.b16 %v1715, %v1713
    %v2964 = vpack.c.b16 %v1716, %v1714
    %v2965 = vpack.c.b16 %v1719, %v1717
    %v2966 = vpack.c.b16 %v1720, %v1718
    %v2967 = vpack.c.b16 %v1723, %v1721
    %v2968 = vpack.c.b16 %v1724, %v1722
    %v2969 = vpack.c.b16 %v1727, %v1725
    %v2970 = vpack.c.b16 %v1728, %v1726
    %v2971 = vpack.c.b16 %v1731, %v1729
    %v2972 = vpack.c.b16 %v1732, %v1730
    %v2973 = vpack.c.b16 %v1735, %v1733
    %v2974 = vpack.c.b16 %v1736, %v1734
    %v2975 = vpack.c.b16 %v1739, %v1737
    %v2976 = vpack.c.b16 %v1740, %v1738
    %v2977 = vpack.c.b16 %v1743, %v1741
    %v2978 = vpack.c.b16 %v1744, %v1742
    %v2979 = vpack.c.b16 %v1747, %v1745
    %v2980 = vpack.c.b16 %v1748, %v1746
    %v2981 = vpack.c.b16 %v1751, %v1749
    %v2982 = vpack.c.b16 %v1752, %v1750
    %v2983 = vpack.c.b16 %v1755, %v1753
    %v2984 = vpack.c.b16 %v1756, %v1754
    %v2985 = vpack.c.b16 %v1759, %v1757
    %v2986 = vpack.c.b16 %v1760, %v1758
    %v2987 = vpack.c.b16 %v1763, %v1761
    %v2988 = vpack.c.b16 %v1764, %v1762
    %v2989 = vpack.c.b16 %v1767, %v1765
    %v2990 = vpack.c.b16 %v1768, %v1766
    %v2991 = vpack.c.b16 %v1771, %v1769
    %v2992 = vpack.c.b16 %v1772, %v1770
    %v2993 = vpack.c.b16 %v1775, %v1773
    %v2994 = vpack.c.b16 %v1776, %v1774
    %v2995 = vpack.c.b16 %v1779, %v1777
    %v2996 = vpack.c.b16 %v1780, %v1778
    %v2997 = vpack.c.b16 %v1783, %v1781
    %v2998 = vpack.c.b16 %v1784, %v1782
    %v2999 = vpack.c.b16 %v1787, %v1785
    %v3000 = vpack.c.b16 %v1788, %v1786
    %v3001 = vpack.c.b16 %v1791, %v1789
    %v3002 = vpack.c.b16 %v1792, %v1790
    %v3003 = vpack.c.b16 %v1795, %v1793
    %v3004 = vpack.c.b16 %v1796, %v1794
    %v3005 = vpack.c.b16 %v1799, %v1797
    %v3006 = vpack.c.b16 %v1800, %v1798
    %v3007 = vpack.c.b16 %v1803, %v1801
    %v3008 = vpack.c.b16 %v1804, %v1802
    %v3009 = vpack.c.b16 %v1807, %v1805
    %v3010 = vpack.c.b16 %v1808, %v1806
    %v3011 = vpack.c.b16 %v1811, %v1809
    %v3012 = vpack.c.b16 %v1812, %v1810
    %v3013 = vpack.c.b16 %v1815, %v1813
    %v3014 = vpack.c.b16 %v1816, %v1814
    %v3015 = vpack.c.b16 %v1819, %v1817
    %v3016 = vpack.c.b16 %v1820, %v1818
    %v3017 = vpack.c.b16 %v1823, %v1821
    %v3018 = vpack.c.b16 %v1824, %v1822
    %v3019 = vpack.c.b16 %v1827, %v1825
    %v3020 = vpack.c.b16 %v1828, %v1826
    %v3021 = vpack.c.b16 %v1831, %v1829
    %v3022 = vpack.c.b16 %v1832, %v1830
    %v3023 = vpack.c.b16 %v1835, %v1833
    %v3024 = vpack.c.b16 %v1836, %v1834
    %v3025 = vpack.c.b16 %v1839, %v1837
    %v3026 = vpack.c.b16 %v1840, %v1838
    %v3027 = vpack.c.b16 %v1843, %v1841
    %v3028 = vpack.c.b16 %v1844, %v1842
    %v3029 = vpack.c.b16 %v1847, %v1845
    %v3030 = vpack.c.b16 %v1848, %v1846
    %v3031 = vpack.c.b16 %v1851, %v1849
    %v3032 = vpack.c.b16 %v1852, %v1850
    %v3033 = vpack.c.b16 %v1855, %v1853
    %v3034 = vpack.c.b16 %v1856, %v1854
    %v3035 = vpack.c.b16 %v1859, %v1857
    %v3036 = vpack.c.b16 %v1860, %v1858
    %v3037 = vpack.c.b16 %v1863, %v1861
    %v3038 = vpack.c.b16 %v1864, %v1862
    %v3039 = vpack.c.b16 %v1867, %v1865
    %v3040 = vpack.c.b16 %v1868, %v1866
    %v3041 = vpack.c.b16 %v1871, %v1869
    %v3042 = vpack.c.b16 %v1872, %v1870
    %v3043 = vpack.c.b16 %v1875, %v1873
    %v3044 = vpack.c.b16 %v1876, %v1874
    %v3045 = vpack.c.b16 %v1879, %v1877
    %v3046 = vpack.c.b16 %v1880, %v1878
    %v3047 = vpack.c.b16 %v1883, %v1881
    %v3048 = vpack.c.b16 %v1884, %v1882
    %v3049 = vpack.c.b16 %v1887, %v1885
    %v3050 = vpack.c.b16 %v1888, %v1886
    %v3051 = vpack.c.b16 %v1891, %v1889
    %v3052 = vpack.c.b16 %v1892, %v1890
    %v3053 = vpack.c.b16 %v1895, %v1893
    %v3054 = vpack.c.b16 %v1896, %v1894
    %v3055 = vpack.c.b16 %v1899, %v1897
    %v3056 = vpack.c.b16 %v1900, %v1898
    %v3057 = vpack.c.b16 %v1903, %v1901
    %v3058 = vpack.c.b16 %v1904, %v1902
    %v3059 = vpack.c.b16 %v1907, %v1905
    %v3060 = vpack.c.b16 %v1908, %v1906
    %v3061 = vpack.c.b16 %v1911, %v1909
    %v3062 = vpack.c.b16 %v1912, %v1910
    %v3063 = vpack.c.b16 %v1915, %v1913
    %v3064 = vpack.c.b16 %v1916, %v1914
    %v3065 = vpack.c.b16 %v1919, %v1917
    %v3066 = vpack.c.b16 %v1920, %v1918
    %v3067 = vpack.c.b16 %v1923, %v1921
    %v3068 = vpack.c.b16 %v1924, %v1922
    %v3069 = vpack.c.b16 %v1927, %v1925
    %v3070 = vpack.c.b16 %v1928, %v1926
    %v3071 = vpack.c.b16 %v1931, %v1929
    %v3072 = vpack.c.b16 %v1932, %v1930
    %v3073 = vpack.c.b16 %v1935, %v1933
    %v3074 = vpack.c.b16 %v1936, %v1934
    %v3075 = vpack.c.b16 %v1939, %v1937
    %v3076 = vpack.c.b16 %v1940, %v1938
    %v3077 = vpack.c.b16 %v1943, %v1941
    %v3078 = vpack.c.b16 %v1944, %v1942
    %v3079 = vpack.c.b16 %v1947, %v1945
    %v3080 = vpack.c.b16 %v1948, %v1946
    %v3081 = vpack.c.b16 %v1951, %v1949
    %v3082 = vpack.c.b16 %v1952, %v1950
    %v3083 = vpack.c.b16 %v1955, %v1953
    %v3084 = vpack.c.b16 %v1956, %v1954
    %v3085 = vpack.c.b16 %v1959, %v1957
    %v3086 = vpack.c.b16 %v1960, %v1958
    %v3087 = vpack.c.b16 %v1963, %v1961
    %v3088 = vpack.c.b16 %v1964, %v1962
    %v3089 = vpack.c.b16 %v1967, %v1965
    %v3090 = vpack.c.b16 %v1968, %v1966
    %v3091 = vpack.c.b16 %v1971, %v1969
    %v3092 = vpack.c.b16 %v1972, %v1970
    %v3093 = vpack.c.b16 %v1975, %v1973
    %v3094 = vpack.c.b16 %v1976, %v1974
    %v3095 = vpack.c.b16 %v1979, %v1977
    %v3096 = vpack.c.b16 %v1980, %v1978
    %v3097 = vpack.c.b16 %v1983, %v1981
    %v3098 = vpack.c.b16 %v1984, %v1982
    %v3099 = vpack.c.b16 %v1987, %v1985
    %v3100 = vpack.c.b16 %v1988, %v1986
    %v3101 = vpack.c.b16 %v1991, %v1989
    %v3102 = vpack.c.b16 %v1992, %v1990
    %v3103 = vpack.c.b16 %v1995, %v1993
    %v3104 = vpack.c.b16 %v1996, %v1994
    %v3105 = vpack.c.b16 %v1999, %v1997
    %v3106 = vpack.c.b16 %v2000, %v1998
    %v3107 = vpack.c.b16 %v2003, %v2001
    %v3108 = vpack.c.b16 %v2004, %v2002
    %v3109 = vpack.c.b16 %v2007, %v2005
    %v3110 = vpack.c.b16 %v2008, %v2006
    %v3111 = vpack.c.b16 %v2011, %v2009
    %v3112 = vpack.c.b16 %v2012, %v2010
    %v3113 = vpack.c.b16 %v2015, %v2013
    %v3114 = vpack.c.b16 %v2016, %v2014
    %v3115 = vpack.c.b16 %v2019, %v2017
    %v3116 = vpack.c.b16 %v2020, %v2018
    %v3117 = vpack.c.b16 %v2023, %v2021
    %v3118 = vpack.c.b16 %v2024, %v2022
    %v3119 = vpack.c.b16 %v2027, %v2025
    %v3120 = vpack.c.b16 %v2028, %v2026
    %v3121 = vpack.c.b16 %v2031, %v2029
    %v3122 = vpack.c.b16 %v2032, %v2030
    %v3123 = vpack.c.b16 %v2035, %v2033
    %v3124 = vpack.c.b16 %v2036, %v2034
    %v3125 = vpack.c.b16 %v2039, %v2037
    %v3126 = vpack.c.b16 %v2040, %v2038
    %v3127 = vpack.c.b16 %v2043, %v2041
    %v3128 = vpack.c.b16 %v2044, %v2042
    %v3129 = vpack.c.b16 %v2047, %v2045
    %v3130 = vpack.c.b16 %v2048, %v2046
    %v3131 = vpack.c.b16 %v2051, %v2049
    %v3132 = vpack.c.b16 %v2052, %v2050
    %v3133 = vpack.c.b16 %v2055, %v2053
    %v3134 = vpack.c.b16 %v2056, %v2054
    %v3135 = vpack.c.b16 %v2059, %v2057
    %v3136 = vpack.c.b16 %v2060, %v2058
    %v3137 = vpack.c.b16 %v2063, %v2061
    %v3138 = vpack.c.b16 %v2064, %v2062
    %v3139 = vpack.c.b16 %v2067, %v2065
    %v3140 = vpack.c.b16 %v2068, %v2066
    %v3141 = vpack.c.b16 %v2071, %v2069
    %v3142 = vpack.c.b16 %v2072, %v2070
    %v3143 = vpack.c.b16 %v2075, %v2073
    %v3144 = vpack.c.b16 %v2076, %v2074
    %v3145 = vpack.c.b16 %v2079, %v2077
    %v3146 = vpack.c.b16 %v2080, %v2078
    %v3147 = vpack.c.b16 %v2083, %v2081
    %v3148 = vpack.c.b16 %v2084, %v2082
    %v3149 = vpack.c.b16 %v2087, %v2085
    %v3150 = vpack.c.b16 %v2088, %v2086
    %v3151 = vpack.c.b16 %v2091, %v2089
    %v3152 = vpack.c.b16 %v2092, %v2090
    %v3153 = vpack.c.b16 %v2095, %v2093
    %v3154 = vpack.c.b16 %v2096, %v2094
    %v3155 = vpack.c.b16 %v2099, %v2097
    %v3156 = vpack.c.b16 %v2100, %v2098
    %v3157 = vpack.c.b16 %v2103, %v2101
    %v3158 = vpack.c.b16 %v2104, %v2102
    %v3159 = vpack.c.b16 %v2107, %v2105
    %v3160 = vpack.c.b16 %v2108, %v2106
    %v3161 = vpack.c.b16 %v2111, %v2109
    %v3162 = vpack.c.b16 %v2112, %v2110
    %v3163 = vpack.c.b16 %v2115, %v2113
    %v3164 = vpack.c.b16 %v2116, %v2114
    %v3165 = vpack.c.b16 %v2119, %v2117
    %v3166 = vpack.c.b16 %v2120, %v2118
    %v3167 = vpack.c.b16 %v2123, %v2121
    %v3168 = vpack.c.b16 %v2124, %v2122
    %v3169 = vpack.c.b16 %v2127, %v2125
    %v3170 = vpack.c.b16 %v2128, %v2126
    %v3171 = vpack.c.b16 %v2131, %v2129
    %v3172 = vpack.c.b16 %v2132, %v2130
    %v3173 = vpack.c.b16 %v2135, %v2133
    %v3174 = vpack.c.b16 %v2136, %v2134
    %v3175 = vpack.c.b16 %v2139, %v2137
    %v3176 = vpack.c.b16 %v2140, %v2138
    %v3177 = vpack.c.b16 %v2143, %v2141
    %v3178 = vpack.c.b16 %v2144, %v2142
    %v3179 = vpack.c.b16 %v2147, %v2145
    %v3180 = vpack.c.b16 %v2148, %v2146
    %v3181 = vpack.c.b16 %v2151, %v2149
    %v3182 = vpack.c.b16 %v2152, %v2150
    %v3183 = vpack.c.b16 %v2155, %v2153
    %v3184 = vpack.c.b16 %v2156, %v2154
    %v3185 = vpack.c.b16 %v2159, %v2157
    %v3186 = vpack.c.b16 %v2160, %v2158
    %v3187 = vpack.c.b16 %v2163, %v2161
    %v3188 = vpack.c.b16 %v2164, %v2162
    %v3189 = vpack.c.b16 %v2167, %v2165
    %v3190 = vpack.c.b16 %v2168, %v2166
    %v3191 = vpack.c.b16 %v2171, %v2169
    %v3192 = vpack.c.b16 %v2172, %v2170
    %v3193 = vpack.c.b16 %v2175, %v2173
    %v3194 = vpack.c.b16 %v2176, %v2174
    %v3195 = vpack.c.b16 %v2179, %v2177
    %v3196 = vpack.c.b16 %v2180, %v2178
    %v3197 = vpack.c.b16 %v2183, %v2181
    %v3198 = vpack.c.b16 %v2184, %v2182
    %v3199 = vpack.c.b16 %v2187, %v2185
    %v3200 = vpack.c.b16 %v2188, %v2186
    %v3201 = vpack.c.b16 %v2191, %v2189
    %v3202 = vpack.c.b16 %v2192, %v2190
    %v3203 = vpack.c.b16 %v2195, %v2193
    %v3204 = vpack.c.b16 %v2196, %v2194
    %v3205 = vpack.c.b16 %v2199, %v2197
    %v3206 = vpack.c.b16 %v2200, %v2198
    %v3207 = vpack.c.b16 %v2203, %v2201
    %v3208 = vpack.c.b16 %v2204, %v2202
    %v3209 = vpack.c.b16 %v2207, %v2205
    %v3210 = vpack.c.b16 %v2208, %v2206
    %v3211 = vpack.c.b16 %v2211, %v2209
    %v3212 = vpack.c.b16 %v2212, %v2210
    %v3213 = vpack.c.b16 %v2215, %v2213
    %v3214 = vpack.c.b16 %v2216, %v2214
    %v3215 = vpack.c.b16 %v2219, %v2217
    %v3216 = vpack.c.b16 %v2220, %v2218
    %v3217 = vpack.c.b16 %v2223, %v2221
    %v3218 = vpack.c.b16 %v2224, %v2222
    %v3219 = vpack.c.b16 %v2227, %v2225
    %v3220 = vpack.c.b16 %v2228, %v2226
    %v3221 = vpack.c.b16 %v2231, %v2229
    %v3222 = vpack.c.b16 %v2232, %v2230
    %v3223 = vpack.c.b16 %v2235, %v2233
    %v3224 = vpack.c.b16 %v2236, %v2234
    %v3225 = vpack.c.b16 %v2239, %v2237
    %v3226 = vpack.c.b16 %v2240, %v2238
    %v3227 = vpack.c.b16 %v2243, %v2241
    %v3228 = vpack.c.b16 %v2244, %v2242
    %v3229 = vpack.c.b16 %v2247, %v2245
    %v3230 = vpack.c.b16 %v2248, %v2246
    %v3231 = vpack.c.b16 %v2251, %v2249
    %v3232 = vpack.c.b16 %v2252, %v2250
    %v3233 = vpack.c.b16 %v2255, %v2253
    %v3234 = vpack.c.b16 %v2256, %v2254
    %v3235 = vpack.c.b16 %v2259, %v2257
    %v3236 = vpack.c.b16 %v2260, %v2258
    %v3237 = vpack.c.b16 %v2263, %v2261
    %v3238 = vpack.c.b16 %v2264, %v2262
    %v3239 = vpack.c.b16 %v2267, %v2265
    %v3240 = vpack.c.b16 %v2268, %v2266
    %v3241 = vpack.c.b16 %v2271, %v2269
    %v3242 = vpack.c.b16 %v2272, %v2270
    %v3243 = vpack.c.b16 %v2275, %v2273
    %v3244 = vpack.c.b16 %v2276, %v2274
    %v3245 = vpack.c.b16 %v2279, %v2277
    %v3246 = vpack.c.b16 %v2280, %v2278
    %v3247 = vpack.c.b16 %v2283, %v2281
    %v3248 = vpack.c.b16 %v2284, %v2282
    %v3249 = vpack.c.b16 %v2287, %v2285
    %v3250 = vpack.c.b16 %v2288, %v2286
    %v3251 = vpack.c.b16 %v2291, %v2289
    %v3252 = vpack.c.b16 %v2292, %v2290
    %v3253 = vpack.c.b16 %v2295, %v2293
    %v3254 = vpack.c.b16 %v2296, %v2294
    %v3255 = vpack.c.b16 %v2299, %v2297
    %v3256 = vpack.c.b16 %v2300, %v2298
    %v3257 = vpack.c.b16 %v2303, %v2301
    %v3258 = vpack.c.b16 %v2304, %v2302
    %v3259 = vpack.c.b16 %v2307, %v2305
    %v3260 = vpack.c.b16 %v2308, %v2306
    %v3261 = vpack.c.b16 %v2311, %v2309
    %v3262 = vpack.c.b16 %v2312, %v2310
    %v3263 = vpack.c.b16 %v2315, %v2313
    %v3264 = vpack.c.b16 %v2316, %v2314
    %v3265 = vpack.c.b16 %v2319, %v2317
    %v3266 = vpack.c.b16 %v2320, %v2318
    %v3267 = vpack.c.b16 %v2323, %v2321
    %v3268 = vpack.c.b16 %v2324, %v2322
    %v3269 = vpack.c.b16 %v2327, %v2325
    %v3270 = vpack.c.b16 %v2328, %v2326
    %v3271 = vpack.c.b16 %v2331, %v2329
    %v3272 = vpack.c.b16 %v2332, %v2330
    %v3273 = vpack.c.b16 %v2335, %v2333
    %v3274 = vpack.c.b16 %v2336, %v2334
    %v3275 = vpack.c.b16 %v2339, %v2337
    %v3276 = vpack.c.b16 %v2340, %v2338
    %v3277 = vpack.c.b16 %v2343, %v2341
    %v3278 = vpack.c.b16 %v2344, %v2342
    %v3279 = vpack.c.b16 %v2347, %v2345
    %v3280 = vpack.c.b16 %v2348, %v2346
    %v3281 = vpack.c.b16 %v2351, %v2349
    %v3282 = vpack.c.b16 %v2352, %v2350
    %v3283 = vpack.c.b16 %v2355, %v2353
    %v3284 = vpack.c.b16 %v2356, %v2354
    %v3285 = vpack.c.b16 %v2359, %v2357
    %v3286 = vpack.c.b16 %v2360, %v2358
    %v3287 = vpack.c.b16 %v2363, %v2361
    %v3288 = vpack.c.b16 %v2364, %v2362
    %v3289 = vpack.c.b16 %v2367, %v2365
    %v3290 = vpack.c.b16 %v2368, %v2366
    %v3291 = vpack.c.b16 %v2371, %v2369
    %v3292 = vpack.c.b16 %v2372, %v2370
    %v3293 = vpack.c.b16 %v2375, %v2373
    %v3294 = vpack.c.b16 %v2376, %v2374
    %v3295 = vpack.c.b16 %v2379, %v2377
    %v3296 = vpack.c.b16 %v2380, %v2378
    %v3297 = vpack.c.b16 %v2383, %v2381
    %v3298 = vpack.c.b16 %v2384, %v2382
    %v3299 = vpack.c.b16 %v2387, %v2385
    %v3300 = vpack.c.b16 %v2388, %v2386
    %v3301 = vpack.c.b16 %v2391, %v2389
    %v3302 = vpack.c.b16 %v2392, %v2390
    %v3303 = vpack.c.b16 %v2395, %v2393
    %v3304 = vpack.c.b16 %v2396, %v2394
    %v3305 = vpack.c.b16 %v2399, %v2397
    %v3306 = vpack.c.b16 %v2400, %v2398
    %v3307 = vpack.c.b16 %v2403, %v2401
    %v3308 = vpack.c.b16 %v2404, %v2402
    %v3309 = vpack.c.b16 %v2407, %v2405
    %v3310 = vpack.c.b16 %v2408, %v2406
    %v3311 = vpack.c.b16 %v2411, %v2409
    %v3312 = vpack.c.b16 %v2412, %v2410
    %v3313 = vpack.c.b16 %v2415, %v2413
    %v3314 = vpack.c.b16 %v2416, %v2414
    %v3315 = vpack.c.b16 %v2419, %v2417
    %v3316 = vpack.c.b16 %v2420, %v2418
    %v3317 = vpack.c.b16 %v2423, %v2421
    %v3318 = vpack.c.b16 %v2424, %v2422
    %v3319 = vpack.c.b16 %v2427, %v2425
    %v3320 = vpack.c.b16 %v2428, %v2426
    %v3321 = vpack.c.b16 %v2431, %v2429
    %v3322 = vpack.c.b16 %v2432, %v2430
    %v3323 = vpack.c.b16 %v2435, %v2433
    %v3324 = vpack.c.b16 %v2436, %v2434
    %v3325 = vpack.c.b16 %v2439, %v2437
    %v3326 = vpack.c.b16 %v2440, %v2438
    %v3327 = vpack.c.b16 %v2443, %v2441
    %v3328 = vpack.c.b16 %v2444, %v2442
    %v3329 = vpack.c.b16 %v2447, %v2445
    %v3330 = vpack.c.b16 %v2448, %v2446
    %v3331 = vpack.c.b16 %v2451, %v2449
    %v3332 = vpack.c.b16 %v2452, %v2450
    %v3333 = vpack.c.b16 %v2455, %v2453
    %v3334 = vpack.c.b16 %v2456, %v2454
    %v3335 = vpack.c.b16 %v2459, %v2457
    %v3336 = vpack.c.b16 %v2460, %v2458
    %v3337 = vpack.c.b16 %v2463, %v2461
    %v3338 = vpack.c.b16 %v2464, %v2462
    %v3339 = vpack.c.b16 %v2467, %v2465
    %v3340 = vpack.c.b16 %v2468, %v2466
    %v3341 = vpack.c.b16 %v2471, %v2469
    %v3342 = vpack.c.b16 %v2472, %v2470
    %v3343 = vpack.c.b16 %v2475, %v2473
    %v3344 = vpack.c.b16 %v2476, %v2474
    %v3345 = vpack.c.b16 %v2479, %v2477
    %v3346 = vpack.c.b16 %v2480, %v2478
    %v3347 = vpack.c.b16 %v2483, %v2481
    %v3348 = vpack.c.b16 %v2484, %v2482
    %v3349 = vpack.c.b16 %v2487, %v2485
    %v3350 = vpack.c.b16 %v2488, %v2486
    %v3351 = vpack.c.b16 %v2491, %v2489
    %v3352 = vpack.c.b16 %v2492, %v2490
    %v3353 = vpack.c.b16 %v2495, %v2493
    %v3354 = vpack.c.b16 %v2496, %v2494
    %v3355 = vpack.c.b16 %v2499, %v2497
    %v3356 = vpack.c.b16 %v2500, %v2498
    %v3357 = vpack.c.b16 %v2503, %v2501
    %v3358 = vpack.c.b16 %v2504, %v2502
    %v3359 = vpack.c.b16 %v2507, %v2505
    %v3360 = vpack.c.b16 %v2508, %v2506
    %v3361 = vpack.c.b16 %v2511, %v2509
    %v3362 = vpack.c.b16 %v2512, %v2510
    %v3363 = vpack.c.b16 %v2515, %v2513
    %v3364 = vpack.c.b16 %v2516, %v2514
    %v3365 = vpack.c.b16 %v2519, %v2517
    %v3366 = vpack.c.b16 %v2520, %v2518
    %v3367 = vpack.c.b16 %v2523, %v2521
    %v3368 = vpack.c.b16 %v2524, %v2522
    %v3369 = vpack.c.b16 %v2527, %v2525
    %v3370 = vpack.c.b16 %v2528, %v2526
    %v3371 = vpack.c.b16 %v2531, %v2529
    %v3372 = vpack.c.b16 %v2532, %v2530
    %v3373 = vpack.c.b16 %v2535, %v2533
    %v3374 = vpack.c.b16 %v2536, %v2534
    %v3375 = vpack.c.b16 %v2539, %v2537
    %v3376 = vpack.c.b16 %v2540, %v2538
    %v3377 = vpack.c.b16 %v2543, %v2541
    %v3378 = vpack.c.b16 %v2544, %v2542
    %v3379 = vpack.c.b16 %v2547, %v2545
    %v3380 = vpack.c.b16 %v2548, %v2546
    %v3381 = vpack.c.b16 %v2551, %v2549
    %v3382 = vpack.c.b16 %v2552, %v2550
    %v3383 = vpack.c.b16 %v2555, %v2553
    %v3384 = vpack.c.b16 %v2556, %v2554
    %v3385 = vpack.c.b16 %v2559, %v2557
    %v3386 = vpack.c.b16 %v2560, %v2558
    %v3387 = vpack.c.b16 %v2563, %v2561
    %v3388 = vpack.c.b16 %v2564, %v2562
    %v3389 = vpack.c.b16 %v2567, %v2565
    %v3390 = vpack.c.b16 %v2568, %v2566
    %v3391 = vpack.c.b16 %v2571, %v2569
    %v3392 = vpack.c.b16 %v2572, %v2570
    %v3393 = vpack.c.b16 %v2575, %v2573
    %v3394 = vpack.c.b16 %v2576, %v2574
    %v3395 = vpack.c.b16 %v2579, %v2577
    %v3396 = vpack.c.b16 %v2580, %v2578
    %v3397 = vpack.c.b16 %v2583, %v2581
    %v3398 = vpack.c.b16 %v2584, %v2582
    %v3399 = vpack.c.b16 %v2587, %v2585
    %v3400 = vpack.c.b16 %v2588, %v2586
    %v3401 = vpack.c.b16 %v2591, %v2589
    %v3402 = vpack.c.b16 %v2592, %v2590
    %v3403 = vpack.c.b16 %v2595, %v2593
    %v3404 = vpack.c.b16 %v2596, %v2594
    %v3405 = vpack.c.b16 %v2599, %v2597
    %v3406 = vpack.c.b16 %v2600, %v2598
    %v3407 = vpack.c.b16 %v2603, %v2601
    %v3408 = vpack.c.b16 %v2604, %v2602
    %v3409 = vpack.c.b16 %v2607, %v2605
    %v3410 = vpack.c.b16 %v2608, %v2606
    %v3411 = vpack.c.b16 %v2611, %v2609
    %v3412 = vpack.c.b16 %v2612, %v2610
    %v3413 = vpack.c.b16 %v2615, %v2613
    %v3414 = vpack.c.b16 %v2616, %v2614
    %v3415 = vpack.c.b16 %v2619, %v2617
    %v3416 = vpack.c.b16 %v2620, %v2618
    %v3417 = vpack.c.b16 %v2623, %v2621
    %v3418 = vpack.c.b16 %v2624, %v2622
    %v3419 = vpack.c.b16 %v2627, %v2625
    %v3420 = vpack.c.b16 %v2628, %v2626
    %v3421 = vpack.c.b16 %v2631, %v2629
    %v3422 = vpack.c.b16 %v2632, %v2630
    %v3423 = vpack.c.b16 %v2635, %v2633
    %v3424 = vpack.c.b16 %v2636, %v2634
    %v3425 = vpack.c.b16 %v2639, %v2637
    %v3426 = vpack.c.b16 %v2640, %v2638
    %v3427 = vpack.c.b16 %v2643, %v2641
    %v3428 = vpack.c.b16 %v2644, %v2642
    %v3429 = vpack.c.b16 %v2647, %v2645
    %v3430 = vpack.c.b16 %v2648, %v2646
    %v3431 = vpack.c.b16 %v2651, %v2649
    %v3432 = vpack.c.b16 %v2652, %v2650
    %v3433 = vpack.c.b16 %v2655, %v2653
    %v3434 = vpack.c.b16 %v2656, %v2654
    %v3435 = vpack.c.b16 %v2659, %v2657
    %v3436 = vpack.c.b16 %v2660, %v2658
    %v3437 = vpack.c.b16 %v2663, %v2661
    %v3438 = vpack.c.b16 %v2664, %v2662
    %v3439 = vpack.c.b16 %v2667, %v2665
    %v3440 = vpack.c.b16 %v2668, %v2666
    %v3441 = vpack.c.b16 %v2671, %v2669
    %v3442 = vpack.c.b16 %v2672, %v2670
    %v3443 = vpack.c.b16 %v2675, %v2673
    %v3444 = vpack.c.b16 %v2676, %v2674
    %v3445 = vpack.c.b16 %v2679, %v2677
    %v3446 = vpack.c.b16 %v2680, %v2678
    %v3447 = vpack.c.b16 %v2683, %v2681
    %v3448 = vpack.c.b16 %v2684, %v2682
    %v3449 = vpack.c.b16 %v2687, %v2685
    %v3450 = vpack.c.b16 %v2688, %v2686
    %v3451 = vpack.c.b16 %v2691, %v2689
    %v3452 = vpack.c.b16 %v2692, %v2690
    %v3453 = vpack.c.b16 %v2695, %v2693
    %v3454 = vpack.c.b16 %v2696, %v2694
    %v3455 = vpack.c.b16 %v2699, %v2697
    %v3456 = vpack.c.b16 %v2700, %v2698
    %v3457 = vpack.c.b16 %v2703, %v2701
    %v3458 = vpack.c.b16 %v2704, %v2702
    %v3459 = vpack.c.b16 %v2707, %v2705
    %v3460 = vpack.c.b16 %v2708, %v2706
    %v3461 = vpack.c.b16 %v2711, %v2709
    %v3462 = vpack.c.b16 %v2712, %v2710
    %v3463 = vpack.c.b16 %v2715, %v2713
    %v3464 = vpack.c.b16 %v2716, %v2714
    %v3465 = vpack.c.b16 %v2719, %v2717
    %v3466 = vpack.c.b16 %v2720, %v2718
    %v3467 = vpack.c.b16 %v2723, %v2721
    %v3468 = vpack.c.b16 %v2724, %v2722
    %v3469 = vpack.c.b16 %v2727, %v2725
    %v3470 = vpack.c.b16 %v2728, %v2726
    %v3471 = vpack.c.b16 %v2731, %v2729
    %v3472 = vpack.c.b16 %v2732, %v2730
    %v3473 = vpack.c.b16 %v2735, %v2733
    %v3474 = vpack.c.b16 %v2736, %v2734
    %v3475 = vpack.c.b16 %v2739, %v2737
    %v3476 = vpack.c.b16 %v2740, %v2738
    %v3477 = vpack.c.b16 %v2743, %v2741
    %v3478 = vpack.c.b16 %v2744, %v2742
    %v3479 = vpack.c.b16 %v2747, %v2745
    %v3480 = vpack.c.b16 %v2748, %v2746
    %v3481 = vpack.c.b16 %v2751, %v2749
    %v3482 = vpack.c.b16 %v2752, %v2750
    %v3483 = vpack.c.b16 %v2755, %v2753
    %v3484 = vpack.c.b16 %v2756, %v2754
    %v3485 = vpack.c.b16 %v2759, %v2757
    %v3486 = vpack.c.b16 %v2760, %v2758
    %v3487 = vpack.c.b16 %v2763, %v2761
    %v3488 = vpack.c.b16 %v2764, %v2762
    %v3489 = vpack.c.b16 %v2767, %v2765
    %v3490 = vpack.c.b16 %v2768, %v2766
    %v3491 = vpack.c.b16 %v2771, %v2769
    %v3492 = vpack.c.b16 %v2772, %v2770
    %v3493 = vpack.c.b16 %v2775, %v2773
    %v3494 = vpack.c.b16 %v2776, %v2774
    %v3495 = vpack.c.b16 %v2779, %v2777
    %v3496 = vpack.c.b16 %v2780, %v2778
    %v3497 = vpack.c.b16 %v2783, %v2781
    %v3498 = vpack.c.b16 %v2784, %v2782
    %v3499 = vpack.c.b16 %v2787, %v2785
    %v3500 = vpack.c.b16 %v2788, %v2786
    %v3501 = vpack.c.b16 %v2791, %v2789
    %v3502 = vpack.c.b16 %v2792, %v2790
    %v3503 = vpack.c.b16 %v2795, %v2793
    %v3504 = vpack.c.b16 %v2796, %v2794
    %v3505 = vpack.c.b16 %v2799, %v2797
    %v3506 = vpack.c.b16 %v2800, %v2798
    %v3507 = vpack.c.b16 %v2803, %v2801
    %v3508 = vpack.c.b16 %v2804, %v2802
    %v3509 = vpack.c.b16 %v2807, %v2805
    %v3510 = vpack.c.b16 %v2808, %v2806
    %v3511 = vpack.c.b16 %v2811, %v2809
    %v3512 = vpack.c.b16 %v2812, %v2810
    %v3513 = vpack.c.b16 %v2815, %v2813
    %v3514 = vpack.c.b16 %v2816, %v2814
    %v3515 = vpack.c.b16 %v2819, %v2817
    %v3516 = vpack.c.b16 %v2820, %v2818
    %v3517 = vpack.c.b16 %v2823, %v2821
    %v3518 = vpack.c.b16 %v2824, %v2822
    %v3519 = vpack.c.b16 %v2827, %v2825
    %v3520 = vpack.c.b16 %v2828, %v2826
    %v3521 = vpack.c.b16 %v2831, %v2829
    %v3522 = vpack.c.b16 %v2832, %v2830
    %v3523 = vpack.c.b16 %v2835, %v2833
    %v3524 = vpack.c.b16 %v2836, %v2834
    %v3525 = vpack.c.b16 %v2839, %v2837
    %v3526 = vpack.c.b16 %v2840, %v2838
    %v3527 = vpack.c.b16 %v2843, %v2841
    %v3528 = vpack.c.b16 %v2844, %v2842
    %v3529 = vpack.c.b16 %v2847, %v2845
    %v3530 = vpack.c.b16 %v2848, %v2846
    %v3531 = vpack.c.b16 %v2851, %v2849
    %v3532 = vpack.c.b16 %v2852, %v2850
    %v3533 = vpack.c.b16 %v2855, %v2853
    %v3534 = vpack.c.b16 %v2856, %v2854
    %v3535 = vpack.c.b16 %v2859, %v2857
    %v3536 = vpack.c.b16 %v2860, %v2858
    %v3537 = vpack.c.b16 %v2863, %v2861
    %v3538 = vpack.c.b16 %v2864, %v2862
    %v3539 = vpack.c.b16 %v2867, %v2865
    %v3540 = vpack.c.b16 %v2868, %v2866
    %v3541 = vpack.c.b16 %v2871, %v2869
    %v3542 = vpack.c.b16 %v2872, %v2870
    %v3543 = vpack.c.b16 %v2875, %v2873
    %v3544 = vpack.c.b16 %v2876, %v2874
    %v3545 = vpack.c.b16 %v2879, %v2877
    %v3546 = vpack.c.b16 %v2880, %v2878
    %v3547 = vpack.c.b16 %v2883, %v2881
    %v3548 = vpack.c.b16 %v2884, %v2882
    %v3549 = vpack.c.b16 %v2887, %v2885
    %v3550 = vpack.c.b16 %v2888, %v2886
    %v3551 = vpack.c.b16 %v2891, %v2889
    %v3552 = vpack.c.b16 %v2892, %v2890
    %v3553 = vpack.c.b16 %v2895, %v2893
    %v3554 = vpack.c.b16 %v2896, %v2894
    %v3555 = vpack.c.b16 %v2899, %v2897
    %v3556 = vpack.c.b16 %v2900, %v2898
    %v3557 = vpack.c.b16 %v2903, %v2901
    %v3558 = vpack.c.b16 %v2904, %v2902
    %v3559 = vpack.c.b16 %v2907, %v2905
    %v3560 = vpack.c.b16 %v2908, %v2906
    %v3561 = vpack.c.b16 %v2911, %v2909
    %v3562 = vpack.c.b16 %v2912, %v2910
    %v3563 = vpack.c.b16 %v2915, %v2913
    %v3564 = vpack.c.b16 %v2916, %v2914
    %v3565 = vpack.c.b16 %v2919, %v2917
    %v3566 = vpack.c.b16 %v2920, %v2918
    %v3567 = vpack.c.b16 %v2923, %v2921
    %v3568 = vpack.c.b16 %v2924, %v2922
    %v3569 = vpack.c.b16 %v2927, %v2925
    %v3570 = vpack.c.b16 %v2928, %v2926
    %v3571 = vpack.c.b16 %v2931, %v2929
    %v3572 = vpack.c.b16 %v2932, %v2930
    %4213 = vmatprep.subr.bf16.mxu0 %v2934
    %4214 = vmatpush1.bf16.msra.mxu0 %v2933
    %4215 = vmatprep.subr.bf16.mxu0 %v2936
    %4216 = vmatpush1.bf16.msra.mxu0 %v2935
    %4217 = vmatprep.subr.bf16.mxu0 %v2938
    %4218 = vmatpush1.bf16.msra.mxu0 %v2937
    %4219 = vmatprep.subr.bf16.mxu0 %v2940
    %4220 = vmatpush1.bf16.msra.mxu0 %v2939
    %4221 = vmatprep.subr.bf16.mxu0 %v2942
    %4222 = vmatpush1.bf16.msra.mxu0 %v2941
    %4223 = vmatprep.subr.bf16.mxu0 %v2944
    %4224 = vmatpush1.bf16.msra.mxu0 %v2943
    %4225 = vmatprep.subr.bf16.mxu0 %v2946
    %4226 = vmatpush1.bf16.msra.mxu0 %v2945
    %4227 = vmatprep.subr.bf16.mxu0 %v2948
    %4228 = vmatpush1.bf16.msra.mxu0 %v2947
    %4229 = vmatprep.subr.bf16.mxu0 %v2950
    %4230 = vmatpush1.bf16.msra.mxu0 %v2949
    %4231 = vmatprep.subr.bf16.mxu0 %v2952
    %4232 = vmatpush1.bf16.msra.mxu0 %v2951
    %4233 = vmatprep.subr.bf16.mxu0 %v2954
    %4234 = vmatpush1.bf16.msra.mxu0 %v2953
    %4235 = vmatprep.subr.bf16.mxu0 %v2956
    %4236 = vmatpush1.bf16.msra.mxu0 %v2955
    %4237 = vmatprep.subr.bf16.mxu0 %v2958
    %4238 = vmatpush1.bf16.msra.mxu0 %v2957
    %4239 = vmatprep.subr.bf16.mxu0 %v2960
    %4240 = vmatpush1.bf16.msra.mxu0 %v2959
    %4241 = vmatprep.subr.bf16.mxu0 %v2962
    %4242 = vmatpush1.bf16.msra.mxu0 %v2961
    %4243 = vmatprep.subr.bf16.mxu0 %v2964
    %4244 = vmatpush1.bf16.msra.mxu0 %v2963
    %4245 = vmatprep.mubr.bf16.mxu0 %v322
    %4246 = vmatmul.mubr.bf16.gmra.mrb[0].mxu0 %v321
    %v4247 = vpop.f32.mrb[0].mxu0
    %v4248 = vadd.f32 %v1006, %v4247
    %v4249 = vpop.f32.mrb[0].mxu0
    %v4250 = vadd.f32 %v1010, %v4249
    %v4251 = vpop.f32.mrb[0].mxu0
    %v4252 = vpop.f32.mrb[0].mxu0
    %4253 = vdwg.mxu0
    %4254 = vmatprep.subr.bf16.mxu0 %v2966
    %4255 = vmatpush1.bf16.msra.mxu0 %v2965
    %4256 = vmatprep.subr.bf16.mxu0 %v2968
    %4257 = vmatpush1.bf16.msra.mxu0 %v2967
    %4258 = vmatprep.subr.bf16.mxu0 %v2970
    %4259 = vmatpush1.bf16.msra.mxu0 %v2969
    %4260 = vmatprep.subr.bf16.mxu0 %v2972
    %4261 = vmatpush1.bf16.msra.mxu0 %v2971
    %4262 = vmatprep.subr.bf16.mxu0 %v2974
    %4263 = vmatpush1.bf16.msra.mxu0 %v2973
    %4264 = vmatprep.subr.bf16.mxu0 %v2976
    %4265 = vmatpush1.bf16.msra.mxu0 %v2975
    %4266 = vmatprep.subr.bf16.mxu0 %v2978
    %4267 = vmatpush1.bf16.msra.mxu0 %v2977
    %4268 = vmatprep.subr.bf16.mxu0 %v2980
    %4269 = vmatpush1.bf16.msra.mxu0 %v2979
    %4270 = vmatprep.subr.bf16.mxu0 %v2982
    %4271 = vmatpush1.bf16.msra.mxu0 %v2981
    %4272 = vmatprep.subr.bf16.mxu0 %v2984
    %4273 = vmatpush1.bf16.msra.mxu0 %v2983
    %4274 = vmatprep.subr.bf16.mxu0 %v2986
    %4275 = vmatpush1.bf16.msra.mxu0 %v2985
    %4276 = vmatprep.subr.bf16.mxu0 %v2988
    %4277 = vmatpush1.bf16.msra.mxu0 %v2987
    %4278 = vmatprep.subr.bf16.mxu0 %v2990
    %4279 = vmatpush1.bf16.msra.mxu0 %v2989
    %4280 = vmatprep.subr.bf16.mxu0 %v2992
    %4281 = vmatpush1.bf16.msra.mxu0 %v2991
    %4282 = vmatprep.subr.bf16.mxu0 %v2994
    %4283 = vmatpush1.bf16.msra.mxu0 %v2993
    %4284 = vmatprep.subr.bf16.mxu0 %v2996
    %4285 = vmatpush1.bf16.msra.mxu0 %v2995
    %4286 = vmatprep.mubr.bf16.mxu0 %v324
    %4287 = vmatmul.mubr.bf16.gmra.mrb[0].mxu0 %v323
    %v4288 = vpop.f32.mrb[0].mxu0
    %v4289 = vadd.f32 %v4248, %v4288
    %v4290 = vpop.f32.mrb[0].mxu0
    %v4291 = vadd.f32 %v4250, %v4290
    %v4292 = vpop.f32.mrb[0].mxu0
    %v4293 = vpop.f32.mrb[0].mxu0
    %4294 = vdwg.mxu0
    %4295 = vmatprep.subr.bf16.mxu0 %v2998
    %4296 = vmatpush1.bf16.msra.mxu0 %v2997
    %4297 = vmatprep.subr.bf16.mxu0 %v3000
    %4298 = vmatpush1.bf16.msra.mxu0 %v2999
    %4299 = vmatprep.subr.bf16.mxu0 %v3002
    %4300 = vmatpush1.bf16.msra.mxu0 %v3001
    %4301 = vmatprep.subr.bf16.mxu0 %v3004
    %4302 = vmatpush1.bf16.msra.mxu0 %v3003
    %4303 = vmatprep.subr.bf16.mxu0 %v3006
    %4304 = vmatpush1.bf16.msra.mxu0 %v3005
    %4305 = vmatprep.subr.bf16.mxu0 %v3008
    %4306 = vmatpush1.bf16.msra.mxu0 %v3007
    %4307 = vmatprep.subr.bf16.mxu0 %v3010
    %4308 = vmatpush1.bf16.msra.mxu0 %v3009
    %4309 = vmatprep.subr.bf16.mxu0 %v3012
    %4310 = vmatpush1.bf16.msra.mxu0 %v3011
    %4311 = vmatprep.subr.bf16.mxu0 %v3014
    %4312 = vmatpush1.bf16.msra.mxu0 %v3013
    %4313 = vmatprep.subr.bf16.mxu0 %v3016
    %4314 = vmatpush1.bf16.msra.mxu0 %v3015
    %4315 = vmatprep.subr.bf16.mxu0 %v3018
    %4316 = vmatpush1.bf16.msra.mxu0 %v3017
    %4317 = vmatprep.subr.bf16.mxu0 %v3020
    %4318 = vmatpush1.bf16.msra.mxu0 %v3019
    %4319 = vmatprep.subr.bf16.mxu0 %v3022
    %4320 = vmatpush1.bf16.msra.mxu0 %v3021
    %4321 = vmatprep.subr.bf16.mxu0 %v3024
    %4322 = vmatpush1.bf16.msra.mxu0 %v3023
    %4323 = vmatprep.subr.bf16.mxu0 %v3026
    %4324 = vmatpush1.bf16.msra.mxu0 %v3025
    %4325 = vmatprep.subr.bf16.mxu0 %v3028
    %4326 = vmatpush1.bf16.msra.mxu0 %v3027
    %4327 = vmatprep.mubr.bf16.mxu0 %v326
    %4328 = vmatmul.mubr.bf16.gmra.mrb[0].mxu0 %v325
    %v4329 = vpop.f32.mrb[0].mxu0
    %v4330 = vadd.f32 %v4289, %v4329
    %v4331 = vpop.f32.mrb[0].mxu0
    %v4332 = vadd.f32 %v4291, %v4331
    %v4333 = vpop.f32.mrb[0].mxu0
    %v4334 = vpop.f32.mrb[0].mxu0
    %4335 = vdwg.mxu0
    %4336 = vmatprep.subr.bf16.mxu0 %v3030
    %4337 = vmatpush1.bf16.msra.mxu0 %v3029
    %4338 = vmatprep.subr.bf16.mxu0 %v3032
    %4339 = vmatpush1.bf16.msra.mxu0 %v3031
    %4340 = vmatprep.subr.bf16.mxu0 %v3034
    %4341 = vmatpush1.bf16.msra.mxu0 %v3033
    %4342 = vmatprep.subr.bf16.mxu0 %v3036
    %4343 = vmatpush1.bf16.msra.mxu0 %v3035
    %4344 = vmatprep.subr.bf16.mxu0 %v3038
    %4345 = vmatpush1.bf16.msra.mxu0 %v3037
    %4346 = vmatprep.subr.bf16.mxu0 %v3040
    %4347 = vmatpush1.bf16.msra.mxu0 %v3039
    %4348 = vmatprep.subr.bf16.mxu0 %v3042
    %4349 = vmatpush1.bf16.msra.mxu0 %v3041
    %4350 = vmatprep.subr.bf16.mxu0 %v3044
    %4351 = vmatpush1.bf16.msra.mxu0 %v3043
    %4352 = vmatprep.subr.bf16.mxu0 %v3046
    %4353 = vmatpush1.bf16.msra.mxu0 %v3045
    %4354 = vmatprep.subr.bf16.mxu0 %v3048
    %4355 = vmatpush1.bf16.msra.mxu0 %v3047
    %4356 = vmatprep.subr.bf16.mxu0 %v3050
    %4357 = vmatpush1.bf16.msra.mxu0 %v3049
    %4358 = vmatprep.subr.bf16.mxu0 %v3052
    %4359 = vmatpush1.bf16.msra.mxu0 %v3051
    %4360 = vmatprep.subr.bf16.mxu0 %v3054
    %4361 = vmatpush1.bf16.msra.mxu0 %v3053
    %4362 = vmatprep.subr.bf16.mxu0 %v3056
    %4363 = vmatpush1.bf16.msra.mxu0 %v3055
    %4364 = vmatprep.subr.bf16.mxu0 %v3058
    %4365 = vmatpush1.bf16.msra.mxu0 %v3057
    %4366 = vmatprep.subr.bf16.mxu0 %v3060
    %4367 = vmatpush1.bf16.msra.mxu0 %v3059
    %4368 = vmatprep.mubr.bf16.mxu0 %v328
    %4369 = vmatmul.mubr.bf16.gmra.mrb[0].mxu0 %v327
    %v4370 = vpop.f32.mrb[0].mxu0
    %v4371 = vadd.f32 %v4330, %v4370
    %v4372 = vpop.f32.mrb[0].mxu0
    %v4373 = vadd.f32 %v4332, %v4372
    %v4374 = vpop.f32.mrb[0].mxu0
    %v4375 = vpop.f32.mrb[0].mxu0
    %4376 = vdwg.mxu0
    %4377 = vmatprep.subr.bf16.mxu0 %v3062
    %4378 = vmatpush1.bf16.msra.mxu0 %v3061
    %4379 = vmatprep.subr.bf16.mxu0 %v3064
    %4380 = vmatpush1.bf16.msra.mxu0 %v3063
    %4381 = vmatprep.subr.bf16.mxu0 %v3066
    %4382 = vmatpush1.bf16.msra.mxu0 %v3065
    %4383 = vmatprep.subr.bf16.mxu0 %v3068
    %4384 = vmatpush1.bf16.msra.mxu0 %v3067
    %4385 = vmatprep.subr.bf16.mxu0 %v3070
    %4386 = vmatpush1.bf16.msra.mxu0 %v3069
    %4387 = vmatprep.subr.bf16.mxu0 %v3072
    %4388 = vmatpush1.bf16.msra.mxu0 %v3071
    %4389 = vmatprep.subr.bf16.mxu0 %v3074
    %4390 = vmatpush1.bf16.msra.mxu0 %v3073
    %4391 = vmatprep.subr.bf16.mxu0 %v3076
    %4392 = vmatpush1.bf16.msra.mxu0 %v3075
    %4393 = vmatprep.subr.bf16.mxu0 %v3078
    %4394 = vmatpush1.bf16.msra.mxu0 %v3077
    %4395 = vmatprep.subr.bf16.mxu0 %v3080
    %4396 = vmatpush1.bf16.msra.mxu0 %v3079
    %4397 = vmatprep.subr.bf16.mxu0 %v3082
    %4398 = vmatpush1.bf16.msra.mxu0 %v3081
    %4399 = vmatprep.subr.bf16.mxu0 %v3084
    %4400 = vmatpush1.bf16.msra.mxu0 %v3083
    %4401 = vmatprep.subr.bf16.mxu0 %v3086
    %4402 = vmatpush1.bf16.msra.mxu0 %v3085
    %4403 = vmatprep.subr.bf16.mxu0 %v3088
    %4404 = vmatpush1.bf16.msra.mxu0 %v3087
    %4405 = vmatprep.subr.bf16.mxu0 %v3090
    %4406 = vmatpush1.bf16.msra.mxu0 %v3089
    %4407 = vmatprep.subr.bf16.mxu0 %v3092
    %4408 = vmatpush1.bf16.msra.mxu0 %v3091
    %4409 = vmatprep.mubr.bf16.mxu0 %v330
    %4410 = vmatmul.mubr.bf16.gmra.mrb[0].mxu0 %v329
    %v4411 = vpop.f32.mrb[0].mxu0
    %v4412 = vadd.f32 %v4371, %v4411
    %v4413 = vpop.f32.mrb[0].mxu0
    %v4414 = vadd.f32 %v4373, %v4413
    %v4415 = vpop.f32.mrb[0].mxu0
    %v4416 = vpop.f32.mrb[0].mxu0
    %4417 = vdwg.mxu0
    %4418 = vmatprep.subr.bf16.mxu0 %v3094
    %4419 = vmatpush1.bf16.msra.mxu0 %v3093
    %4420 = vmatprep.subr.bf16.mxu0 %v3096
    %4421 = vmatpush1.bf16.msra.mxu0 %v3095
    %4422 = vmatprep.subr.bf16.mxu0 %v3098
    %4423 = vmatpush1.bf16.msra.mxu0 %v3097
    %4424 = vmatprep.subr.bf16.mxu0 %v3100
    %4425 = vmatpush1.bf16.msra.mxu0 %v3099
    %4426 = vmatprep.subr.bf16.mxu0 %v3102
    %4427 = vmatpush1.bf16.msra.mxu0 %v3101
    %4428 = vmatprep.subr.bf16.mxu0 %v3104
    %4429 = vmatpush1.bf16.msra.mxu0 %v3103
    %4430 = vmatprep.subr.bf16.mxu0 %v3106
    %4431 = vmatpush1.bf16.msra.mxu0 %v3105
    %4432 = vmatprep.subr.bf16.mxu0 %v3108
    %4433 = vmatpush1.bf16.msra.mxu0 %v3107
    %4434 = vmatprep.subr.bf16.mxu0 %v3110
    %4435 = vmatpush1.bf16.msra.mxu0 %v3109
    %4436 = vmatprep.subr.bf16.mxu0 %v3112
    %4437 = vmatpush1.bf16.msra.mxu0 %v3111
    %4438 = vmatprep.subr.bf16.mxu0 %v3114
    %4439 = vmatpush1.bf16.msra.mxu0 %v3113
    %4440 = vmatprep.subr.bf16.mxu0 %v3116
    %4441 = vmatpush1.bf16.msra.mxu0 %v3115
    %4442 = vmatprep.subr.bf16.mxu0 %v3118
    %4443 = vmatpush1.bf16.msra.mxu0 %v3117
    %4444 = vmatprep.subr.bf16.mxu0 %v3120
    %4445 = vmatpush1.bf16.msra.mxu0 %v3119
    %4446 = vmatprep.subr.bf16.mxu0 %v3122
    %4447 = vmatpush1.bf16.msra.mxu0 %v3121
    %4448 = vmatprep.subr.bf16.mxu0 %v3124
    %4449 = vmatpush1.bf16.msra.mxu0 %v3123
    %4450 = vmatprep.mubr.bf16.mxu0 %v332
    %4451 = vmatmul.mubr.bf16.gmra.mrb[0].mxu0 %v331
    %v4452 = vpop.f32.mrb[0].mxu0
    %v4453 = vadd.f32 %v4412, %v4452
    %v4454 = vpop.f32.mrb[0].mxu0
    %v4455 = vadd.f32 %v4414, %v4454
    %v4456 = vpop.f32.mrb[0].mxu0
    %v4457 = vpop.f32.mrb[0].mxu0
    %4458 = vdwg.mxu0
    %4459 = vmatprep.subr.bf16.mxu0 %v3126
    %4460 = vmatpush1.bf16.msra.mxu0 %v3125
    %4461 = vmatprep.subr.bf16.mxu0 %v3128
    %4462 = vmatpush1.bf16.msra.mxu0 %v3127
    %4463 = vmatprep.subr.bf16.mxu0 %v3130
    %4464 = vmatpush1.bf16.msra.mxu0 %v3129
    %4465 = vmatprep.subr.bf16.mxu0 %v3132
    %4466 = vmatpush1.bf16.msra.mxu0 %v3131
    %4467 = vmatprep.subr.bf16.mxu0 %v3134
    %4468 = vmatpush1.bf16.msra.mxu0 %v3133
    %4469 = vmatprep.subr.bf16.mxu0 %v3136
    %4470 = vmatpush1.bf16.msra.mxu0 %v3135
    %4471 = vmatprep.subr.bf16.mxu0 %v3138
    %4472 = vmatpush1.bf16.msra.mxu0 %v3137
    %4473 = vmatprep.subr.bf16.mxu0 %v3140
    %4474 = vmatpush1.bf16.msra.mxu0 %v3139
    %4475 = vmatprep.subr.bf16.mxu0 %v3142
    %4476 = vmatpush1.bf16.msra.mxu0 %v3141
    %4477 = vmatprep.subr.bf16.mxu0 %v3144
    %4478 = vmatpush1.bf16.msra.mxu0 %v3143
    %4479 = vmatprep.subr.bf16.mxu0 %v3146
    %4480 = vmatpush1.bf16.msra.mxu0 %v3145
    %4481 = vmatprep.subr.bf16.mxu0 %v3148
    %4482 = vmatpush1.bf16.msra.mxu0 %v3147
    %4483 = vmatprep.subr.bf16.mxu0 %v3150
    %4484 = vmatpush1.bf16.msra.mxu0 %v3149
    %4485 = vmatprep.subr.bf16.mxu0 %v3152
    %4486 = vmatpush1.bf16.msra.mxu0 %v3151
    %4487 = vmatprep.subr.bf16.mxu0 %v3154
    %4488 = vmatpush1.bf16.msra.mxu0 %v3153
    %4489 = vmatprep.subr.bf16.mxu0 %v3156
    %4490 = vmatpush1.bf16.msra.mxu0 %v3155
    %4491 = vmatprep.mubr.bf16.mxu0 %v334
    %4492 = vmatmul.mubr.bf16.gmra.mrb[0].mxu0 %v333
    %v4493 = vpop.f32.mrb[0].mxu0
    %v4494 = vadd.f32 %v4453, %v4493
    %v4495 = vpop.f32.mrb[0].mxu0
    %v4496 = vadd.f32 %v4455, %v4495
    %v4497 = vpop.f32.mrb[0].mxu0
    %v4498 = vpop.f32.mrb[0].mxu0
    %4499 = vdwg.mxu0
    %4500 = vmatprep.subr.bf16.mxu0 %v3158
    %4501 = vmatpush1.bf16.msra.mxu0 %v3157
    %4502 = vmatprep.subr.bf16.mxu0 %v3160
    %4503 = vmatpush1.bf16.msra.mxu0 %v3159
    %4504 = vmatprep.subr.bf16.mxu0 %v3162
    %4505 = vmatpush1.bf16.msra.mxu0 %v3161
    %4506 = vmatprep.subr.bf16.mxu0 %v3164
    %4507 = vmatpush1.bf16.msra.mxu0 %v3163
    %4508 = vmatprep.subr.bf16.mxu0 %v3166
    %4509 = vmatpush1.bf16.msra.mxu0 %v3165
    %4510 = vmatprep.subr.bf16.mxu0 %v3168
    %4511 = vmatpush1.bf16.msra.mxu0 %v3167
    %4512 = vmatprep.subr.bf16.mxu0 %v3170
    %4513 = vmatpush1.bf16.msra.mxu0 %v3169
    %4514 = vmatprep.subr.bf16.mxu0 %v3172
    %4515 = vmatpush1.bf16.msra.mxu0 %v3171
    %4516 = vmatprep.subr.bf16.mxu0 %v3174
    %4517 = vmatpush1.bf16.msra.mxu0 %v3173
    %4518 = vmatprep.subr.bf16.mxu0 %v3176
    %4519 = vmatpush1.bf16.msra.mxu0 %v3175
    %4520 = vmatprep.subr.bf16.mxu0 %v3178
    %4521 = vmatpush1.bf16.msra.mxu0 %v3177
    %4522 = vmatprep.subr.bf16.mxu0 %v3180
    %4523 = vmatpush1.bf16.msra.mxu0 %v3179
    %4524 = vmatprep.subr.bf16.mxu0 %v3182
    %4525 = vmatpush1.bf16.msra.mxu0 %v3181
    %4526 = vmatprep.subr.bf16.mxu0 %v3184
    %4527 = vmatpush1.bf16.msra.mxu0 %v3183
    %4528 = vmatprep.subr.bf16.mxu0 %v3186
    %4529 = vmatpush1.bf16.msra.mxu0 %v3185
    %4530 = vmatprep.subr.bf16.mxu0 %v3188
    %4531 = vmatpush1.bf16.msra.mxu0 %v3187
    %4532 = vmatprep.mubr.bf16.mxu0 %v336
    %4533 = vmatmul.mubr.bf16.gmra.mrb[0].mxu0 %v335
    %v4534 = vpop.f32.mrb[0].mxu0
    %v4535 = vadd.f32 %v4494, %v4534
    %v4536 = vpop.f32.mrb[0].mxu0
    %v4537 = vadd.f32 %v4496, %v4536
    %v4538 = vpop.f32.mrb[0].mxu0
    %v4539 = vpop.f32.mrb[0].mxu0
    %4540 = vdwg.mxu0
    %4541 = vmatprep.subr.bf16.mxu0 %v3190
    %4542 = vmatpush1.bf16.msra.mxu0 %v3189
    %4543 = vmatprep.subr.bf16.mxu0 %v3192
    %4544 = vmatpush1.bf16.msra.mxu0 %v3191
    %4545 = vmatprep.subr.bf16.mxu0 %v3194
    %4546 = vmatpush1.bf16.msra.mxu0 %v3193
    %4547 = vmatprep.subr.bf16.mxu0 %v3196
    %4548 = vmatpush1.bf16.msra.mxu0 %v3195
    %4549 = vmatprep.subr.bf16.mxu0 %v3198
    %4550 = vmatpush1.bf16.msra.mxu0 %v3197
    %4551 = vmatprep.subr.bf16.mxu0 %v3200
    %4552 = vmatpush1.bf16.msra.mxu0 %v3199
    %4553 = vmatprep.subr.bf16.mxu0 %v3202
    %4554 = vmatpush1.bf16.msra.mxu0 %v3201
    %4555 = vmatprep.subr.bf16.mxu0 %v3204
    %4556 = vmatpush1.bf16.msra.mxu0 %v3203
    %4557 = vmatprep.subr.bf16.mxu0 %v3206
    %4558 = vmatpush1.bf16.msra.mxu0 %v3205
    %4559 = vmatprep.subr.bf16.mxu0 %v3208
    %4560 = vmatpush1.bf16.msra.mxu0 %v3207
    %4561 = vmatprep.subr.bf16.mxu0 %v3210
    %4562 = vmatpush1.bf16.msra.mxu0 %v3209
    %4563 = vmatprep.subr.bf16.mxu0 %v3212
    %4564 = vmatpush1.bf16.msra.mxu0 %v3211
    %4565 = vmatprep.subr.bf16.mxu0 %v3214
    %4566 = vmatpush1.bf16.msra.mxu0 %v3213
    %4567 = vmatprep.subr.bf16.mxu0 %v3216
    %4568 = vmatpush1.bf16.msra.mxu0 %v3215
    %4569 = vmatprep.subr.bf16.mxu0 %v3218
    %4570 = vmatpush1.bf16.msra.mxu0 %v3217
    %4571 = vmatprep.subr.bf16.mxu0 %v3220
    %4572 = vmatpush1.bf16.msra.mxu0 %v3219
    %4573 = vmatprep.mubr.bf16.mxu0 %v338
    %4574 = vmatmul.mubr.bf16.gmra.mrb[0].mxu0 %v337
    %v4575 = vpop.f32.mrb[0].mxu0
    %v4576 = vadd.f32 %v4535, %v4575
    %v4577 = vpop.f32.mrb[0].mxu0
    %v4578 = vadd.f32 %v4537, %v4577
    %v4579 = vpop.f32.mrb[0].mxu0
    %v4580 = vpop.f32.mrb[0].mxu0
    %4581 = vdwg.mxu0
    %4582 = vmatprep.subr.bf16.mxu0 %v3222
    %4583 = vmatpush1.bf16.msra.mxu0 %v3221
    %4584 = vmatprep.subr.bf16.mxu0 %v3224
    %4585 = vmatpush1.bf16.msra.mxu0 %v3223
    %4586 = vmatprep.subr.bf16.mxu0 %v3226
    %4587 = vmatpush1.bf16.msra.mxu0 %v3225
    %4588 = vmatprep.subr.bf16.mxu0 %v3228
    %4589 = vmatpush1.bf16.msra.mxu0 %v3227
    %4590 = vmatprep.subr.bf16.mxu0 %v3230
    %4591 = vmatpush1.bf16.msra.mxu0 %v3229
    %4592 = vmatprep.subr.bf16.mxu0 %v3232
    %4593 = vmatpush1.bf16.msra.mxu0 %v3231
    %4594 = vmatprep.subr.bf16.mxu0 %v3234
    %4595 = vmatpush1.bf16.msra.mxu0 %v3233
    %4596 = vmatprep.subr.bf16.mxu0 %v3236
    %4597 = vmatpush1.bf16.msra.mxu0 %v3235
    %4598 = vmatprep.subr.bf16.mxu0 %v3238
    %4599 = vmatpush1.bf16.msra.mxu0 %v3237
    %4600 = vmatprep.subr.bf16.mxu0 %v3240
    %4601 = vmatpush1.bf16.msra.mxu0 %v3239
    %4602 = vmatprep.subr.bf16.mxu0 %v3242
    %4603 = vmatpush1.bf16.msra.mxu0 %v3241
    %4604 = vmatprep.subr.bf16.mxu0 %v3244
    %4605 = vmatpush1.bf16.msra.mxu0 %v3243
    %4606 = vmatprep.subr.bf16.mxu0 %v3246
    %4607 = vmatpush1.bf16.msra.mxu0 %v3245
    %4608 = vmatprep.subr.bf16.mxu0 %v3248
    %4609 = vmatpush1.bf16.msra.mxu0 %v3247
    %4610 = vmatprep.subr.bf16.mxu0 %v3250
    %4611 = vmatpush1.bf16.msra.mxu0 %v3249
    %4612 = vmatprep.subr.bf16.mxu0 %v3252
    %4613 = vmatpush1.bf16.msra.mxu0 %v3251
    %4614 = vmatprep.mubr.bf16.mxu0 %v340
    %4615 = vmatmul.mubr.bf16.gmra.mrb[0].mxu0 %v339
    %v4616 = vpop.f32.mrb[0].mxu0
    %v4617 = vadd.f32 %v4576, %v4616
    %v4618 = vpop.f32.mrb[0].mxu0
    %v4619 = vadd.f32 %v4578, %v4618
    %v4620 = vpop.f32.mrb[0].mxu0
    %v4621 = vpop.f32.mrb[0].mxu0
    %4622 = vdwg.mxu0
    %4623 = vmatprep.subr.bf16.mxu0 %v3254
    %4624 = vmatpush1.bf16.msra.mxu0 %v3253
    %4625 = vmatprep.subr.bf16.mxu0 %v3256
    %4626 = vmatpush1.bf16.msra.mxu0 %v3255
    %4627 = vmatprep.subr.bf16.mxu0 %v3258
    %4628 = vmatpush1.bf16.msra.mxu0 %v3257
    %4629 = vmatprep.subr.bf16.mxu0 %v3260
    %4630 = vmatpush1.bf16.msra.mxu0 %v3259
    %4631 = vmatprep.subr.bf16.mxu0 %v3262
    %4632 = vmatpush1.bf16.msra.mxu0 %v3261
    %4633 = vmatprep.subr.bf16.mxu0 %v3264
    %4634 = vmatpush1.bf16.msra.mxu0 %v3263
    %4635 = vmatprep.subr.bf16.mxu0 %v3266
    %4636 = vmatpush1.bf16.msra.mxu0 %v3265
    %4637 = vmatprep.subr.bf16.mxu0 %v3268
    %4638 = vmatpush1.bf16.msra.mxu0 %v3267
    %4639 = vmatprep.subr.bf16.mxu0 %v3270
    %4640 = vmatpush1.bf16.msra.mxu0 %v3269
    %4641 = vmatprep.subr.bf16.mxu0 %v3272
    %4642 = vmatpush1.bf16.msra.mxu0 %v3271
    %4643 = vmatprep.subr.bf16.mxu0 %v3274
    %4644 = vmatpush1.bf16.msra.mxu0 %v3273
    %4645 = vmatprep.subr.bf16.mxu0 %v3276
    %4646 = vmatpush1.bf16.msra.mxu0 %v3275
    %4647 = vmatprep.subr.bf16.mxu0 %v3278
    %4648 = vmatpush1.bf16.msra.mxu0 %v3277
    %4649 = vmatprep.subr.bf16.mxu0 %v3280
    %4650 = vmatpush1.bf16.msra.mxu0 %v3279
    %4651 = vmatprep.subr.bf16.mxu0 %v3282
    %4652 = vmatpush1.bf16.msra.mxu0 %v3281
    %4653 = vmatprep.subr.bf16.mxu0 %v3284
    %4654 = vmatpush1.bf16.msra.mxu0 %v3283
    %4655 = vmatprep.mubr.bf16.mxu0 %v342
    %4656 = vmatmul.mubr.bf16.gmra.mrb[0].mxu0 %v341
    %v4657 = vpop.f32.mrb[0].mxu0
    %v4658 = vadd.f32 %v4617, %v4657
    %v4659 = vpop.f32.mrb[0].mxu0
    %v4660 = vadd.f32 %v4619, %v4659
    %v4661 = vpop.f32.mrb[0].mxu0
    %v4662 = vpop.f32.mrb[0].mxu0
    %4663 = vdwg.mxu0
    %4664 = vmatprep.subr.bf16.mxu0 %v3286
    %4665 = vmatpush1.bf16.msra.mxu0 %v3285
    %4666 = vmatprep.subr.bf16.mxu0 %v3288
    %4667 = vmatpush1.bf16.msra.mxu0 %v3287
    %4668 = vmatprep.subr.bf16.mxu0 %v3290
    %4669 = vmatpush1.bf16.msra.mxu0 %v3289
    %4670 = vmatprep.subr.bf16.mxu0 %v3292
    %4671 = vmatpush1.bf16.msra.mxu0 %v3291
    %4672 = vmatprep.subr.bf16.mxu0 %v3294
    %4673 = vmatpush1.bf16.msra.mxu0 %v3293
    %4674 = vmatprep.subr.bf16.mxu0 %v3296
    %4675 = vmatpush1.bf16.msra.mxu0 %v3295
    %4676 = vmatprep.subr.bf16.mxu0 %v3298
    %4677 = vmatpush1.bf16.msra.mxu0 %v3297
    %4678 = vmatprep.subr.bf16.mxu0 %v3300
    %4679 = vmatpush1.bf16.msra.mxu0 %v3299
    %4680 = vmatprep.subr.bf16.mxu0 %v3302
    %4681 = vmatpush1.bf16.msra.mxu0 %v3301
    %4682 = vmatprep.subr.bf16.mxu0 %v3304
    %4683 = vmatpush1.bf16.msra.mxu0 %v3303
    %4684 = vmatprep.subr.bf16.mxu0 %v3306
    %4685 = vmatpush1.bf16.msra.mxu0 %v3305
    %4686 = vmatprep.subr.bf16.mxu0 %v3308
    %4687 = vmatpush1.bf16.msra.mxu0 %v3307
    %4688 = vmatprep.subr.bf16.mxu0 %v3310
    %4689 = vmatpush1.bf16.msra.mxu0 %v3309
    %4690 = vmatprep.subr.bf16.mxu0 %v3312
    %4691 = vmatpush1.bf16.msra.mxu0 %v3311
    %4692 = vmatprep.subr.bf16.mxu0 %v3314
    %4693 = vmatpush1.bf16.msra.mxu0 %v3313
    %4694 = vmatprep.subr.bf16.mxu0 %v3316
    %4695 = vmatpush1.bf16.msra.mxu0 %v3315
    %4696 = vmatprep.mubr.bf16.mxu0 %v344
    %4697 = vmatmul.mubr.bf16.gmra.mrb[0].mxu0 %v343
    %v4698 = vpop.f32.mrb[0].mxu0
    %v4699 = vadd.f32 %v4658, %v4698
    %v4700 = vpop.f32.mrb[0].mxu0
    %v4701 = vadd.f32 %v4660, %v4700
    %v4702 = vpop.f32.mrb[0].mxu0
    %v4703 = vpop.f32.mrb[0].mxu0
    %4704 = vdwg.mxu0
    %4705 = vmatprep.subr.bf16.mxu0 %v3318
    %4706 = vmatpush1.bf16.msra.mxu0 %v3317
    %4707 = vmatprep.subr.bf16.mxu0 %v3320
    %4708 = vmatpush1.bf16.msra.mxu0 %v3319
    %4709 = vmatprep.subr.bf16.mxu0 %v3322
    %4710 = vmatpush1.bf16.msra.mxu0 %v3321
    %4711 = vmatprep.subr.bf16.mxu0 %v3324
    %4712 = vmatpush1.bf16.msra.mxu0 %v3323
    %4713 = vmatprep.subr.bf16.mxu0 %v3326
    %4714 = vmatpush1.bf16.msra.mxu0 %v3325
    %4715 = vmatprep.subr.bf16.mxu0 %v3328
    %4716 = vmatpush1.bf16.msra.mxu0 %v3327
    %4717 = vmatprep.subr.bf16.mxu0 %v3330
    %4718 = vmatpush1.bf16.msra.mxu0 %v3329
    %4719 = vmatprep.subr.bf16.mxu0 %v3332
    %4720 = vmatpush1.bf16.msra.mxu0 %v3331
    %4721 = vmatprep.subr.bf16.mxu0 %v3334
    %4722 = vmatpush1.bf16.msra.mxu0 %v3333
    %4723 = vmatprep.subr.bf16.mxu0 %v3336
    %4724 = vmatpush1.bf16.msra.mxu0 %v3335
    %4725 = vmatprep.subr.bf16.mxu0 %v3338
    %4726 = vmatpush1.bf16.msra.mxu0 %v3337
    %4727 = vmatprep.subr.bf16.mxu0 %v3340
    %4728 = vmatpush1.bf16.msra.mxu0 %v3339
    %4729 = vmatprep.subr.bf16.mxu0 %v3342
    %4730 = vmatpush1.bf16.msra.mxu0 %v3341
    %4731 = vmatprep.subr.bf16.mxu0 %v3344
    %4732 = vmatpush1.bf16.msra.mxu0 %v3343
    %4733 = vmatprep.subr.bf16.mxu0 %v3346
    %4734 = vmatpush1.bf16.msra.mxu0 %v3345
    %4735 = vmatprep.subr.bf16.mxu0 %v3348
    %4736 = vmatpush1.bf16.msra.mxu0 %v3347
    %4737 = vmatprep.mubr.bf16.mxu0 %v346
    %4738 = vmatmul.mubr.bf16.gmra.mrb[0].mxu0 %v345
    %v4739 = vpop.f32.mrb[0].mxu0
    %v4740 = vadd.f32 %v4699, %v4739
    %v4741 = vpop.f32.mrb[0].mxu0
    %v4742 = vadd.f32 %v4701, %v4741
    %v4743 = vpop.f32.mrb[0].mxu0
    %v4744 = vpop.f32.mrb[0].mxu0
    %4745 = vdwg.mxu0
    %4746 = vmatprep.subr.bf16.mxu0 %v3350
    %4747 = vmatpush1.bf16.msra.mxu0 %v3349
    %4748 = vmatprep.subr.bf16.mxu0 %v3352
    %4749 = vmatpush1.bf16.msra.mxu0 %v3351
    %4750 = vmatprep.subr.bf16.mxu0 %v3354
    %4751 = vmatpush1.bf16.msra.mxu0 %v3353
    %4752 = vmatprep.subr.bf16.mxu0 %v3356
    %4753 = vmatpush1.bf16.msra.mxu0 %v3355
    %4754 = vmatprep.subr.bf16.mxu0 %v3358
    %4755 = vmatpush1.bf16.msra.mxu0 %v3357
    %4756 = vmatprep.subr.bf16.mxu0 %v3360
    %4757 = vmatpush1.bf16.msra.mxu0 %v3359
    %4758 = vmatprep.subr.bf16.mxu0 %v3362
    %4759 = vmatpush1.bf16.msra.mxu0 %v3361
    %4760 = vmatprep.subr.bf16.mxu0 %v3364
    %4761 = vmatpush1.bf16.msra.mxu0 %v3363
    %4762 = vmatprep.subr.bf16.mxu0 %v3366
    %4763 = vmatpush1.bf16.msra.mxu0 %v3365
    %4764 = vmatprep.subr.bf16.mxu0 %v3368
    %4765 = vmatpush1.bf16.msra.mxu0 %v3367
    %4766 = vmatprep.subr.bf16.mxu0 %v3370
    %4767 = vmatpush1.bf16.msra.mxu0 %v3369
    %4768 = vmatprep.subr.bf16.mxu0 %v3372
    %4769 = vmatpush1.bf16.msra.mxu0 %v3371
    %4770 = vmatprep.subr.bf16.mxu0 %v3374
    %4771 = vmatpush1.bf16.msra.mxu0 %v3373
    %4772 = vmatprep.subr.bf16.mxu0 %v3376
    %4773 = vmatpush1.bf16.msra.mxu0 %v3375
    %4774 = vmatprep.subr.bf16.mxu0 %v3378
    %4775 = vmatpush1.bf16.msra.mxu0 %v3377
    %4776 = vmatprep.subr.bf16.mxu0 %v3380
    %4777 = vmatpush1.bf16.msra.mxu0 %v3379
    %4778 = vmatprep.mubr.bf16.mxu0 %v348
    %4779 = vmatmul.mubr.bf16.gmra.mrb[0].mxu0 %v347
    %v4780 = vpop.f32.mrb[0].mxu0
    %v4781 = vadd.f32 %v4740, %v4780
    %v4782 = vpop.f32.mrb[0].mxu0
    %v4783 = vadd.f32 %v4742, %v4782
    %v4784 = vpop.f32.mrb[0].mxu0
    %v4785 = vpop.f32.mrb[0].mxu0
    %4786 = vdwg.mxu0
    %4787 = vmatprep.subr.bf16.mxu0 %v3382
    %4788 = vmatpush1.bf16.msra.mxu0 %v3381
    %4789 = vmatprep.subr.bf16.mxu0 %v3384
    %4790 = vmatpush1.bf16.msra.mxu0 %v3383
    %4791 = vmatprep.subr.bf16.mxu0 %v3386
    %4792 = vmatpush1.bf16.msra.mxu0 %v3385
    %4793 = vmatprep.subr.bf16.mxu0 %v3388
    %4794 = vmatpush1.bf16.msra.mxu0 %v3387
    %4795 = vmatprep.subr.bf16.mxu0 %v3390
    %4796 = vmatpush1.bf16.msra.mxu0 %v3389
    %4797 = vmatprep.subr.bf16.mxu0 %v3392
    %4798 = vmatpush1.bf16.msra.mxu0 %v3391
    %4799 = vmatprep.subr.bf16.mxu0 %v3394
    %4800 = vmatpush1.bf16.msra.mxu0 %v3393
    %4801 = vmatprep.subr.bf16.mxu0 %v3396
    %4802 = vmatpush1.bf16.msra.mxu0 %v3395
    %4803 = vmatprep.subr.bf16.mxu0 %v3398
    %4804 = vmatpush1.bf16.msra.mxu0 %v3397
    %4805 = vmatprep.subr.bf16.mxu0 %v3400
    %4806 = vmatpush1.bf16.msra.mxu0 %v3399
    %4807 = vmatprep.subr.bf16.mxu0 %v3402
    %4808 = vmatpush1.bf16.msra.mxu0 %v3401
    %4809 = vmatprep.subr.bf16.mxu0 %v3404
    %4810 = vmatpush1.bf16.msra.mxu0 %v3403
    %4811 = vmatprep.subr.bf16.mxu0 %v3406
    %4812 = vmatpush1.bf16.msra.mxu0 %v3405
    %4813 = vmatprep.subr.bf16.mxu0 %v3408
    %4814 = vmatpush1.bf16.msra.mxu0 %v3407
    %4815 = vmatprep.subr.bf16.mxu0 %v3410
    %4816 = vmatpush1.bf16.msra.mxu0 %v3409
    %4817 = vmatprep.subr.bf16.mxu0 %v3412
    %4818 = vmatpush1.bf16.msra.mxu0 %v3411
    %4819 = vmatprep.mubr.bf16.mxu0 %v350
    %4820 = vmatmul.mubr.bf16.gmra.mrb[0].mxu0 %v349
    %v4821 = vpop.f32.mrb[0].mxu0
    %v4822 = vadd.f32 %v4781, %v4821
    %v4823 = vpop.f32.mrb[0].mxu0
    %v4824 = vadd.f32 %v4783, %v4823
    %v4825 = vpop.f32.mrb[0].mxu0
    %v4826 = vpop.f32.mrb[0].mxu0
    %4827 = vdwg.mxu0
    %4828 = vmatprep.subr.bf16.mxu0 %v3414
    %4829 = vmatpush1.bf16.msra.mxu0 %v3413
    %4830 = vmatprep.subr.bf16.mxu0 %v3416
    %4831 = vmatpush1.bf16.msra.mxu0 %v3415
    %4832 = vmatprep.subr.bf16.mxu0 %v3418
    %4833 = vmatpush1.bf16.msra.mxu0 %v3417
    %4834 = vmatprep.subr.bf16.mxu0 %v3420
    %4835 = vmatpush1.bf16.msra.mxu0 %v3419
    %4836 = vmatprep.subr.bf16.mxu0 %v3422
    %4837 = vmatpush1.bf16.msra.mxu0 %v3421
    %4838 = vmatprep.subr.bf16.mxu0 %v3424
    %4839 = vmatpush1.bf16.msra.mxu0 %v3423
    %4840 = vmatprep.subr.bf16.mxu0 %v3426
    %4841 = vmatpush1.bf16.msra.mxu0 %v3425
    %4842 = vmatprep.subr.bf16.mxu0 %v3428
    %4843 = vmatpush1.bf16.msra.mxu0 %v3427
    %4844 = vmatprep.subr.bf16.mxu0 %v3430
    %4845 = vmatpush1.bf16.msra.mxu0 %v3429
    %4846 = vmatprep.subr.bf16.mxu0 %v3432
    %4847 = vmatpush1.bf16.msra.mxu0 %v3431
    %4848 = vmatprep.subr.bf16.mxu0 %v3434
    %4849 = vmatpush1.bf16.msra.mxu0 %v3433
    %4850 = vmatprep.subr.bf16.mxu0 %v3436
    %4851 = vmatpush1.bf16.msra.mxu0 %v3435
    %4852 = vmatprep.subr.bf16.mxu0 %v3438
    %4853 = vmatpush1.bf16.msra.mxu0 %v3437
    %4854 = vmatprep.subr.bf16.mxu0 %v3440
    %4855 = vmatpush1.bf16.msra.mxu0 %v3439
    %4856 = vmatprep.subr.bf16.mxu0 %v3442
    %4857 = vmatpush1.bf16.msra.mxu0 %v3441
    %4858 = vmatprep.subr.bf16.mxu0 %v3444
    %4859 = vmatpush1.bf16.msra.mxu0 %v3443
    %4860 = vmatprep.mubr.bf16.mxu0 %v352
    %4861 = vmatmul.mubr.bf16.gmra.mrb[0].mxu0 %v351
    %v4862 = vpop.f32.mrb[0].mxu0
    %v4863 = vadd.f32 %v4822, %v4862
    %v4864 = vpop.f32.mrb[0].mxu0
    %v4865 = vadd.f32 %v4824, %v4864
    %v4866 = vpop.f32.mrb[0].mxu0
    %v4867 = vpop.f32.mrb[0].mxu0
    %4868 = vdwg.mxu0
    %4869 = vmatprep.subr.bf16.mxu0 %v3446
    %4870 = vmatpush1.bf16.msra.mxu0 %v3445
    %4871 = vmatprep.subr.bf16.mxu0 %v3448
    %4872 = vmatpush1.bf16.msra.mxu0 %v3447
    %4873 = vmatprep.subr.bf16.mxu0 %v3450
    %4874 = vmatpush1.bf16.msra.mxu0 %v3449
    %4875 = vmatprep.subr.bf16.mxu0 %v3452
    %4876 = vmatpush1.bf16.msra.mxu0 %v3451
    %4877 = vmatprep.subr.bf16.mxu0 %v3454
    %4878 = vmatpush1.bf16.msra.mxu0 %v3453
    %4879 = vmatprep.subr.bf16.mxu0 %v3456
    %4880 = vmatpush1.bf16.msra.mxu0 %v3455
    %4881 = vmatprep.subr.bf16.mxu0 %v3458
    %4882 = vmatpush1.bf16.msra.mxu0 %v3457
    %4883 = vmatprep.subr.bf16.mxu0 %v3460
    %4884 = vmatpush1.bf16.msra.mxu0 %v3459
    %4885 = vmatprep.subr.bf16.mxu0 %v3462
    %4886 = vmatpush1.bf16.msra.mxu0 %v3461
    %4887 = vmatprep.subr.bf16.mxu0 %v3464
    %4888 = vmatpush1.bf16.msra.mxu0 %v3463
    %4889 = vmatprep.subr.bf16.mxu0 %v3466
    %4890 = vmatpush1.bf16.msra.mxu0 %v3465
    %4891 = vmatprep.subr.bf16.mxu0 %v3468
    %4892 = vmatpush1.bf16.msra.mxu0 %v3467
    %4893 = vmatprep.subr.bf16.mxu0 %v3470
    %4894 = vmatpush1.bf16.msra.mxu0 %v3469
    %4895 = vmatprep.subr.bf16.mxu0 %v3472
    %4896 = vmatpush1.bf16.msra.mxu0 %v3471
    %4897 = vmatprep.subr.bf16.mxu0 %v3474
    %4898 = vmatpush1.bf16.msra.mxu0 %v3473
    %4899 = vmatprep.subr.bf16.mxu0 %v3476
    %4900 = vmatpush1.bf16.msra.mxu0 %v3475
    %4901 = vmatprep.mubr.bf16.mxu0 %v354
    %4902 = vmatmul.mubr.bf16.gmra.mrb[0].mxu0 %v353
    %v4903 = vpop.f32.mrb[0].mxu0
    %v4904 = vadd.f32 %v4863, %v4903
    %v4905 = vpop.f32.mrb[0].mxu0
    %v4906 = vadd.f32 %v4865, %v4905
    %v4907 = vpop.f32.mrb[0].mxu0
    %v4908 = vpop.f32.mrb[0].mxu0
    %4909 = vdwg.mxu0
    %4910 = vmatprep.subr.bf16.mxu0 %v3478
    %4911 = vmatpush1.bf16.msra.mxu0 %v3477
    %4912 = vmatprep.subr.bf16.mxu0 %v3480
    %4913 = vmatpush1.bf16.msra.mxu0 %v3479
    %4914 = vmatprep.subr.bf16.mxu0 %v3482
    %4915 = vmatpush1.bf16.msra.mxu0 %v3481
    %4916 = vmatprep.subr.bf16.mxu0 %v3484
    %4917 = vmatpush1.bf16.msra.mxu0 %v3483
    %4918 = vmatprep.subr.bf16.mxu0 %v3486
    %4919 = vmatpush1.bf16.msra.mxu0 %v3485
    %4920 = vmatprep.subr.bf16.mxu0 %v3488
    %4921 = vmatpush1.bf16.msra.mxu0 %v3487
    %4922 = vmatprep.subr.bf16.mxu0 %v3490
    %4923 = vmatpush1.bf16.msra.mxu0 %v3489
    %4924 = vmatprep.subr.bf16.mxu0 %v3492
    %4925 = vmatpush1.bf16.msra.mxu0 %v3491
    %4926 = vmatprep.subr.bf16.mxu0 %v3494
    %4927 = vmatpush1.bf16.msra.mxu0 %v3493
    %4928 = vmatprep.subr.bf16.mxu0 %v3496
    %4929 = vmatpush1.bf16.msra.mxu0 %v3495
    %4930 = vmatprep.subr.bf16.mxu0 %v3498
    %4931 = vmatpush1.bf16.msra.mxu0 %v3497
    %4932 = vmatprep.subr.bf16.mxu0 %v3500
    %4933 = vmatpush1.bf16.msra.mxu0 %v3499
    %4934 = vmatprep.subr.bf16.mxu0 %v3502
    %4935 = vmatpush1.bf16.msra.mxu0 %v3501
    %4936 = vmatprep.subr.bf16.mxu0 %v3504
    %4937 = vmatpush1.bf16.msra.mxu0 %v3503
    %4938 = vmatprep.subr.bf16.mxu0 %v3506
    %4939 = vmatpush1.bf16.msra.mxu0 %v3505
    %4940 = vmatprep.subr.bf16.mxu0 %v3508
    %4941 = vmatpush1.bf16.msra.mxu0 %v3507
    %4942 = vmatprep.mubr.bf16.mxu0 %v356
    %4943 = vmatmul.mubr.bf16.gmra.mrb[0].mxu0 %v355
    %v4944 = vpop.f32.mrb[0].mxu0
    %v4945 = vadd.f32 %v4904, %v4944
    %v4946 = vpop.f32.mrb[0].mxu0
    %v4947 = vadd.f32 %v4906, %v4946
    %v4948 = vpop.f32.mrb[0].mxu0
    %v4949 = vpop.f32.mrb[0].mxu0
    %4950 = vdwg.mxu0
    %4951 = vmatprep.subr.bf16.mxu0 %v3510
    %4952 = vmatpush1.bf16.msra.mxu0 %v3509
    %4953 = vmatprep.subr.bf16.mxu0 %v3512
    %4954 = vmatpush1.bf16.msra.mxu0 %v3511
    %4955 = vmatprep.subr.bf16.mxu0 %v3514
    %4956 = vmatpush1.bf16.msra.mxu0 %v3513
    %4957 = vmatprep.subr.bf16.mxu0 %v3516
    %4958 = vmatpush1.bf16.msra.mxu0 %v3515
    %4959 = vmatprep.subr.bf16.mxu0 %v3518
    %4960 = vmatpush1.bf16.msra.mxu0 %v3517
    %4961 = vmatprep.subr.bf16.mxu0 %v3520
    %4962 = vmatpush1.bf16.msra.mxu0 %v3519
    %4963 = vmatprep.subr.bf16.mxu0 %v3522
    %4964 = vmatpush1.bf16.msra.mxu0 %v3521
    %4965 = vmatprep.subr.bf16.mxu0 %v3524
    %4966 = vmatpush1.bf16.msra.mxu0 %v3523
    %4967 = vmatprep.subr.bf16.mxu0 %v3526
    %4968 = vmatpush1.bf16.msra.mxu0 %v3525
    %4969 = vmatprep.subr.bf16.mxu0 %v3528
    %4970 = vmatpush1.bf16.msra.mxu0 %v3527
    %4971 = vmatprep.subr.bf16.mxu0 %v3530
    %4972 = vmatpush1.bf16.msra.mxu0 %v3529
    %4973 = vmatprep.subr.bf16.mxu0 %v3532
    %4974 = vmatpush1.bf16.msra.mxu0 %v3531
    %4975 = vmatprep.subr.bf16.mxu0 %v3534
    %4976 = vmatpush1.bf16.msra.mxu0 %v3533
    %4977 = vmatprep.subr.bf16.mxu0 %v3536
    %4978 = vmatpush1.bf16.msra.mxu0 %v3535
    %4979 = vmatprep.subr.bf16.mxu0 %v3538
    %4980 = vmatpush1.bf16.msra.mxu0 %v3537
    %4981 = vmatprep.subr.bf16.mxu0 %v3540
    %4982 = vmatpush1.bf16.msra.mxu0 %v3539
    %4983 = vmatprep.mubr.bf16.mxu0 %v358
    %4984 = vmatmul.mubr.bf16.gmra.mrb[0].mxu0 %v357
    %v4985 = vpop.f32.mrb[0].mxu0
    %v4986 = vadd.f32 %v4945, %v4985
    %v4987 = vpop.f32.mrb[0].mxu0
    %v4988 = vadd.f32 %v4947, %v4987
    %v4989 = vpop.f32.mrb[0].mxu0
    %v4990 = vpop.f32.mrb[0].mxu0
    %4991 = vdwg.mxu0
    %4992 = vmatprep.subr.bf16.mxu0 %v3542
    %4993 = vmatpush1.bf16.msra.mxu0 %v3541
    %4994 = vmatprep.subr.bf16.mxu0 %v3544
    %4995 = vmatpush1.bf16.msra.mxu0 %v3543
    %4996 = vmatprep.subr.bf16.mxu0 %v3546
    %4997 = vmatpush1.bf16.msra.mxu0 %v3545
    %4998 = vmatprep.subr.bf16.mxu0 %v3548
    %4999 = vmatpush1.bf16.msra.mxu0 %v3547
    %5000 = vmatprep.subr.bf16.mxu0 %v3550
    %5001 = vmatpush1.bf16.msra.mxu0 %v3549
    %5002 = vmatprep.subr.bf16.mxu0 %v3552
    %5003 = vmatpush1.bf16.msra.mxu0 %v3551
    %5004 = vmatprep.subr.bf16.mxu0 %v3554
    %5005 = vmatpush1.bf16.msra.mxu0 %v3553
    %5006 = vmatprep.subr.bf16.mxu0 %v3556
    %5007 = vmatpush1.bf16.msra.mxu0 %v3555
    %5008 = vmatprep.subr.bf16.mxu0 %v3558
    %5009 = vmatpush1.bf16.msra.mxu0 %v3557
    %5010 = vmatprep.subr.bf16.mxu0 %v3560
    %5011 = vmatpush1.bf16.msra.mxu0 %v3559
    %5012 = vmatprep.subr.bf16.mxu0 %v3562
    %5013 = vmatpush1.bf16.msra.mxu0 %v3561
    %5014 = vmatprep.subr.bf16.mxu0 %v3564
    %5015 = vmatpush1.bf16.msra.mxu0 %v3563
    %5016 = vmatprep.subr.bf16.mxu0 %v3566
    %5017 = vmatpush1.bf16.msra.mxu0 %v3565
    %5018 = vmatprep.subr.bf16.mxu0 %v3568
    %5019 = vmatpush1.bf16.msra.mxu0 %v3567
    %5020 = vmatprep.subr.bf16.mxu0 %v3570
    %5021 = vmatpush1.bf16.msra.mxu0 %v3569
    %5022 = vmatprep.subr.bf16.mxu0 %v3572
    %5023 = vmatpush1.bf16.msra.mxu0 %v3571
    %5024 = vmatprep.mubr.bf16.mxu0 %v360
    %5025 = vmatmul.mubr.bf16.gmra.mrb[0].mxu0 %v359
    %v5026 = vpop.f32.mrb[0].mxu0
    %v5027 = vadd.f32 %v4986, %v5026
    %v5028 = vpop.f32.mrb[0].mxu0
    %v5029 = vadd.f32 %v4988, %v5028
    %v5030 = vpop.f32.mrb[0].mxu0
    %v5031 = vpop.f32.mrb[0].mxu0
    %5032 = vdwg.mxu0
    %v5033 = vmul.f32 %v5027, 0.01
    %v5034 = vmul.f32 %v5029, 0.01
    %v5035 = vmax.f32 %v5027, %v5033
    %v5036 = vmax.f32 %v5029, %v5034
    %v5037 = vpack.c.bf16 %v5035, %v5035
    %v5038 = vpack.c.bf16 %v5036, %v5036
    %v5039 = vld [vmem:[%s3] sm:$0xf]
    %v5040 = vld [vmem:[%s3 + $0x4] sm:$0xf]
    %v5041 = vld [vmem:[%s3 + $0x8] sm:$0xf]
    %v5042 = vld [vmem:[%s3 + $0xc] sm:$0xf]
    %v5043 = vld [vmem:[%s3 + $0x10] sm:$0xf]
    %v5044 = vld [vmem:[%s3 + $0x14] sm:$0xf]
    %v5045 = vld [vmem:[%s3 + $0x18] sm:$0xf]
    %v5046 = vld [vmem:[%s3 + $0x1c] sm:$0xf]
    %v5047 = vld [vmem:[%s3 + $0x20] sm:$0xf]
    %v5048 = vld [vmem:[%s3 + $0x24] sm:$0xf]
    %v5049 = vld [vmem:[%s3 + $0x28] sm:$0xf]
    %v5050 = vld [vmem:[%s3 + $0x2c] sm:$0xf]
    %v5051 = vld [vmem:[%s3 + $0x30] sm:$0xf]
    %v5052 = vld [vmem:[%s3 + $0x34] sm:$0xf]
    %v5053 = vld [vmem:[%s3 + $0x38] sm:$0xf]
    %v5054 = vld [vmem:[%s3 + $0x3c] sm:$0xf]
    %v5055 = vld [vmem:[%s3 + $0x40] sm:$0xf]
    %v5056 = vld [vmem:[%s3 + $0x44] sm:$0xf]
    %v5057 = vld [vmem:[%s3 + $0x48] sm:$0xf]
    %v5058 = vld [vmem:[%s3 + $0x4c] sm:$0xf]
    %v5059 = vld [vmem:[%s3 + $0x50] sm:$0xf]
    %v5060 = vld [vmem:[%s3 + $0x54] sm:$0xf]
    %v5061 = vld [vmem:[%s3 + $0x58] sm:$0xf]
    %v5062 = vld [vmem:[%s3 + $0x5c] sm:$0xf]
    %v5063 = vld [vmem:[%s3 + $0x60] sm:$0xf]
    %v5064 = vld [vmem:[%s3 + $0x64] sm:$0xf]
    %v5065 = vld [vmem:[%s3 + $0x68] sm:$0xf]
    %v5066 = vld [vmem:[%s3 + $0x6c] sm:$0xf]
    %v5067 = vld [vmem:[%s3 + $0x70] sm:$0xf]
    %v5068 = vld [vmem:[%s3 + $0x74] sm:$0xf]
    %v5069 = vld [vmem:[%s3 + $0x78] sm:$0xf]
    %v5070 = vld [vmem:[%s3 + $0x7c] sm:$0xf]
    %v5071 = vld [vmem:[#allocation8] sm:$0x1]
    %v5073 = vlaneseq
    %v5074 = vshrl.u32 %v5073, 7
    %v5075 = vsub.s32 0, %v5074
    %v5076 = vrot.slane %v5071, %v5075
    %v5110 = vunpack.c.l.b16 %v5039
    %v5111 = vunpack.c.l.b16 %v5040
    %v5112 = vunpack.c.l.b16 %v5041
    %v5113 = vunpack.c.l.b16 %v5042
    %v5114 = vunpack.c.l.b16 %v5043
    %v5115 = vunpack.c.l.b16 %v5044
    %v5116 = vunpack.c.l.b16 %v5045
    %v5117 = vunpack.c.l.b16 %v5046
    %v5118 = vunpack.c.l.b16 %v5047
    %v5119 = vunpack.c.l.b16 %v5048
    %v5120 = vunpack.c.l.b16 %v5049
    %v5121 = vunpack.c.l.b16 %v5050
    %v5122 = vunpack.c.l.b16 %v5051
    %v5123 = vunpack.c.l.b16 %v5052
    %v5124 = vunpack.c.l.b16 %v5053
    %v5125 = vunpack.c.l.b16 %v5054
    %v5126 = vunpack.c.l.b16 %v5055
    %v5127 = vunpack.c.l.b16 %v5056
    %v5128 = vunpack.c.l.b16 %v5057
    %v5129 = vunpack.c.l.b16 %v5058
    %v5130 = vunpack.c.l.b16 %v5059
    %v5131 = vunpack.c.l.b16 %v5060
    %v5132 = vunpack.c.l.b16 %v5061
    %v5133 = vunpack.c.l.b16 %v5062
    %v5134 = vunpack.c.l.b16 %v5063
    %v5135 = vunpack.c.l.b16 %v5064
    %v5136 = vunpack.c.l.b16 %v5065
    %v5137 = vunpack.c.l.b16 %v5066
    %v5138 = vunpack.c.l.b16 %v5067
    %v5139 = vunpack.c.l.b16 %v5068
    %v5140 = vunpack.c.l.b16 %v5069
    %v5141 = vunpack.c.l.b16 %v5070
    %v5142 = vpack.c.b16 %v5111, %v5110
    %v5143 = vpack.c.b16 %v5113, %v5112
    %v5144 = vpack.c.b16 %v5115, %v5114
    %v5145 = vpack.c.b16 %v5117, %v5116
    %v5146 = vpack.c.b16 %v5119, %v5118
    %v5147 = vpack.c.b16 %v5121, %v5120
    %v5148 = vpack.c.b16 %v5123, %v5122
    %v5149 = vpack.c.b16 %v5125, %v5124
    %v5150 = vpack.c.b16 %v5127, %v5126
    %v5151 = vpack.c.b16 %v5129, %v5128
    %v5152 = vpack.c.b16 %v5131, %v5130
    %v5153 = vpack.c.b16 %v5133, %v5132
    %v5154 = vpack.c.b16 %v5135, %v5134
    %v5155 = vpack.c.b16 %v5137, %v5136
    %v5156 = vpack.c.b16 %v5139, %v5138
    %v5157 = vpack.c.b16 %v5141, %v5140
    %5174 = vmatprep.subr.bf16.mxu0 0
    %5175 = vmatpush1.bf16.msra.mxu0 %v5142
    %5176 = vmatprep.subr.bf16.mxu0 0
    %5177 = vmatpush1.bf16.msra.mxu0 %v5143
    %5178 = vmatprep.subr.bf16.mxu0 0
    %5179 = vmatpush1.bf16.msra.mxu0 %v5144
    %5180 = vmatprep.subr.bf16.mxu0 0
    %5181 = vmatpush1.bf16.msra.mxu0 %v5145
    %5182 = vmatprep.subr.bf16.mxu0 0
    %5183 = vmatpush1.bf16.msra.mxu0 %v5146
    %5184 = vmatprep.subr.bf16.mxu0 0
    %5185 = vmatpush1.bf16.msra.mxu0 %v5147
    %5186 = vmatprep.subr.bf16.mxu0 0
    %5187 = vmatpush1.bf16.msra.mxu0 %v5148
    %5188 = vmatprep.subr.bf16.mxu0 0
    %5189 = vmatpush1.bf16.msra.mxu0 %v5149
    %5190 = vmatprep.subr.bf16.mxu0 0
    %5191 = vmatpush1.bf16.msra.mxu0 %v5150
    %5192 = vmatprep.subr.bf16.mxu0 0
    %5193 = vmatpush1.bf16.msra.mxu0 %v5151
    %5194 = vmatprep.subr.bf16.mxu0 0
    %5195 = vmatpush1.bf16.msra.mxu0 %v5152
    %5196 = vmatprep.subr.bf16.mxu0 0
    %5197 = vmatpush1.bf16.msra.mxu0 %v5153
    %5198 = vmatprep.subr.bf16.mxu0 0
    %5199 = vmatpush1.bf16.msra.mxu0 %v5154
    %5200 = vmatprep.subr.bf16.mxu0 0
    %5201 = vmatpush1.bf16.msra.mxu0 %v5155
    %5202 = vmatprep.subr.bf16.mxu0 0
    %5203 = vmatpush1.bf16.msra.mxu0 %v5156
    %5204 = vmatprep.subr.bf16.mxu0 0
    %5205 = vmatpush1.bf16.msra.mxu0 %v5157
    %5206 = vmatprep.mubr.bf16.mxu0 %v5038
    %5207 = vmatmul.mubr.bf16.gmra.mrb[0].mxu0 %v5037
    %v5208 = vpop.f32.mrb[0].mxu0
    %v5209 = vadd.f32 %v5076, %v5208
    %v5210 = vpop.f32.mrb[0].mxu0
    %v5211 = vpop.f32.mrb[0].mxu0
    %v5212 = vpop.f32.mrb[0].mxu0
    %5213 = vdwg.mxu0
    %v5214 = vxor.u32 %v5209, 2147483648
    %v5215 = vmul.f32 %v5214, 1.442695
    %v5216 = vpow.pop %v5215
    %v5217 = vadd.f32 %v5216, 1.0
    %v5218 = vrcp.pop %v5217
    %v5219 = vmul.f32 1.0, %v5218
    %vm5220 = vcmask 74752
    %5221 = vst.msk [vmem:[#allocation10] sm:$0x3] %vm5220, %v5219
    // Predicated region
    $region38: #{tpu_custom_call.1} parent=1 // pred_check
      _
    $region39: #{tpu_custom_call.1} parent=1 // pred_check_branch
      %5223 = sbr.rel (0) target = $region41
    $region40: #{tpu_custom_call.1} parent=1 // pred_region
      %s5225 = ssub.s32 32, 32
      %5226 = vsyncadd [#allocation4], %s5225
      %s5228 = sshll.u32 [#allocation10], 4
      %s5229 = int_to_ptr.vmem [resolvable:$true] %s5228
      %5231 = dma.vmem_to_hbm [thread:$0]  %s5229, 32, %s5, [#allocation4]
    $region41: #{tpu_custom_call.1} parent=1 // pred_fallthru
      _
    // Predicated region
    $region42: #{tpu_custom_call.1} parent=1 // pred_check
      _
    $region43: #{tpu_custom_call.1} parent=1 // pred_check_branch
      %5233 = sbr.rel (0) target = $region45
    $region44: #{tpu_custom_call.1} parent=1 // pred_region
      %5234 = dma.done [#allocation4], 32
    $region45: #{tpu_custom_call.1} parent=1 // pred_fallthru
      _
    %5235 = vsyncpa [#allocation3], 1
    %5236 = vsyncpa [#allocation6], 1
    %5237 = vsyncpa [#allocation9], 1
    %5238 = vsyncpa [#allocation4], 1

</llo_original>
